<compile_context>
chip_gen: v5e
topology: v5e:2x2
jax: 0.10.0
libtpu: 0.0.40
codegen_flags: <defaults>
</compile_context>

<pallas_src>
from functools import partial

import jax
import jax.numpy as jnp
from jax.experimental import pallas as pl
from jax.experimental.pallas import tpu as pltpu


def _aoa_core_kernel(D, sD, d_k, num_heads,
                     xt_ref, mf_ref, h0_ref, h1_ref, c0_ref, pfeat_ref,
                     wih_x_ref, wih_c_ref, whh_ref, b_lstm_ref,
                     ln_g_ref, ln_b_ref, wq_ref, bq_ref,
                     wctx_a_ref, wctx_h_ref, b_ctx_ref,
                     out_ref, nh_ref, catt_ref):
    f32 = jnp.float32
    mxu = wih_x_ref.dtype          # bf16 (or f32) MXU operands; accumulation stays f32

    # ---------------- att_lstm (nn.LSTMCell); concat removed by splitting the GEMM ----
    xt = xt_ref[...]                                    # (tb, E)
    ctx_prev = mf_ref[...] + h1_ref[...]                # mean_feats + ctx_drop(h_ctx)
    gates = (jnp.dot(xt.astype(mxu), wih_x_ref[...], preferred_element_type=f32)
             + jnp.dot(ctx_prev.astype(mxu), wih_c_ref[...], preferred_element_type=f32)
             + jnp.dot(h0_ref[...].astype(mxu), whh_ref[...], preferred_element_type=f32)
             + b_lstm_ref[...])                         # (tb, 4D)  f32
    i_g = jax.nn.sigmoid(gates[:, 0 * D:1 * D])
    f_g = jax.nn.sigmoid(gates[:, 1 * D:2 * D])
    g_g = jnp.tanh(gates[:, 2 * D:3 * D])
    o_g = jax.nn.sigmoid(gates[:, 3 * D:4 * D])
    c_att = f_g * c0_ref[...] + i_g * g_g
    h_att = o_g * jnp.tanh(c_att)

    # ------------- query LayerNorm (AoANet custom: unbiased std, eps added to std) ----
    mean = jnp.mean(h_att, axis=-1, keepdims=True)
    diff = h_att - mean
    var_unb = jnp.sum(diff * diff, axis=-1, keepdims=True) * (1.0 / (D - 1))
    inv_std = 1.0 / (jnp.sqrt(var_unb) + 1e-6)          # exact (normalization path)
    q_norm = ln_g_ref[...] * (diff * inv_std) + ln_b_ref[...]

    # ---------------- MultiHeadedDotAttention (project_k_v=0, single query) -----------
    q_proj = (jnp.dot(q_norm.astype(mxu), wq_ref[...], preferred_element_type=f32)
              + bq_ref[...])                            # (tb, sD)  f32
    inv_sqrt_dk = 1.0 / (float(d_k) ** 0.5)
    q_scaled = q_proj * inv_sqrt_dk

    pfeat = pfeat_ref[...]                              # (tb, L, 2*sD)  f32 or bf16
    # Single-query attention with small L: pure VPU/XLU formulation, unrolled over
    # heads with static lane slices (no tiny batched MXU matmuls, no redundant work).
    # TODO(synk): att_masks is assumed None; masked attention is not wired in.
    att_parts = []
    for h in range(num_heads):
        lo, hi = h * d_k, (h + 1) * d_k
        kh = pfeat[:, :, sD + lo:sD + hi].astype(f32)   # key   head h: (tb, L, d_k)
        vh = pfeat[:, :, lo:hi].astype(f32)             # value head h: (tb, L, d_k)
        s = jnp.sum(q_scaled[:, None, lo:hi] * kh, axis=-1)          # (tb, L)
        m = jnp.max(s, axis=-1, keepdims=True)
        e = jnp.exp(s - m)
        a = e * pl.reciprocal(jnp.sum(e, axis=-1, keepdims=True), approx=True)
        att_parts.append(jnp.sum(a[:, :, None] * vh, axis=1))        # (tb, d_k)
    att = jnp.concatenate(att_parts, axis=-1)           # (tb, sD)

    # ---------------- att2ctx: Linear(sD + D -> 2D) + GLU, concat removed -------------
    z = (jnp.dot(att.astype(mxu), wctx_a_ref[...], preferred_element_type=f32)
         + jnp.dot(h_att.astype(mxu), wctx_h_ref[...], preferred_element_type=f32)
         + b_ctx_ref[...])                              # (tb, 2D)
    output = z[:, :D] * jax.nn.sigmoid(z[:, D:])        # GLU

    out_ref[...] = output
    nh_ref[0, :, :] = h_att                             # state[0] = stack(h_att, output)
    nh_ref[1, :, :] = output
    catt_ref[...] = c_att                               # state[1][0]; c_ctx assembled outside


def aoa_decoder_core(xt, mean_feats, p_att_feats, state, params, *,
                     num_heads, scale=1, batch_tile=None, mxu_dtype=jnp.bfloat16):
    """AoA_Decoder_Core forward.  Returns (output, (new_h (2,B,D), new_c (2,B,D))).

    p_att_feats should be passed in its persistent dtype (cast to bf16 once per image
    by the caller if a bf16 KV path is wanted); this wrapper never casts or pads it.
    """
    f32 = jnp.float32
    B, E = xt.shape
    D = mean_feats.shape[1]
    L = p_att_feats.shape[1]
    sD = scale * D
    assert p_att_feats.shape[2] == 2 * sD
    assert sD % num_heads == 0, "num_heads must divide multi_head_scale * rnn_size"
    d_k = sD // num_heads

    h0, h1 = state[0][0], state[0][1]      # att-LSTM hidden, ctx hidden
    c0, c1 = state[1][0], state[1][1]      # att-LSTM cell,   ctx cell (pass-through)

    # ---- VMEM budget derived from the chip (v7x: 64 MiB/TC; v5e/v6e: 128 MiB) --------
    try:
        vmem_cap = int(getattr(pltpu.get_tpu_info(), "vmem_capacity_bytes"))
    except Exception:  # pragma: no cover - conservative fallback
        vmem_cap = 64 * 1024 * 1024
    vmem_limit = min(int(vmem_cap * 0.6), 48 * 1024 * 1024)
    kv_budget = vmem_limit // 3            # for the double-buffered p_att_feats blocks

    # ---- batch tile: divisor of B (no host-side pad), multiple of 8, <= 256, and -----
    # ---- preferring >= 2 grid steps so "parallel" can shard across v7x's 2 TCs. ------
    kv_row_bytes = L * 2 * sD * jnp.dtype(p_att_feats.dtype).itemsize
    if batch_tile is None:
        cap = max(8, min(256, ((kv_budget // max(1, 2 * kv_row_bytes)) // 8) * 8))
        cands = [t for t in range(8, min(B, cap) + 1, 8) if B % t == 0]
        two_step = [t for t in cands if B // t >= 2]
        if two_step:
            tb = max(two_step)
        elif cands:
            tb = max(cands)
        else:
            tb = B                          # single full-extent block (no sublane rule)
    else:
        tb = batch_tile
        assert tb == B or (tb % 8 == 0 and B % tb == 0), \
            "batch_tile must divide B and be a multiple of 8 (or equal B)"
    nblk = B // tb

    # ---- pre-transpose / pre-split weights on the host (cache these across decode ----
    # ---- steps in a real loop); MXU operands stored directly in mxu_dtype. -----------
    dt = f32 if mxu_dtype is None else mxu_dtype
    row = lambda v: v.reshape(1, -1).astype(f32)
    w_ih = params["w_ih"]                     # (4D, E+D)  PyTorch LSTMCell layout
    wih_x = jnp.transpose(w_ih[:, :E]).astype(dt)        # (E, 4D)
    wih_c = jnp.transpose(w_ih[:, E:]).astype(dt)        # (D, 4D)
    whh = jnp.transpose(params["w_hh"]).astype(dt)       # (D, 4D)
    b_lstm = row(params["b_ih"] + params["b_hh"])
    wq = jnp.transpose(params["wq"]).astype(dt)          # (D, sD)
    w_ctx = params["w_ctx"]                   # (2D, sD+D)
    wctx_a = jnp.transpose(w_ctx[:, :sD]).astype(dt)     # (sD, 2D)
    wctx_h = jnp.transpose(w_ctx[:, sD:]).astype(dt)     # (D, 2D)
    ln_g_r, ln_b_r = row(params["ln_g"]), row(params["ln_b"])
    bq_r, bctx_r = row(params["bq"]), row(params["b_ctx"])

    args = (xt.astype(f32), mean_feats.astype(f32), h0.astype(f32), h1.astype(f32),
            c0.astype(f32), p_att_feats,
            wih_x, wih_c, whh, b_lstm, ln_g_r, ln_b_r, wq, bq_r,
            wctx_a, wctx_h, bctx_r)

    bmap2 = lambda i: (i, 0)
    bmap3 = lambda i: (i, 0, 0)
    cmap = lambda i: (0, 0)
    batch2 = lambda last: pl.BlockSpec((tb, last), bmap2)
    const = lambda a: pl.BlockSpec(a.shape, cmap)        # resident across grid steps

    in_specs = [
        batch2(E), batch2(D), batch2(D), batch2(D), batch2(D),
        pl.BlockSpec((tb, L, 2 * sD), bmap3),            # value|key fused; sliced in-kernel
        const(wih_x), const(wih_c), const(whh), const(b_lstm),
        const(ln_g_r), const(ln_b_r), const(wq), const(bq_r),
        const(wctx_a), const(wctx_h), const(bctx_r),
    ]
    out_specs = (
        pl.BlockSpec((tb, D), bmap2),
        pl.BlockSpec((2, tb, D), lambda i: (0, i, 0)),
        pl.BlockSpec((tb, D), bmap2),
    )
    out_shape = (
        jax.ShapeDtypeStruct((B, D), f32),
        jax.ShapeDtypeStruct((2, B, D), f32),
        jax.ShapeDtypeStruct((B, D), f32),
    )

    output, new_h, c_att = pl.pallas_call(
        partial(_aoa_core_kernel, D, sD, d_k, num_heads),
        grid=(nblk,),
        in_specs=in_specs,
        out_specs=out_specs,
        out_shape=out_shape,
        compiler_params=pltpu.CompilerParams(
            dimension_semantics=("parallel",),
            vmem_limit_bytes=vmem_limit),
    )(*args)

    new_c = jnp.stack([c_att, c1.astype(f32)], axis=0)   # ctx cell passes through outside
    return output, (new_h, new_c)


def _aoa_reference(xt, mean_feats, p_att_feats, state, params, *, num_heads, scale):
    """Plain-JAX f32 reference matching the PyTorch forward (eval mode, no masks)."""
    hi = jax.lax.Precision.HIGHEST
    f32 = jnp.float32
    B, E = xt.shape
    D = mean_feats.shape[1]
    L = p_att_feats.shape[1]
    sD = scale * D
    d_k = sD // num_heads
    h0, h1 = state[0][0], state[0][1]
    c0, c1 = state[1][0], state[1][1]

    x_cat = jnp.concatenate([xt, mean_feats + h1], axis=1)
    gates = (jnp.dot(x_cat, params["w_ih"].T, precision=hi) + params["b_ih"]
             + jnp.dot(h0, params["w_hh"].T, precision=hi) + params["b_hh"])
    i_g = jax.nn.sigmoid(gates[:, 0 * D:1 * D])
    f_g = jax.nn.sigmoid(gates[:, 1 * D:2 * D])
    g_g = jnp.tanh(gates[:, 2 * D:3 * D])
    o_g = jax.nn.sigmoid(gates[:, 3 * D:4 * D])
    c_att = f_g * c0 + i_g * g_g
    h_att = o_g * jnp.tanh(c_att)

    mean = jnp.mean(h_att, axis=-1, keepdims=True)
    std = jnp.std(h_att, axis=-1, ddof=1, keepdims=True)
    qn = params["ln_g"] * (h_att - mean) / (std + 1e-6) + params["ln_b"]
    qp = jnp.dot(qn, params["wq"].T, precision=hi) + params["bq"]

    value = p_att_feats[:, :, :sD].astype(f32)
    key = p_att_feats[:, :, sD:].astype(f32)
    qh = qp.reshape(B, num_heads, d_k)
    kh = key.reshape(B, L, num_heads, d_k)
    vh = value.reshape(B, L, num_heads, d_k)
    scores = jnp.einsum('bhd,blhd->bhl', qh, kh, precision=hi) / (float(d_k) ** 0.5)
    attn = jax.nn.softmax(scores, axis=-1)
    att = jnp.einsum('bhl,blhd->bhd', attn, vh, precision=hi).reshape(B, sD)

    ctx_in = jnp.concatenate([att, h_att], axis=1)
    z = jnp.dot(ctx_in, params["w_ctx"].T, precision=hi) + params["b_ctx"]
    output = z[:, :D] * jax.nn.sigmoid(z[:, D:])
    return output, (jnp.stack([h_att, output]), jnp.stack([c_att, c1]))


if __name__ == "__main__":
    B, E, D, L, H, SCALE = 16, 64, 128, 16, 4, 1

    key = jax.random.PRNGKey(0)
    ks = jax.random.split(key, 13)
    rnd = lambda k, shape, s=0.1: jax.random.normal(k, shape, jnp.float32) * s

    xt = rnd(ks[0], (B, E), 1.0)
    mean_feats = rnd(ks[1], (B, D), 1.0)
    p_att_feats = rnd(ks[2], (B, L, 2 * SCALE * D), 1.0)
    state = (rnd(ks[3], (2, B, D), 1.0), rnd(ks[4], (2, B, D), 1.0))

    params = dict(
        w_ih=rnd(ks[5], (4 * D, E + D)),
        w_hh=rnd(ks[6], (4 * D, D)),
        b_ih=rnd(ks[7], (4 * D,)),
        b_hh=rnd(ks[8], (4 * D,)),
        ln_g=jnp.ones((D,), jnp.float32),
        ln_b=jnp.zeros((D,), jnp.float32),
        wq=rnd(ks[9], (SCALE * D, D)),
        bq=rnd(ks[10], (SCALE * D,)),
        w_ctx=rnd(ks[11], (2 * D, SCALE * D + D)),
        b_ctx=rnd(ks[12], (2 * D,)),
    )

    out_ref, st_ref = _aoa_reference(xt, mean_feats, p_att_feats, state, params,
                                     num_heads=H, scale=SCALE)

    # f32-MXU path (tb picked automatically: divisor of B, >= 2 grid steps).
    out_f32, st_f32 = aoa_decoder_core(
        xt, mean_feats, p_att_feats, state, params,
        num_heads=H, scale=SCALE, mxu_dtype=None)
    jax.block_until_ready((out_f32, st_f32))
    assert out_f32.shape == (B, D)
    assert st_f32[0].shape == (2, B, D) and st_f32[1].shape == (2, B, D)
    assert bool(jnp.all(jnp.isfinite(out_f32)))
    assert bool(jnp.max(jnp.abs(out_f32 - out_ref)) < 5e-3)
    assert bool(jnp.max(jnp.abs(st_f32[0] - st_ref[0])) < 5e-3)
    assert bool(jnp.max(jnp.abs(st_f32[1][0] - st_ref[1][0])) < 5e-3)
    assert bool(jnp.max(jnp.abs(st_f32[1][1] - state[1][1])) == 0.0)

    # Production path: bf16 MXU operands + bf16 KV cast ONCE (persists across steps).
    p_att_feats_bf16 = p_att_feats.astype(jnp.bfloat16)
    out_bf, st_bf = aoa_decoder_core(
        xt, mean_feats, p_att_feats_bf16, state, params,
        num_heads=H, scale=SCALE, mxu_dtype=jnp.bfloat16)
    jax.block_until_ready((out_bf, st_bf))
    assert bool(jnp.all(jnp.isfinite(out_bf)))
    assert bool(jnp.max(jnp.abs(out_bf - out_ref)) < 0.15)

    print("KERNEL_OK")
</pallas_src>

<mosaic_0001>
module attributes {stable_mosaic.version = 11 : i64} {
  func.func @_aoa_core_kernel(%arg0: i32, %arg1: memref<8x64xf32, #tpu.memory_space<vmem>>, %arg2: memref<8x128xf32, #tpu.memory_space<vmem>>, %arg3: memref<8x128xf32, #tpu.memory_space<vmem>>, %arg4: memref<8x128xf32, #tpu.memory_space<vmem>>, %arg5: memref<8x128xf32, #tpu.memory_space<vmem>>, %arg6: memref<8x16x256xf32, #tpu.memory_space<vmem>>, %arg7: memref<64x512xf32, #tpu.memory_space<vmem>>, %arg8: memref<128x512xf32, #tpu.memory_space<vmem>>, %arg9: memref<128x512xf32, #tpu.memory_space<vmem>>, %arg10: memref<1x512xf32, #tpu.memory_space<vmem>>, %arg11: memref<1x128xf32, #tpu.memory_space<vmem>>, %arg12: memref<1x128xf32, #tpu.memory_space<vmem>>, %arg13: memref<128x128xf32, #tpu.memory_space<vmem>>, %arg14: memref<1x128xf32, #tpu.memory_space<vmem>>, %arg15: memref<128x256xf32, #tpu.memory_space<vmem>>, %arg16: memref<128x256xf32, #tpu.memory_space<vmem>>, %arg17: memref<1x256xf32, #tpu.memory_space<vmem>>, %arg18: memref<8x128xf32, #tpu.memory_space<vmem>>, %arg19: memref<2x8x128xf32, #tpu.memory_space<vmem>>, %arg20: memref<8x128xf32, #tpu.memory_space<vmem>>) attributes {dimension_semantics = [#tpu.dimension_semantics<parallel>], iteration_bounds = array<i64: 2>, scalar_prefetch = 0 : i64, scratch_operands = 0 : i64, tpu.core_type = #tpu.core_type<tc>, window_params = [{transform_indices = @transform_0, window_bounds = array<i64: 8, 64>}, {transform_indices = @transform_1, window_bounds = array<i64: 8, 128>}, {transform_indices = @transform_2, window_bounds = array<i64: 8, 128>}, {transform_indices = @transform_3, window_bounds = array<i64: 8, 128>}, {transform_indices = @transform_4, window_bounds = array<i64: 8, 128>}, {transform_indices = @transform_5, window_bounds = array<i64: 8, 16, 256>}, {pipeline_mode = #tpu.pipeline_mode<synchronous>, transform_indices = @transform_6, window_bounds = array<i64: 64, 512>}, {pipeline_mode = #tpu.pipeline_mode<synchronous>, transform_indices = @transform_7, window_bounds = array<i64: 128, 512>}, {pipeline_mode = #tpu.pipeline_mode<synchronous>, transform_indices = @transform_8, window_bounds = array<i64: 128, 512>}, {pipeline_mode = #tpu.pipeline_mode<synchronous>, transform_indices = @transform_9, window_bounds = array<i64: 1, 512>}, {pipeline_mode = #tpu.pipeline_mode<synchronous>, transform_indices = @transform_10, window_bounds = array<i64: 1, 128>}, {pipeline_mode = #tpu.pipeline_mode<synchronous>, transform_indices = @transform_11, window_bounds = array<i64: 1, 128>}, {pipeline_mode = #tpu.pipeline_mode<synchronous>, transform_indices = @transform_12, window_bounds = array<i64: 128, 128>}, {pipeline_mode = #tpu.pipeline_mode<synchronous>, transform_indices = @transform_13, window_bounds = array<i64: 1, 128>}, {pipeline_mode = #tpu.pipeline_mode<synchronous>, transform_indices = @transform_14, window_bounds = array<i64: 128, 256>}, {pipeline_mode = #tpu.pipeline_mode<synchronous>, transform_indices = @transform_15, window_bounds = array<i64: 128, 256>}, {pipeline_mode = #tpu.pipeline_mode<synchronous>, transform_indices = @transform_16, window_bounds = array<i64: 1, 256>}, {transform_indices = @transform_17, window_bounds = array<i64: 8, 128>}, {transform_indices = @transform_18, window_bounds = array<i64: 2, 8, 128>}, {transform_indices = @transform_19, window_bounds = array<i64: 8, 128>}]} {
    %c0 = arith.constant 0 : index
    %c0_0 = arith.constant 0 : index
    %0 = vector.load %arg1[%c0, %c0_0] : memref<8x64xf32, #tpu.memory_space<vmem>>, vector<8x64xf32>
    %c0_1 = arith.constant 0 : index
    %c0_2 = arith.constant 0 : index
    %1 = vector.load %arg2[%c0_1, %c0_2] : memref<8x128xf32, #tpu.memory_space<vmem>>, vector<8x128xf32>
    %c0_3 = arith.constant 0 : index
    %c0_4 = arith.constant 0 : index
    %2 = vector.load %arg4[%c0_3, %c0_4] : memref<8x128xf32, #tpu.memory_space<vmem>>, vector<8x128xf32>
    %3 = arith.addf %1, %2 : vector<8x128xf32>
    %c0_5 = arith.constant 0 : index
    %c0_6 = arith.constant 0 : index
    %4 = vector.load %arg7[%c0_5, %c0_6] : memref<64x512xf32, #tpu.memory_space<vmem>>, vector<64x512xf32>
    %cst = arith.constant dense<0.000000e+00> : vector<8x512xf32>
    %5 = tpu.matmul %0, %4, %cst {dimension_numbers = #tpu.dot_dimension_numbers<[1], [0], [0], [1], [0, 0, 1, 1], [], []>} : vector<8x64xf32>, vector<64x512xf32>, vector<8x512xf32> -> vector<8x512xf32>
    %c0_7 = arith.constant 0 : index
    %c0_8 = arith.constant 0 : index
    %6 = vector.load %arg8[%c0_7, %c0_8] : memref<128x512xf32, #tpu.memory_space<vmem>>, vector<128x512xf32>
    %cst_9 = arith.constant dense<0.000000e+00> : vector<8x512xf32>
    %7 = tpu.matmul %3, %6, %cst_9 {dimension_numbers = #tpu.dot_dimension_numbers<[1], [0], [0], [1], [0, 0, 1, 1], [], []>} : vector<8x128xf32>, vector<128x512xf32>, vector<8x512xf32> -> vector<8x512xf32>
    %8 = arith.addf %5, %7 : vector<8x512xf32>
    %c0_10 = arith.constant 0 : index
    %c0_11 = arith.constant 0 : index
    %9 = vector.load %arg3[%c0_10, %c0_11] : memref<8x128xf32, #tpu.memory_space<vmem>>, vector<8x128xf32>
    %c0_12 = arith.constant 0 : index
    %c0_13 = arith.constant 0 : index
    %10 = vector.load %arg9[%c0_12, %c0_13] : memref<128x512xf32, #tpu.memory_space<vmem>>, vector<128x512xf32>
    %cst_14 = arith.constant dense<0.000000e+00> : vector<8x512xf32>
    %11 = tpu.matmul %9, %10, %cst_14 {dimension_numbers = #tpu.dot_dimension_numbers<[1], [0], [0], [1], [0, 0, 1, 1], [], []>} : vector<8x128xf32>, vector<128x512xf32>, vector<8x512xf32> -> vector<8x512xf32>
    %12 = arith.addf %8, %11 : vector<8x512xf32>
    %c0_15 = arith.constant 0 : index
    %c0_16 = arith.constant 0 : index
    %13 = vector.load %arg10[%c0_15, %c0_16] : memref<1x512xf32, #tpu.memory_space<vmem>>, vector<1x512xf32>
    %14 = vector.broadcast %13 : vector<1x512xf32> to vector<8x512xf32>
    %15 = arith.addf %12, %14 : vector<8x512xf32>
    %16 = vector.extract_strided_slice %15 {offsets = [0, 0], sizes = [8, 128], strides = [1, 1]} : vector<8x512xf32> to vector<8x128xf32>
    %17 = arith.negf %16 : vector<8x128xf32>
    %18 = math.exp %17 : vector<8x128xf32>
    %cst_17 = arith.constant 1.000000e+00 : f32
    %19 = vector.broadcast %cst_17 : f32 to vector<8x128xf32>
    %20 = arith.addf %19, %18 : vector<8x128xf32>
    %21 = arith.divf %19, %20 : vector<8x128xf32>
    %22 = vector.extract_strided_slice %15 {offsets = [0, 128], sizes = [8, 128], strides = [1, 1]} : vector<8x512xf32> to vector<8x128xf32>
    %23 = arith.negf %22 : vector<8x128xf32>
    %24 = math.exp %23 : vector<8x128xf32>
    %cst_18 = arith.constant 1.000000e+00 : f32
    %25 = vector.broadcast %cst_18 : f32 to vector<8x128xf32>
    %26 = arith.addf %25, %24 : vector<8x128xf32>
    %27 = arith.divf %25, %26 : vector<8x128xf32>
    %28 = vector.extract_strided_slice %15 {offsets = [0, 256], sizes = [8, 128], strides = [1, 1]} : vector<8x512xf32> to vector<8x128xf32>
    %29 = math.tanh %28 : vector<8x128xf32>
    %30 = vector.extract_strided_slice %15 {offsets = [0, 384], sizes = [8, 128], strides = [1, 1]} : vector<8x512xf32> to vector<8x128xf32>
    %31 = arith.negf %30 : vector<8x128xf32>
    %32 = math.exp %31 : vector<8x128xf32>
    %cst_19 = arith.constant 1.000000e+00 : f32
    %33 = vector.broadcast %cst_19 : f32 to vector<8x128xf32>
    %34 = arith.addf %33, %32 : vector<8x128xf32>
    %35 = arith.divf %33, %34 : vector<8x128xf32>
    %c0_20 = arith.constant 0 : index
    %c0_21 = arith.constant 0 : index
    %36 = vector.load %arg5[%c0_20, %c0_21] : memref<8x128xf32, #tpu.memory_space<vmem>>, vector<8x128xf32>
    %37 = arith.mulf %27, %36 : vector<8x128xf32>
    %38 = arith.mulf %21, %29 : vector<8x128xf32>
    %39 = arith.addf %37, %38 : vector<8x128xf32>
    %40 = math.tanh %39 : vector<8x128xf32>
    %41 = arith.mulf %35, %40 : vector<8x128xf32>
    %cst_22 = arith.constant dense<0.000000e+00> : vector<8xf32>
    %42 = vector.multi_reduction <add>, %41, %cst_22 [1] : vector<8x128xf32> to vector<8xf32>
    %43 = vector.shape_cast %42 : vector<8xf32> to vector<8x1xf32>
    %cst_23 = arith.constant 1.280000e+02 : f32
    %44 = vector.broadcast %cst_23 : f32 to vector<8x1xf32>
    %45 = arith.divf %43, %44 : vector<8x1xf32>
    %46 = vector.broadcast %45 : vector<8x1xf32> to vector<8x128xf32>
    %47 = arith.subf %41, %46 : vector<8x128xf32>
    %48 = arith.mulf %47, %47 : vector<8x128xf32>
    %cst_24 = arith.constant dense<0.000000e+00> : vector<8xf32>
    %49 = vector.multi_reduction <add>, %48, %cst_24 [1] : vector<8x128xf32> to vector<8xf32>
    %50 = vector.shape_cast %49 : vector<8xf32> to vector<8x1xf32>
    %cst_25 = arith.constant 0.00787401571 : f32
    %51 = vector.broadcast %cst_25 : f32 to vector<8x1xf32>
    %52 = arith.mulf %50, %51 : vector<8x1xf32>
    %53 = math.sqrt %52 : vector<8x1xf32>
    %cst_26 = arith.constant 9.99999997E-7 : f32
    %54 = vector.broadcast %cst_26 : f32 to vector<8x1xf32>
    %55 = arith.addf %53, %54 : vector<8x1xf32>
    %cst_27 = arith.constant 1.000000e+00 : f32
    %56 = vector.broadcast %cst_27 : f32 to vector<8x1xf32>
    %57 = arith.divf %56, %55 : vector<8x1xf32>
    %c0_28 = arith.constant 0 : index
    %c0_29 = arith.constant 0 : index
    %58 = vector.load %arg11[%c0_28, %c0_29] : memref<1x128xf32, #tpu.memory_space<vmem>>, vector<1x128xf32>
    %59 = vector.broadcast %57 : vector<8x1xf32> to vector<8x128xf32>
    %60 = arith.mulf %47, %59 : vector<8x128xf32>
    %61 = vector.broadcast %58 : vector<1x128xf32> to vector<8x128xf32>
    %62 = arith.mulf %61, %60 : vector<8x128xf32>
    %c0_30 = arith.constant 0 : index
    %c0_31 = arith.constant 0 : index
    %63 = vector.load %arg12[%c0_30, %c0_31] : memref<1x128xf32, #tpu.memory_space<vmem>>, vector<1x128xf32>
    %64 = vector.broadcast %63 : vector<1x128xf32> to vector<8x128xf32>
    %65 = arith.addf %62, %64 : vector<8x128xf32>
    %c0_32 = arith.constant 0 : index
    %c0_33 = arith.constant 0 : index
    %66 = vector.load %arg13[%c0_32, %c0_33] : memref<128x128xf32, #tpu.memory_space<vmem>>, vector<128x128xf32>
    %cst_34 = arith.constant dense<0.000000e+00> : vector<8x128xf32>
    %67 = tpu.matmul %65, %66, %cst_34 {dimension_numbers = #tpu.dot_dimension_numbers<[1], [0], [0], [1], [0, 0, 1, 1], [], []>} : vector<8x128xf32>, vector<128x128xf32>, vector<8x128xf32> -> vector<8x128xf32>
    %c0_35 = arith.constant 0 : index
    %c0_36 = arith.constant 0 : index
    %68 = vector.load %arg14[%c0_35, %c0_36] : memref<1x128xf32, #tpu.memory_space<vmem>>, vector<1x128xf32>
    %69 = vector.broadcast %68 : vector<1x128xf32> to vector<8x128xf32>
    %70 = arith.addf %67, %69 : vector<8x128xf32>
    %cst_37 = arith.constant 0.176776692 : f32
    %71 = vector.broadcast %cst_37 : f32 to vector<8x128xf32>
    %72 = arith.mulf %70, %71 : vector<8x128xf32>
    %c0_38 = arith.constant 0 : index
    %c0_39 = arith.constant 0 : index
    %c0_40 = arith.constant 0 : index
    %73 = vector.load %arg6[%c0_38, %c0_39, %c0_40] : memref<8x16x256xf32, #tpu.memory_space<vmem>>, vector<8x16x256xf32>
    %74 = vector.extract_strided_slice %73 {offsets = [0, 0, 128], sizes = [8, 16, 32], strides = [1, 1, 1]} : vector<8x16x256xf32> to vector<8x16x32xf32>
    %75 = vector.extract_strided_slice %73 {offsets = [0, 0, 0], sizes = [8, 16, 32], strides = [1, 1, 1]} : vector<8x16x256xf32> to vector<8x16x32xf32>
    %76 = vector.extract_strided_slice %72 {offsets = [0, 0], sizes = [8, 32], strides = [1, 1]} : vector<8x128xf32> to vector<8x32xf32>
    %77 = vector.shape_cast %76 : vector<8x32xf32> to vector<8x1x32xf32>
    %78 = vector.broadcast %77 : vector<8x1x32xf32> to vector<8x16x32xf32>
    %79 = arith.mulf %78, %74 : vector<8x16x32xf32>
    %cst_41 = arith.constant dense<0.000000e+00> : vector<8x16xf32>
    %80 = vector.multi_reduction <add>, %79, %cst_41 [2] : vector<8x16x32xf32> to vector<8x16xf32>
    %cst_42 = arith.constant dense<0xFF800000> : vector<8xf32>
    %81 = vector.multi_reduction <maximumf>, %80, %cst_42 [1] : vector<8x16xf32> to vector<8xf32>
    %82 = vector.shape_cast %81 : vector<8xf32> to vector<8x1xf32>
    %83 = vector.broadcast %82 : vector<8x1xf32> to vector<8x16xf32>
    %84 = arith.subf %80, %83 : vector<8x16xf32>
    %85 = math.exp %84 : vector<8x16xf32>
    %cst_43 = arith.constant dense<0.000000e+00> : vector<8xf32>
    %86 = vector.multi_reduction <add>, %85, %cst_43 [1] : vector<8x16xf32> to vector<8xf32>
    %87 = vector.shape_cast %86 : vector<8xf32> to vector<8x1xf32>
    %88 = tpu.reciprocal %87 {approx = true} : vector<8x1xf32> -> vector<8x1xf32>
    %89 = vector.broadcast %88 : vector<8x1xf32> to vector<8x16xf32>
    %90 = arith.mulf %85, %89 : vector<8x16xf32>
    %91 = vector.shape_cast %90 : vector<8x16xf32> to vector<8x16x1xf32>
    %92 = vector.broadcast %91 : vector<8x16x1xf32> to vector<8x16x32xf32>
    %93 = arith.mulf %92, %75 : vector<8x16x32xf32>
    %cst_44 = arith.constant dense<0.000000e+00> : vector<8x32xf32>
    %94 = vector.multi_reduction <add>, %93, %cst_44 [1] : vector<8x16x32xf32> to vector<8x32xf32>
    %95 = vector.extract_strided_slice %73 {offsets = [0, 0, 160], sizes = [8, 16, 32], strides = [1, 1, 1]} : vector<8x16x256xf32> to vector<8x16x32xf32>
    %96 = vector.extract_strided_slice %73 {offsets = [0, 0, 32], sizes = [8, 16, 32], strides = [1, 1, 1]} : vector<8x16x256xf32> to vector<8x16x32xf32>
    %97 = vector.extract_strided_slice %72 {offsets = [0, 32], sizes = [8, 32], strides = [1, 1]} : vector<8x128xf32> to vector<8x32xf32>
    %98 = vector.shape_cast %97 : vector<8x32xf32> to vector<8x1x32xf32>
    %99 = vector.broadcast %98 : vector<8x1x32xf32> to vector<8x16x32xf32>
    %100 = arith.mulf %99, %95 : vector<8x16x32xf32>
    %cst_45 = arith.constant dense<0.000000e+00> : vector<8x16xf32>
    %101 = vector.multi_reduction <add>, %100, %cst_45 [2] : vector<8x16x32xf32> to vector<8x16xf32>
    %cst_46 = arith.constant dense<0xFF800000> : vector<8xf32>
    %102 = vector.multi_reduction <maximumf>, %101, %cst_46 [1] : vector<8x16xf32> to vector<8xf32>
    %103 = vector.shape_cast %102 : vector<8xf32> to vector<8x1xf32>
    %104 = vector.broadcast %103 : vector<8x1xf32> to vector<8x16xf32>
    %105 = arith.subf %101, %104 : vector<8x16xf32>
    %106 = math.exp %105 : vector<8x16xf32>
    %cst_47 = arith.constant dense<0.000000e+00> : vector<8xf32>
    %107 = vector.multi_reduction <add>, %106, %cst_47 [1] : vector<8x16xf32> to vector<8xf32>
    %108 = vector.shape_cast %107 : vector<8xf32> to vector<8x1xf32>
    %109 = tpu.reciprocal %108 {approx = true} : vector<8x1xf32> -> vector<8x1xf32>
    %110 = vector.broadcast %109 : vector<8x1xf32> to vector<8x16xf32>
    %111 = arith.mulf %106, %110 : vector<8x16xf32>
    %112 = vector.shape_cast %111 : vector<8x16xf32> to vector<8x16x1xf32>
    %113 = vector.broadcast %112 : vector<8x16x1xf32> to vector<8x16x32xf32>
    %114 = arith.mulf %113, %96 : vector<8x16x32xf32>
    %cst_48 = arith.constant dense<0.000000e+00> : vector<8x32xf32>
    %115 = vector.multi_reduction <add>, %114, %cst_48 [1] : vector<8x16x32xf32> to vector<8x32xf32>
    %116 = vector.extract_strided_slice %73 {offsets = [0, 0, 192], sizes = [8, 16, 32], strides = [1, 1, 1]} : vector<8x16x256xf32> to vector<8x16x32xf32>
    %117 = vector.extract_strided_slice %73 {offsets = [0, 0, 64], sizes = [8, 16, 32], strides = [1, 1, 1]} : vector<8x16x256xf32> to vector<8x16x32xf32>
    %118 = vector.extract_strided_slice %72 {offsets = [0, 64], sizes = [8, 32], strides = [1, 1]} : vector<8x128xf32> to vector<8x32xf32>
    %119 = vector.shape_cast %118 : vector<8x32xf32> to vector<8x1x32xf32>
    %120 = vector.broadcast %119 : vector<8x1x32xf32> to vector<8x16x32xf32>
    %121 = arith.mulf %120, %116 : vector<8x16x32xf32>
    %cst_49 = arith.constant dense<0.000000e+00> : vector<8x16xf32>
    %122 = vector.multi_reduction <add>, %121, %cst_49 [2] : vector<8x16x32xf32> to vector<8x16xf32>
    %cst_50 = arith.constant dense<0xFF800000> : vector<8xf32>
    %123 = vector.multi_reduction <maximumf>, %122, %cst_50 [1] : vector<8x16xf32> to vector<8xf32>
    %124 = vector.shape_cast %123 : vector<8xf32> to vector<8x1xf32>
    %125 = vector.broadcast %124 : vector<8x1xf32> to vector<8x16xf32>
    %126 = arith.subf %122, %125 : vector<8x16xf32>
    %127 = math.exp %126 : vector<8x16xf32>
    %cst_51 = arith.constant dense<0.000000e+00> : vector<8xf32>
    %128 = vector.multi_reduction <add>, %127, %cst_51 [1] : vector<8x16xf32> to vector<8xf32>
    %129 = vector.shape_cast %128 : vector<8xf32> to vector<8x1xf32>
    %130 = tpu.reciprocal %129 {approx = true} : vector<8x1xf32> -> vector<8x1xf32>
    %131 = vector.broadcast %130 : vector<8x1xf32> to vector<8x16xf32>
    %132 = arith.mulf %127, %131 : vector<8x16xf32>
    %133 = vector.shape_cast %132 : vector<8x16xf32> to vector<8x16x1xf32>
    %134 = vector.broadcast %133 : vector<8x16x1xf32> to vector<8x16x32xf32>
    %135 = arith.mulf %134, %117 : vector<8x16x32xf32>
    %cst_52 = arith.constant dense<0.000000e+00> : vector<8x32xf32>
    %136 = vector.multi_reduction <add>, %135, %cst_52 [1] : vector<8x16x32xf32> to vector<8x32xf32>
    %137 = vector.extract_strided_slice %73 {offsets = [0, 0, 224], sizes = [8, 16, 32], strides = [1, 1, 1]} : vector<8x16x256xf32> to vector<8x16x32xf32>
    %138 = vector.extract_strided_slice %73 {offsets = [0, 0, 96], sizes = [8, 16, 32], strides = [1, 1, 1]} : vector<8x16x256xf32> to vector<8x16x32xf32>
    %139 = vector.extract_strided_slice %72 {offsets = [0, 96], sizes = [8, 32], strides = [1, 1]} : vector<8x128xf32> to vector<8x32xf32>
    %140 = vector.shape_cast %139 : vector<8x32xf32> to vector<8x1x32xf32>
    %141 = vector.broadcast %140 : vector<8x1x32xf32> to vector<8x16x32xf32>
    %142 = arith.mulf %141, %137 : vector<8x16x32xf32>
    %cst_53 = arith.constant dense<0.000000e+00> : vector<8x16xf32>
    %143 = vector.multi_reduction <add>, %142, %cst_53 [2] : vector<8x16x32xf32> to vector<8x16xf32>
    %cst_54 = arith.constant dense<0xFF800000> : vector<8xf32>
    %144 = vector.multi_reduction <maximumf>, %143, %cst_54 [1] : vector<8x16xf32> to vector<8xf32>
    %145 = vector.shape_cast %144 : vector<8xf32> to vector<8x1xf32>
    %146 = vector.broadcast %145 : vector<8x1xf32> to vector<8x16xf32>
    %147 = arith.subf %143, %146 : vector<8x16xf32>
    %148 = math.exp %147 : vector<8x16xf32>
    %cst_55 = arith.constant dense<0.000000e+00> : vector<8xf32>
    %149 = vector.multi_reduction <add>, %148, %cst_55 [1] : vector<8x16xf32> to vector<8xf32>
    %150 = vector.shape_cast %149 : vector<8xf32> to vector<8x1xf32>
    %151 = tpu.reciprocal %150 {approx = true} : vector<8x1xf32> -> vector<8x1xf32>
    %152 = vector.broadcast %151 : vector<8x1xf32> to vector<8x16xf32>
    %153 = arith.mulf %148, %152 : vector<8x16xf32>
    %154 = vector.shape_cast %153 : vector<8x16xf32> to vector<8x16x1xf32>
    %155 = vector.broadcast %154 : vector<8x16x1xf32> to vector<8x16x32xf32>
    %156 = arith.mulf %155, %138 : vector<8x16x32xf32>
    %cst_56 = arith.constant dense<0.000000e+00> : vector<8x32xf32>
    %157 = vector.multi_reduction <add>, %156, %cst_56 [1] : vector<8x16x32xf32> to vector<8x32xf32>
    %158 = tpu.concatenate %94, %115, %136, %157 in 1 : vector<8x32xf32>, vector<8x32xf32>, vector<8x32xf32>, vector<8x32xf32> -> vector<8x128xf32>
    %c0_57 = arith.constant 0 : index
    %c0_58 = arith.constant 0 : index
    %159 = vector.load %arg15[%c0_57, %c0_58] : memref<128x256xf32, #tpu.memory_space<vmem>>, vector<128x256xf32>
    %cst_59 = arith.constant dense<0.000000e+00> : vector<8x256xf32>
    %160 = tpu.matmul %158, %159, %cst_59 {dimension_numbers = #tpu.dot_dimension_numbers<[1], [0], [0], [1], [0, 0, 1, 1], [], []>} : vector<8x128xf32>, vector<128x256xf32>, vector<8x256xf32> -> vector<8x256xf32>
    %c0_60 = arith.constant 0 : index
    %c0_61 = arith.constant 0 : index
    %161 = vector.load %arg16[%c0_60, %c0_61] : memref<128x256xf32, #tpu.memory_space<vmem>>, vector<128x256xf32>
    %cst_62 = arith.constant dense<0.000000e+00> : vector<8x256xf32>
    %162 = tpu.matmul %41, %161, %cst_62 {dimension_numbers = #tpu.dot_dimension_numbers<[1], [0], [0], [1], [0, 0, 1, 1], [], []>} : vector<8x128xf32>, vector<128x256xf32>, vector<8x256xf32> -> vector<8x256xf32>
    %163 = arith.addf %160, %162 : vector<8x256xf32>
    %c0_63 = arith.constant 0 : index
    %c0_64 = arith.constant 0 : index
    %164 = vector.load %arg17[%c0_63, %c0_64] : memref<1x256xf32, #tpu.memory_space<vmem>>, vector<1x256xf32>
    %165 = vector.broadcast %164 : vector<1x256xf32> to vector<8x256xf32>
    %166 = arith.addf %163, %165 : vector<8x256xf32>
    %167 = vector.extract_strided_slice %166 {offsets = [0, 0], sizes = [8, 128], strides = [1, 1]} : vector<8x256xf32> to vector<8x128xf32>
    %168 = vector.extract_strided_slice %166 {offsets = [0, 128], sizes = [8, 128], strides = [1, 1]} : vector<8x256xf32> to vector<8x128xf32>
    %169 = arith.negf %168 : vector<8x128xf32>
    %170 = math.exp %169 : vector<8x128xf32>
    %cst_65 = arith.constant 1.000000e+00 : f32
    %171 = vector.broadcast %cst_65 : f32 to vector<8x128xf32>
    %172 = arith.addf %171, %170 : vector<8x128xf32>
    %173 = arith.divf %171, %172 : vector<8x128xf32>
    %174 = arith.mulf %167, %173 : vector<8x128xf32>
    %c0_66 = arith.constant 0 : index
    %c0_67 = arith.constant 0 : index
    %175 = vector.load %arg18[%c0_66, %c0_67] : memref<8x128xf32, #tpu.memory_space<vmem>>, vector<8x128xf32>
    tpu.vector_store %arg18[%c0_66, %c0_67], %174 {strides = array<i32>} : memref<8x128xf32, #tpu.memory_space<vmem>>, vector<8x128xf32>,
    %c0_68 = arith.constant 0 : index
    %c0_69 = arith.constant 0 : index
    %c0_70 = arith.constant 0 : index
    %176 = vector.load %arg19[%c0_68, %c0_69, %c0_70] : memref<2x8x128xf32, #tpu.memory_space<vmem>>, vector<1x8x128xf32>
    %177 = vector.shape_cast %176 : vector<1x8x128xf32> to vector<8x128xf32>
    %178 = vector.shape_cast %41 : vector<8x128xf32> to vector<1x8x128xf32>
    tpu.vector_store %arg19[%c0_68, %c0_69, %c0_70], %178 {strides = array<i32>} : memref<2x8x128xf32, #tpu.memory_space<vmem>>, vector<1x8x128xf32>,
    %c1 = arith.constant 1 : index
    %c0_71 = arith.constant 0 : index
    %c0_72 = arith.constant 0 : index
    %179 = vector.load %arg19[%c1, %c0_71, %c0_72] : memref<2x8x128xf32, #tpu.memory_space<vmem>>, vector<1x8x128xf32>
    %180 = vector.shape_cast %179 : vector<1x8x128xf32> to vector<8x128xf32>
    %181 = vector.shape_cast %174 : vector<8x128xf32> to vector<1x8x128xf32>
    tpu.vector_store %arg19[%c1, %c0_71, %c0_72], %181 {strides = array<i32>} : memref<2x8x128xf32, #tpu.memory_space<vmem>>, vector<1x8x128xf32>,
    %c0_73 = arith.constant 0 : index
    %c0_74 = arith.constant 0 : index
    %182 = vector.load %arg20[%c0_73, %c0_74] : memref<8x128xf32, #tpu.memory_space<vmem>>, vector<8x128xf32>
    tpu.vector_store %arg20[%c0_73, %c0_74], %39 {strides = array<i32>} : memref<8x128xf32, #tpu.memory_space<vmem>>, vector<8x128xf32>,
    return
  }
  func.func @transform_0(%arg0: i32) -> (i32, i32) {
    %c0_i32 = arith.constant 0 : i32
    %c0_i32_0 = arith.constant 0 : i32
    return %arg0, %c0_i32 : i32, i32
  }
  func.func @transform_1(%arg0: i32) -> (i32, i32) {
    %c0_i32 = arith.constant 0 : i32
    %c0_i32_0 = arith.constant 0 : i32
    return %arg0, %c0_i32 : i32, i32
  }
  func.func @transform_2(%arg0: i32) -> (i32, i32) {
    %c0_i32 = arith.constant 0 : i32
    %c0_i32_0 = arith.constant 0 : i32
    return %arg0, %c0_i32 : i32, i32
  }
  func.func @transform_3(%arg0: i32) -> (i32, i32) {
    %c0_i32 = arith.constant 0 : i32
    %c0_i32_0 = arith.constant 0 : i32
    return %arg0, %c0_i32 : i32, i32
  }
  func.func @transform_4(%arg0: i32) -> (i32, i32) {
    %c0_i32 = arith.constant 0 : i32
    %c0_i32_0 = arith.constant 0 : i32
    return %arg0, %c0_i32 : i32, i32
  }
  func.func @transform_5(%arg0: i32) -> (i32, i32, i32) {
    %c0_i32 = arith.constant 0 : i32
    %c0_i32_0 = arith.constant 0 : i32
    %c0_i32_1 = arith.constant 0 : i32
    return %arg0, %c0_i32, %c0_i32_0 : i32, i32, i32
  }
  func.func @transform_6(%arg0: i32) -> (i32, i32) {
    %c0_i32 = arith.constant 0 : i32
    %c0_i32_0 = arith.constant 0 : i32
    %c0_i32_1 = arith.constant 0 : i32
    return %c0_i32, %c0_i32_0 : i32, i32
  }
  func.func @transform_7(%arg0: i32) -> (i32, i32) {
    %c0_i32 = arith.constant 0 : i32
    %c0_i32_0 = arith.constant 0 : i32
    %c0_i32_1 = arith.constant 0 : i32
    return %c0_i32, %c0_i32_0 : i32, i32
  }
  func.func @transform_8(%arg0: i32) -> (i32, i32) {
    %c0_i32 = arith.constant 0 : i32
    %c0_i32_0 = arith.constant 0 : i32
    %c0_i32_1 = arith.constant 0 : i32
    return %c0_i32, %c0_i32_0 : i32, i32
  }
  func.func @transform_9(%arg0: i32) -> (i32, i32) {
    %c0_i32 = arith.constant 0 : i32
    %c0_i32_0 = arith.constant 0 : i32
    %c0_i32_1 = arith.constant 0 : i32
    return %c0_i32, %c0_i32_0 : i32, i32
  }
  func.func @transform_10(%arg0: i32) -> (i32, i32) {
    %c0_i32 = arith.constant 0 : i32
    %c0_i32_0 = arith.constant 0 : i32
    %c0_i32_1 = arith.constant 0 : i32
    return %c0_i32, %c0_i32_0 : i32, i32
  }
  func.func @transform_11(%arg0: i32) -> (i32, i32) {
    %c0_i32 = arith.constant 0 : i32
    %c0_i32_0 = arith.constant 0 : i32
    %c0_i32_1 = arith.constant 0 : i32
    return %c0_i32, %c0_i32_0 : i32, i32
  }
  func.func @transform_12(%arg0: i32) -> (i32, i32) {
    %c0_i32 = arith.constant 0 : i32
    %c0_i32_0 = arith.constant 0 : i32
    %c0_i32_1 = arith.constant 0 : i32
    return %c0_i32, %c0_i32_0 : i32, i32
  }
  func.func @transform_13(%arg0: i32) -> (i32, i32) {
    %c0_i32 = arith.constant 0 : i32
    %c0_i32_0 = arith.constant 0 : i32
    %c0_i32_1 = arith.constant 0 : i32
    return %c0_i32, %c0_i32_0 : i32, i32
  }
  func.func @transform_14(%arg0: i32) -> (i32, i32) {
    %c0_i32 = arith.constant 0 : i32
    %c0_i32_0 = arith.constant 0 : i32
    %c0_i32_1 = arith.constant 0 : i32
    return %c0_i32, %c0_i32_0 : i32, i32
  }
  func.func @transform_15(%arg0: i32) -> (i32, i32) {
    %c0_i32 = arith.constant 0 : i32
    %c0_i32_0 = arith.constant 0 : i32
    %c0_i32_1 = arith.constant 0 : i32
    return %c0_i32, %c0_i32_0 : i32, i32
  }
  func.func @transform_16(%arg0: i32) -> (i32, i32) {
    %c0_i32 = arith.constant 0 : i32
    %c0_i32_0 = arith.constant 0 : i32
    %c0_i32_1 = arith.constant 0 : i32
    return %c0_i32, %c0_i32_0 : i32, i32
  }
  func.func @transform_17(%arg0: i32) -> (i32, i32) {
    %c0_i32 = arith.constant 0 : i32
    %c0_i32_0 = arith.constant 0 : i32
    return %arg0, %c0_i32 : i32, i32
  }
  func.func @transform_18(%arg0: i32) -> (i32, i32, i32) {
    %c0_i32 = arith.constant 0 : i32
    %c0_i32_0 = arith.constant 0 : i32
    %c0_i32_1 = arith.constant 0 : i32
    return %c0_i32, %arg0, %c0_i32_0 : i32, i32, i32
  }
  func.func @transform_19(%arg0: i32) -> (i32, i32) {
    %c0_i32 = arith.constant 0 : i32
    %c0_i32_0 = arith.constant 0 : i32
    return %arg0, %c0_i32 : i32, i32
  }
}

</mosaic_0001>

<llo_original>
// kernel: tpu_custom_call.1
$region0: #{tpu_custom_call.1}
  #allocation0 [shape = 'u32[]', space=smem, size = 0x4, offset = 0x4, fixed_abs, tag = 'smem constant byte address 0x4 - core index']
  #allocation1 [shape = 'u32[72,128]{1,0:T(1,128)}', space=vmem, size = 0x9000, scoped, tag = 'internal scratch']
  %s0 = inlined_call_operand.hbm [shape: f32[16,64], index: 0, kind: input, shape index: {}]
  %s1 = inlined_call_operand.hbm [shape: f32[16,128], index: 1, kind: input, shape index: {}]
  %s2 = inlined_call_operand.hbm [shape: f32[16,128], index: 2, kind: input, shape index: {}]
  %s3 = inlined_call_operand.hbm [shape: f32[16,128], index: 3, kind: input, shape index: {}]
  %s4 = inlined_call_operand.hbm [shape: f32[16,128], index: 4, kind: input, shape index: {}]
  %s5 = inlined_call_operand.hbm [shape: f32[16,16,256], index: 5, kind: input, shape index: {}]
  %s6 = inlined_call_operand.hbm [shape: f32[64,512], index: 6, kind: input, shape index: {}]
  %s7 = inlined_call_operand.hbm [shape: f32[128,512], index: 7, kind: input, shape index: {}]
  %s8 = inlined_call_operand.hbm [shape: f32[128,512], index: 8, kind: input, shape index: {}]
  %s9 = inlined_call_operand.vmem [shape: f32[1,512], index: 9, kind: input, shape index: {}]
  %s10 = inlined_call_operand.vmem [shape: f32[1,128], index: 10, kind: input, shape index: {}]
  %s11 = inlined_call_operand.vmem [shape: f32[1,128], index: 11, kind: input, shape index: {}]
  %s12 = inlined_call_operand.hbm [shape: f32[128,128], index: 12, kind: input, shape index: {}]
  %s13 = inlined_call_operand.vmem [shape: f32[1,128], index: 13, kind: input, shape index: {}]
  %s14 = inlined_call_operand.hbm [shape: f32[128,256], index: 14, kind: input, shape index: {}]
  %s15 = inlined_call_operand.hbm [shape: f32[128,256], index: 15, kind: input, shape index: {}]
  %s16 = inlined_call_operand.vmem [shape: f32[1,256], index: 16, kind: input, shape index: {}]
  %s17 = inlined_call_operand.hbm [shape: f32[16,128], index: 17, kind: output, shape index: {0}]
  %s18 = inlined_call_operand.hbm [shape: f32[2,16,128], index: 18, kind: output, shape index: {1}]
  %s19 = inlined_call_operand.hbm [shape: f32[16,128], index: 19, kind: output, shape index: {2}]
  %20 = xla_tuple %s17, %s18, %s19
  %s21 = sld [smem:[#allocation0]]
  $region165: #{tpu_custom_call.1} parent=0
    _
  %s23 = ssub.s32 1, %s21
  %s24 = scalar_select 0, %s23, %s21
  $region1: #{tpu_custom_call.1} parent=0
    #allocation2 [shape = 'u8[8192]{0}', space=vmem, size = 0x2000, scoped, tag = 'input window, operand 0']
    #allocation3 [shape = 's32[2]{0}', space=sflag, size = 0x8, scoped, tag = 'scoped memory for tpu_custom_call.1']
    #allocation4 [shape = 's32[2]{0}', space=sflag, size = 0x8, scoped, tag = 'scoped memory for tpu_custom_call.1']
    #allocation5 [shape = 'u8[8192]{0}', space=vmem, size = 0x2000, scoped, tag = 'input window, operand 1']
    #allocation6 [shape = 's32[2]{0}', space=sflag, size = 0x8, scoped, tag = 'scoped memory for tpu_custom_call.1']
    #allocation7 [shape = 'u8[8192]{0}', space=vmem, size = 0x2000, scoped, tag = 'input window, operand 2']
    #allocation8 [shape = 'u8[8192]{0}', space=vmem, size = 0x2000, scoped, tag = 'input window, operand 3']
    #allocation9 [shape = 's32[2]{0}', space=sflag, size = 0x8, scoped, tag = 'scoped memory for tpu_custom_call.1']
    #allocation10 [shape = 'u8[8192]{0}', space=vmem, size = 0x2000, scoped, tag = 'input window, operand 4']
    #allocation11 [shape = 'u8[262144]{0}', space=vmem, size = 0x40000, scoped, tag = 'input window, operand 5']
    #allocation12 [shape = 's32[2]{0}', space=sflag, size = 0x8, scoped, tag = 'scoped memory for tpu_custom_call.1']
    #allocation13 [shape = 'u8[131072]{0}', space=vmem, size = 0x20000, scoped, tag = 'input window, operand 6, single buffered']
    #allocation14 [shape = 'u8[262144]{0}', space=vmem, size = 0x40000, scoped, tag = 'input window, operand 7, single buffered']
    #allocation15 [shape = 's32[1]{0}', space=sflag, size = 0x4, scoped, tag = 'scoped memory for tpu_custom_call.1']
    #allocation16 [shape = 'u8[262144]{0}', space=vmem, size = 0x40000, scoped, tag = 'input window, operand 8, single buffered']
    #allocation17 [shape = 'u8[65536]{0}', space=vmem, size = 0x10000, scoped, tag = 'input window, operand 12, single buffered']
    #allocation18 [shape = 's32[1]{0}', space=sflag, size = 0x4, scoped, tag = 'scoped memory for tpu_custom_call.1']
    #allocation19 [shape = 'u8[131072]{0}', space=vmem, size = 0x20000, scoped, tag = 'input window, operand 14, single buffered']
    #allocation20 [shape = 'u8[131072]{0}', space=vmem, size = 0x20000, scoped, tag = 'input window, operand 15, single buffered']
    #allocation21 [shape = 's32[1]{0}', space=sflag, size = 0x4, scoped, tag = 'scoped memory for tpu_custom_call.1']
    #allocation22 [shape = 'u8[8192]{0}', space=vmem, size = 0x2000, scoped, tag = 'output window, operand 0']
    #allocation23 [shape = 'u8[16384]{0}', space=vmem, size = 0x4000, scoped, tag = 'output window, operand 1']
    #allocation24 [shape = 's32[2]{0}', space=sflag, size = 0x8, scoped, tag = 'scoped memory for tpu_custom_call.1']
    #allocation25 [shape = 'u8[8192]{0}', space=vmem, size = 0x2000, scoped, tag = 'output window, operand 2']
    %25 = vsyncpa [#allocation3], 0
    %s26 = scalar_lea.sflag [#allocation3], 1
    %27 = vsyncpa %s26, 0
    %28 = vsyncpa [#allocation6], 0
    %s29 = scalar_lea.sflag [#allocation6], 1
    %30 = vsyncpa %s29, 0
    %31 = vsyncpa [#allocation9], 0
    %s32 = scalar_lea.sflag [#allocation9], 1
    %33 = vsyncpa %s32, 0
    %34 = vsyncpa [#allocation12], 0
    %s35 = scalar_lea.sflag [#allocation12], 1
    %36 = vsyncpa %s35, 0
    %37 = vsyncpa [#allocation15], 0
    %38 = vsyncpa [#allocation18], 0
    %39 = vsyncpa [#allocation21], 0
    %40 = vsyncpa [#allocation4], 0
    %s41 = scalar_lea.sflag [#allocation4], 1
    %42 = vsyncpa %s41, 0
    %43 = vsyncpa [#allocation24], 0
    %s44 = scalar_lea.sflag [#allocation24], 1
    %45 = vsyncpa %s44, 0
    loop: start=0, step=1, limit=4
    $region2: #{tpu_custom_call.1} parent=1 // loop_pre_header
      _
    $region3: #{tpu_custom_call.1} parent=1 // loop_header
      %s47 = sphi 0, %s51
      %p48 = scmp.ge.s32.totalorder %s47, 4
      %s57 = sphi 0, %s59
      %s60 = sphi 0, %s57
      %s61 = sphi 0, %s60
      %s77 = sphi 0, %s61
      %s83 = sphi 0, %s85
      %s86 = sphi 0, %s83
      %s87 = sphi 0, %s86
      %s103 = sphi 0, %s87
      %s109 = sphi 0, %s111
      %s112 = sphi 0, %s109
      %s113 = sphi 0, %s112
      %s129 = sphi 0, %s113
      %s135 = sphi 0, %s137
      %s138 = sphi 0, %s135
      %s139 = sphi 0, %s138
      %s155 = sphi 0, %s139
      %s161 = sphi 0, %s163
      %s164 = sphi 0, %s161
      %s165 = sphi 0, %s164
      %s181 = sphi 0, %s165
      %s187 = sphi 0, %s189
      %s190 = sphi 0, %s187
      %s191 = sphi 0, %s190
      %s207 = sphi 0, %s191
      %s211 = sphi 0, %s211
      %s213 = sphi 0, %s211
      %s214 = sphi 0, %s213
      %s228 = sphi 0, %s214
      %s232 = sphi 0, %s232
      %s234 = sphi 0, %s232
      %s235 = sphi 0, %s234
      %s249 = sphi 0, %s235
      %s253 = sphi 0, %s253
      %s255 = sphi 0, %s253
      %s256 = sphi 0, %s255
      %s270 = sphi 0, %s256
      %s274 = sphi 0, %s274
      %s276 = sphi 0, %s274
      %s277 = sphi 0, %s276
      %s291 = sphi 0, %s277
      %s295 = sphi 0, %s295
      %s297 = sphi 0, %s295
      %s298 = sphi 0, %s297
      %s312 = sphi 0, %s298
      %s316 = sphi 0, %s316
      %s318 = sphi 0, %s316
      %s319 = sphi 0, %s318
      %s333 = sphi 0, %s319
      %s337 = sphi 0, %s337
      %s339 = sphi 0, %s337
      %s340 = sphi 0, %s339
      %s354 = sphi 0, %s340
      %s358 = sphi 0, %s358
      %s360 = sphi 0, %s358
      %s361 = sphi 0, %s360
      %s375 = sphi 0, %s361
      %s379 = sphi 0, %s379
      %s381 = sphi 0, %s379
      %s382 = sphi 0, %s381
      %s396 = sphi 0, %s382
      %s400 = sphi 0, %s400
      %s402 = sphi 0, %s400
      %s403 = sphi 0, %s402
      %s417 = sphi 0, %s403
      %s421 = sphi 0, %s421
      %s423 = sphi 0, %s421
      %s424 = sphi 0, %s423
      %s438 = sphi 0, %s424
      %s444 = sphi 0, %s446
      %s447 = sphi 0, %s444
      %s448 = sphi 0, %s447
      %s464 = sphi 0, %s448
      %s470 = sphi 0, %s472
      %s473 = sphi 0, %s470
      %s474 = sphi 0, %s473
      %s490 = sphi 0, %s474
      %s496 = sphi 0, %s498
      %s499 = sphi 0, %s496
      %s500 = sphi 0, %s499
      %s516 = sphi 0, %s500
    $region4: #{tpu_custom_call.1} parent=1 // loop_header_branch
      %50 = sbr.rel (%p48) target = $region8
    $region5: #{tpu_custom_call.1} parent=1 // loop_body
      %s52 = ssub.s32 %s47, 1
      %s53 = ssub.s32 %s47, 2
      %s54 = sadd.s32 %s47, 1
      %s55 = ssub.s32 %s47, %s54
      %p56 = scmp.eq.s32.totalorder %s55, 0
      %s58 = sadd.s32 %s57, 1
      %s59 = scalar_select %p56, %s57, %s58
      %p62 = pneg %p56
      %p63 = scmp.eq.s32.totalorder %s47, 1
      %p64 = por %p62, %p63
      %p65 = scmp.ne.s32.totalorder %s57, %s60
      %p66 = scmp.eq.s32.totalorder %s47, 0
      %p67 = por %p65, %p66
      %p68 = scmp.ne.s32.totalorder %s57, %s60
      %p69 = scmp.eq.s32.totalorder %s52, 1
      %p70 = por %p68, %p69
      %p71 = scmp.ne.s32.totalorder %s60, %s61
      %p72 = scmp.eq.s32.totalorder %s52, 0
      %p73 = por %p71, %p72
      %p74 = scmp.ne.s32.totalorder %s60, %s61
      %p75 = scmp.eq.s32.totalorder %s53, 1
      %p76 = por %p74, %p75
      %p78 = scmp.ne.s32.totalorder %s61, %s77
      %p79 = scmp.eq.s32.totalorder %s53, 0
      %p80 = por %p78, %p79
      %s81 = ssub.s32 %s47, %s54
      %p82 = scmp.eq.s32.totalorder %s81, 0
      %s84 = sadd.s32 %s83, 1
      %s85 = scalar_select %p82, %s83, %s84
      %p88 = pneg %p82
      %p89 = scmp.eq.s32.totalorder %s47, 1
      %p90 = por %p88, %p89
      %p91 = scmp.ne.s32.totalorder %s83, %s86
      %p92 = scmp.eq.s32.totalorder %s47, 0
      %p93 = por %p91, %p92
      %p94 = scmp.ne.s32.totalorder %s83, %s86
      %p95 = scmp.eq.s32.totalorder %s52, 1
      %p96 = por %p94, %p95
      %p97 = scmp.ne.s32.totalorder %s86, %s87
      %p98 = scmp.eq.s32.totalorder %s52, 0
      %p99 = por %p97, %p98
      %p100 = scmp.ne.s32.totalorder %s86, %s87
      %p101 = scmp.eq.s32.totalorder %s53, 1
      %p102 = por %p100, %p101
      %p104 = scmp.ne.s32.totalorder %s87, %s103
      %p105 = scmp.eq.s32.totalorder %s53, 0
      %p106 = por %p104, %p105
      %s107 = ssub.s32 %s47, %s54
      %p108 = scmp.eq.s32.totalorder %s107, 0
      %s110 = sadd.s32 %s109, 1
      %s111 = scalar_select %p108, %s109, %s110
      %p114 = pneg %p108
      %p115 = scmp.eq.s32.totalorder %s47, 1
      %p116 = por %p114, %p115
      %p117 = scmp.ne.s32.totalorder %s109, %s112
      %p118 = scmp.eq.s32.totalorder %s47, 0
      %p119 = por %p117, %p118
      %p120 = scmp.ne.s32.totalorder %s109, %s112
      %p121 = scmp.eq.s32.totalorder %s52, 1
      %p122 = por %p120, %p121
      %p123 = scmp.ne.s32.totalorder %s112, %s113
      %p124 = scmp.eq.s32.totalorder %s52, 0
      %p125 = por %p123, %p124
      %p126 = scmp.ne.s32.totalorder %s112, %s113
      %p127 = scmp.eq.s32.totalorder %s53, 1
      %p128 = por %p126, %p127
      %p130 = scmp.ne.s32.totalorder %s113, %s129
      %p131 = scmp.eq.s32.totalorder %s53, 0
      %p132 = por %p130, %p131
      %s133 = ssub.s32 %s47, %s54
      %p134 = scmp.eq.s32.totalorder %s133, 0
      %s136 = sadd.s32 %s135, 1
      %s137 = scalar_select %p134, %s135, %s136
      %p140 = pneg %p134
      %p141 = scmp.eq.s32.totalorder %s47, 1
      %p142 = por %p140, %p141
      %p143 = scmp.ne.s32.totalorder %s135, %s138
      %p144 = scmp.eq.s32.totalorder %s47, 0
      %p145 = por %p143, %p144
      %p146 = scmp.ne.s32.totalorder %s135, %s138
      %p147 = scmp.eq.s32.totalorder %s52, 1
      %p148 = por %p146, %p147
      %p149 = scmp.ne.s32.totalorder %s138, %s139
      %p150 = scmp.eq.s32.totalorder %s52, 0
      %p151 = por %p149, %p150
      %p152 = scmp.ne.s32.totalorder %s138, %s139
      %p153 = scmp.eq.s32.totalorder %s53, 1
      %p154 = por %p152, %p153
      %p156 = scmp.ne.s32.totalorder %s139, %s155
      %p157 = scmp.eq.s32.totalorder %s53, 0
      %p158 = por %p156, %p157
      %s159 = ssub.s32 %s47, %s54
      %p160 = scmp.eq.s32.totalorder %s159, 0
      %s162 = sadd.s32 %s161, 1
      %s163 = scalar_select %p160, %s161, %s162
      %p166 = pneg %p160
      %p167 = scmp.eq.s32.totalorder %s47, 1
      %p168 = por %p166, %p167
      %p169 = scmp.ne.s32.totalorder %s161, %s164
      %p170 = scmp.eq.s32.totalorder %s47, 0
      %p171 = por %p169, %p170
      %p172 = scmp.ne.s32.totalorder %s161, %s164
      %p173 = scmp.eq.s32.totalorder %s52, 1
      %p174 = por %p172, %p173
      %p175 = scmp.ne.s32.totalorder %s164, %s165
      %p176 = scmp.eq.s32.totalorder %s52, 0
      %p177 = por %p175, %p176
      %p178 = scmp.ne.s32.totalorder %s164, %s165
      %p179 = scmp.eq.s32.totalorder %s53, 1
      %p180 = por %p178, %p179
      %p182 = scmp.ne.s32.totalorder %s165, %s181
      %p183 = scmp.eq.s32.totalorder %s53, 0
      %p184 = por %p182, %p183
      %s185 = ssub.s32 %s47, %s54
      %p186 = scmp.eq.s32.totalorder %s185, 0
      %s188 = sadd.s32 %s187, 1
      %s189 = scalar_select %p186, %s187, %s188
      %p192 = pneg %p186
      %p193 = scmp.eq.s32.totalorder %s47, 1
      %p194 = por %p192, %p193
      %p195 = scmp.ne.s32.totalorder %s187, %s190
      %p196 = scmp.eq.s32.totalorder %s47, 0
      %p197 = por %p195, %p196
      %p198 = scmp.ne.s32.totalorder %s187, %s190
      %p199 = scmp.eq.s32.totalorder %s52, 1
      %p200 = por %p198, %p199
      %p201 = scmp.ne.s32.totalorder %s190, %s191
      %p202 = scmp.eq.s32.totalorder %s52, 0
      %p203 = por %p201, %p202
      %p204 = scmp.ne.s32.totalorder %s190, %s191
      %p205 = scmp.eq.s32.totalorder %s53, 1
      %p206 = por %p204, %p205
      %p208 = scmp.ne.s32.totalorder %s191, %s207
      %p209 = scmp.eq.s32.totalorder %s53, 0
      %p210 = por %p208, %p209
      %s212 = sadd.s32 %s211, 1
      %p215 = scmp.eq.s32.totalorder %s47, 1
      %p216 = scmp.ne.s32.totalorder %s211, %s213
      %p217 = scmp.eq.s32.totalorder %s47, 0
      %p218 = por %p216, %p217
      %p219 = scmp.ne.s32.totalorder %s211, %s213
      %p220 = scmp.eq.s32.totalorder %s52, 1
      %p221 = por %p219, %p220
      %p222 = scmp.ne.s32.totalorder %s213, %s214
      %p223 = scmp.eq.s32.totalorder %s52, 0
      %p224 = por %p222, %p223
      %p225 = scmp.ne.s32.totalorder %s213, %s214
      %p226 = scmp.eq.s32.totalorder %s53, 1
      %p227 = por %p225, %p226
      %p229 = scmp.ne.s32.totalorder %s214, %s228
      %p230 = scmp.eq.s32.totalorder %s53, 0
      %p231 = por %p229, %p230
      %s233 = sadd.s32 %s232, 1
      %p236 = scmp.eq.s32.totalorder %s47, 1
      %p237 = scmp.ne.s32.totalorder %s232, %s234
      %p238 = scmp.eq.s32.totalorder %s47, 0
      %p239 = por %p237, %p238
      %p240 = scmp.ne.s32.totalorder %s232, %s234
      %p241 = scmp.eq.s32.totalorder %s52, 1
      %p242 = por %p240, %p241
      %p243 = scmp.ne.s32.totalorder %s234, %s235
      %p244 = scmp.eq.s32.totalorder %s52, 0
      %p245 = por %p243, %p244
      %p246 = scmp.ne.s32.totalorder %s234, %s235
      %p247 = scmp.eq.s32.totalorder %s53, 1
      %p248 = por %p246, %p247
      %p250 = scmp.ne.s32.totalorder %s235, %s249
      %p251 = scmp.eq.s32.totalorder %s53, 0
      %p252 = por %p250, %p251
      %s254 = sadd.s32 %s253, 1
      %p257 = scmp.eq.s32.totalorder %s47, 1
      %p258 = scmp.ne.s32.totalorder %s253, %s255
      %p259 = scmp.eq.s32.totalorder %s47, 0
      %p260 = por %p258, %p259
      %p261 = scmp.ne.s32.totalorder %s253, %s255
      %p262 = scmp.eq.s32.totalorder %s52, 1
      %p263 = por %p261, %p262
      %p264 = scmp.ne.s32.totalorder %s255, %s256
      %p265 = scmp.eq.s32.totalorder %s52, 0
      %p266 = por %p264, %p265
      %p267 = scmp.ne.s32.totalorder %s255, %s256
      %p268 = scmp.eq.s32.totalorder %s53, 1
      %p269 = por %p267, %p268
      %p271 = scmp.ne.s32.totalorder %s256, %s270
      %p272 = scmp.eq.s32.totalorder %s53, 0
      %p273 = por %p271, %p272
      %s275 = sadd.s32 %s274, 1
      %p278 = scmp.eq.s32.totalorder %s47, 1
      %p279 = scmp.ne.s32.totalorder %s274, %s276
      %p280 = scmp.eq.s32.totalorder %s47, 0
      %p281 = por %p279, %p280
      %p282 = scmp.ne.s32.totalorder %s274, %s276
      %p283 = scmp.eq.s32.totalorder %s52, 1
      %p284 = por %p282, %p283
      %p285 = scmp.ne.s32.totalorder %s276, %s277
      %p286 = scmp.eq.s32.totalorder %s52, 0
      %p287 = por %p285, %p286
      %p288 = scmp.ne.s32.totalorder %s276, %s277
      %p289 = scmp.eq.s32.totalorder %s53, 1
      %p290 = por %p288, %p289
      %p292 = scmp.ne.s32.totalorder %s277, %s291
      %p293 = scmp.eq.s32.totalorder %s53, 0
      %p294 = por %p292, %p293
      %s296 = sadd.s32 %s295, 1
      %p299 = scmp.eq.s32.totalorder %s47, 1
      %p300 = scmp.ne.s32.totalorder %s295, %s297
      %p301 = scmp.eq.s32.totalorder %s47, 0
      %p302 = por %p300, %p301
      %p303 = scmp.ne.s32.totalorder %s295, %s297
      %p304 = scmp.eq.s32.totalorder %s52, 1
      %p305 = por %p303, %p304
      %p306 = scmp.ne.s32.totalorder %s297, %s298
      %p307 = scmp.eq.s32.totalorder %s52, 0
      %p308 = por %p306, %p307
      %p309 = scmp.ne.s32.totalorder %s297, %s298
      %p310 = scmp.eq.s32.totalorder %s53, 1
      %p311 = por %p309, %p310
      %p313 = scmp.ne.s32.totalorder %s298, %s312
      %p314 = scmp.eq.s32.totalorder %s53, 0
      %p315 = por %p313, %p314
      %s317 = sadd.s32 %s316, 1
      %p320 = scmp.eq.s32.totalorder %s47, 1
      %p321 = scmp.ne.s32.totalorder %s316, %s318
      %p322 = scmp.eq.s32.totalorder %s47, 0
      %p323 = por %p321, %p322
      %p324 = scmp.ne.s32.totalorder %s316, %s318
      %p325 = scmp.eq.s32.totalorder %s52, 1
      %p326 = por %p324, %p325
      %p327 = scmp.ne.s32.totalorder %s318, %s319
      %p328 = scmp.eq.s32.totalorder %s52, 0
      %p329 = por %p327, %p328
      %p330 = scmp.ne.s32.totalorder %s318, %s319
      %p331 = scmp.eq.s32.totalorder %s53, 1
      %p332 = por %p330, %p331
      %p334 = scmp.ne.s32.totalorder %s319, %s333
      %p335 = scmp.eq.s32.totalorder %s53, 0
      %p336 = por %p334, %p335
      %s338 = sadd.s32 %s337, 1
      %p341 = scmp.eq.s32.totalorder %s47, 1
      %p342 = scmp.ne.s32.totalorder %s337, %s339
      %p343 = scmp.eq.s32.totalorder %s47, 0
      %p344 = por %p342, %p343
      %p345 = scmp.ne.s32.totalorder %s337, %s339
      %p346 = scmp.eq.s32.totalorder %s52, 1
      %p347 = por %p345, %p346
      %p348 = scmp.ne.s32.totalorder %s339, %s340
      %p349 = scmp.eq.s32.totalorder %s52, 0
      %p350 = por %p348, %p349
      %p351 = scmp.ne.s32.totalorder %s339, %s340
      %p352 = scmp.eq.s32.totalorder %s53, 1
      %p353 = por %p351, %p352
      %p355 = scmp.ne.s32.totalorder %s340, %s354
      %p356 = scmp.eq.s32.totalorder %s53, 0
      %p357 = por %p355, %p356
      %s359 = sadd.s32 %s358, 1
      %p362 = scmp.eq.s32.totalorder %s47, 1
      %p363 = scmp.ne.s32.totalorder %s358, %s360
      %p364 = scmp.eq.s32.totalorder %s47, 0
      %p365 = por %p363, %p364
      %p366 = scmp.ne.s32.totalorder %s358, %s360
      %p367 = scmp.eq.s32.totalorder %s52, 1
      %p368 = por %p366, %p367
      %p369 = scmp.ne.s32.totalorder %s360, %s361
      %p370 = scmp.eq.s32.totalorder %s52, 0
      %p371 = por %p369, %p370
      %p372 = scmp.ne.s32.totalorder %s360, %s361
      %p373 = scmp.eq.s32.totalorder %s53, 1
      %p374 = por %p372, %p373
      %p376 = scmp.ne.s32.totalorder %s361, %s375
      %p377 = scmp.eq.s32.totalorder %s53, 0
      %p378 = por %p376, %p377
      %s380 = sadd.s32 %s379, 1
      %p383 = scmp.eq.s32.totalorder %s47, 1
      %p384 = scmp.ne.s32.totalorder %s379, %s381
      %p385 = scmp.eq.s32.totalorder %s47, 0
      %p386 = por %p384, %p385
      %p387 = scmp.ne.s32.totalorder %s379, %s381
      %p388 = scmp.eq.s32.totalorder %s52, 1
      %p389 = por %p387, %p388
      %p390 = scmp.ne.s32.totalorder %s381, %s382
      %p391 = scmp.eq.s32.totalorder %s52, 0
      %p392 = por %p390, %p391
      %p393 = scmp.ne.s32.totalorder %s381, %s382
      %p394 = scmp.eq.s32.totalorder %s53, 1
      %p395 = por %p393, %p394
      %p397 = scmp.ne.s32.totalorder %s382, %s396
      %p398 = scmp.eq.s32.totalorder %s53, 0
      %p399 = por %p397, %p398
      %s401 = sadd.s32 %s400, 1
      %p404 = scmp.eq.s32.totalorder %s47, 1
      %p405 = scmp.ne.s32.totalorder %s400, %s402
      %p406 = scmp.eq.s32.totalorder %s47, 0
      %p407 = por %p405, %p406
      %p408 = scmp.ne.s32.totalorder %s400, %s402
      %p409 = scmp.eq.s32.totalorder %s52, 1
      %p410 = por %p408, %p409
      %p411 = scmp.ne.s32.totalorder %s402, %s403
      %p412 = scmp.eq.s32.totalorder %s52, 0
      %p413 = por %p411, %p412
      %p414 = scmp.ne.s32.totalorder %s402, %s403
      %p415 = scmp.eq.s32.totalorder %s53, 1
      %p416 = por %p414, %p415
      %p418 = scmp.ne.s32.totalorder %s403, %s417
      %p419 = scmp.eq.s32.totalorder %s53, 0
      %p420 = por %p418, %p419
      %s422 = sadd.s32 %s421, 1
      %p425 = scmp.eq.s32.totalorder %s47, 1
      %p426 = scmp.ne.s32.totalorder %s421, %s423
      %p427 = scmp.eq.s32.totalorder %s47, 0
      %p428 = por %p426, %p427
      %p429 = scmp.ne.s32.totalorder %s421, %s423
      %p430 = scmp.eq.s32.totalorder %s52, 1
      %p431 = por %p429, %p430
      %p432 = scmp.ne.s32.totalorder %s423, %s424
      %p433 = scmp.eq.s32.totalorder %s52, 0
      %p434 = por %p432, %p433
      %p435 = scmp.ne.s32.totalorder %s423, %s424
      %p436 = scmp.eq.s32.totalorder %s53, 1
      %p437 = por %p435, %p436
      %p439 = scmp.ne.s32.totalorder %s424, %s438
      %p440 = scmp.eq.s32.totalorder %s53, 0
      %p441 = por %p439, %p440
      %s442 = ssub.s32 %s47, %s54
      %p443 = scmp.eq.s32.totalorder %s442, 0
      %s445 = sadd.s32 %s444, 1
      %s446 = scalar_select %p443, %s444, %s445
      %p449 = pneg %p443
      %p450 = scmp.eq.s32.totalorder %s47, 1
      %p451 = por %p449, %p450
      %p452 = scmp.ne.s32.totalorder %s444, %s447
      %p453 = scmp.eq.s32.totalorder %s47, 0
      %p454 = por %p452, %p453
      %p455 = scmp.ne.s32.totalorder %s444, %s447
      %p456 = scmp.eq.s32.totalorder %s52, 1
      %p457 = por %p455, %p456
      %p458 = scmp.ne.s32.totalorder %s447, %s448
      %p459 = scmp.eq.s32.totalorder %s52, 0
      %p460 = por %p458, %p459
      %p461 = scmp.ne.s32.totalorder %s447, %s448
      %p462 = scmp.eq.s32.totalorder %s53, 1
      %p463 = por %p461, %p462
      %p465 = scmp.ne.s32.totalorder %s448, %s464
      %p466 = scmp.eq.s32.totalorder %s53, 0
      %p467 = por %p465, %p466
      %s468 = ssub.s32 %s47, %s54
      %p469 = scmp.eq.s32.totalorder %s468, 0
      %s471 = sadd.s32 %s470, 1
      %s472 = scalar_select %p469, %s470, %s471
      %p475 = pneg %p469
      %p476 = scmp.eq.s32.totalorder %s47, 1
      %p477 = por %p475, %p476
      %p478 = scmp.ne.s32.totalorder %s470, %s473
      %p479 = scmp.eq.s32.totalorder %s47, 0
      %p480 = por %p478, %p479
      %p481 = scmp.ne.s32.totalorder %s470, %s473
      %p482 = scmp.eq.s32.totalorder %s52, 1
      %p483 = por %p481, %p482
      %p484 = scmp.ne.s32.totalorder %s473, %s474
      %p485 = scmp.eq.s32.totalorder %s52, 0
      %p486 = por %p484, %p485
      %p487 = scmp.ne.s32.totalorder %s473, %s474
      %p488 = scmp.eq.s32.totalorder %s53, 1
      %p489 = por %p487, %p488
      %p491 = scmp.ne.s32.totalorder %s474, %s490
      %p492 = scmp.eq.s32.totalorder %s53, 0
      %p493 = por %p491, %p492
      %s494 = ssub.s32 %s47, %s54
      %p495 = scmp.eq.s32.totalorder %s494, 0
      %s497 = sadd.s32 %s496, 1
      %s498 = scalar_select %p495, %s496, %s497
      %p501 = pneg %p495
      %p502 = scmp.eq.s32.totalorder %s47, 1
      %p503 = por %p501, %p502
      %p504 = scmp.ne.s32.totalorder %s496, %s499
      %p505 = scmp.eq.s32.totalorder %s47, 0
      %p506 = por %p504, %p505
      %p507 = scmp.ne.s32.totalorder %s496, %s499
      %p508 = scmp.eq.s32.totalorder %s52, 1
      %p509 = por %p507, %p508
      %p510 = scmp.ne.s32.totalorder %s499, %s500
      %p511 = scmp.eq.s32.totalorder %s52, 0
      %p512 = por %p510, %p511
      %p513 = scmp.ne.s32.totalorder %s499, %s500
      %p514 = scmp.eq.s32.totalorder %s53, 1
      %p515 = por %p513, %p514
      %p517 = scmp.ne.s32.totalorder %s500, %s516
      %p518 = scmp.eq.s32.totalorder %s53, 0
      %p519 = por %p517, %p518
      %p520 = scmp.le.s32.totalorder 1, %s47
      %p521 = scmp.lt.s32.totalorder %s47, 3
      %p522 = pnand %p520, %p521
      %p523 = pneg %p522
      // Predicated region
      $region9: #{tpu_custom_call.1} parent=5 // pred_check
        _
      $region10: #{tpu_custom_call.1} parent=5 // pred_check_branch
        %525 = sbr.rel (%p522) target = $region12
      $region11: #{tpu_custom_call.1} parent=5 // pred_region
        %s526 = ssub.s32 %s47, 1
        // Predicated region
        $region13: #{tpu_custom_call.1} parent=11 // pred_check
          %p527 = pneg %p224
        $region14: #{tpu_custom_call.1} parent=11 // pred_check_branch
          %529 = sbr.rel (%p527) target = $region16
        $region15: #{tpu_custom_call.1} parent=11 // pred_region
          %531 = vsyncadd [#allocation12], 0
          %s532 = sshll.u32 %s6, 4
          %s533 = int_to_ptr.hbm [resolvable:$true] %s532
          %s534 = sshll.u32 [#allocation13], 4
          %s535 = int_to_ptr.vmem [resolvable:$true] %s534
          %540 = dma.hbm_to_vmem [thread:$0]  %s533, 4096, %s535, [#allocation12], 512, 512, 32
        $region16: #{tpu_custom_call.1} parent=11 // pred_fallthru
          _
        // Predicated region
        $region17: #{tpu_custom_call.1} parent=11 // pred_check
          %p541 = pneg %p245
        $region18: #{tpu_custom_call.1} parent=11 // pred_check_branch
          %543 = sbr.rel (%p541) target = $region20
        $region19: #{tpu_custom_call.1} parent=11 // pred_region
          %545 = vsyncadd [#allocation15], 0
          %s546 = sshll.u32 %s7, 4
          %s547 = int_to_ptr.hbm [resolvable:$true] %s546
          %s548 = sshll.u32 [#allocation14], 4
          %s549 = int_to_ptr.vmem [resolvable:$true] %s548
          %554 = dma.hbm_to_vmem [thread:$0]  %s547, 8192, %s549, [#allocation15], 512, 512, 32
        $region20: #{tpu_custom_call.1} parent=11 // pred_fallthru
          _
        // Predicated region
        $region21: #{tpu_custom_call.1} parent=11 // pred_check
          %p555 = pneg %p266
        $region22: #{tpu_custom_call.1} parent=11 // pred_check_branch
          %557 = sbr.rel (%p555) target = $region24
        $region23: #{tpu_custom_call.1} parent=11 // pred_region
          %559 = vsyncadd [#allocation15], 0
          %s560 = sshll.u32 %s8, 4
          %s561 = int_to_ptr.hbm [resolvable:$true] %s560
          %s562 = sshll.u32 [#allocation16], 4
          %s563 = int_to_ptr.vmem [resolvable:$true] %s562
          %568 = dma.hbm_to_vmem [thread:$0]  %s561, 8192, %s563, [#allocation15], 512, 512, 32
        $region24: #{tpu_custom_call.1} parent=11 // pred_fallthru
          _
        // Predicated region
        $region25: #{tpu_custom_call.1} parent=11 // pred_check
          %p569 = pneg %p287
        $region26: #{tpu_custom_call.1} parent=11 // pred_check_branch
          %571 = sbr.rel (%p569) target = $region28
        $region27: #{tpu_custom_call.1} parent=11 // pred_region
          _
        $region28: #{tpu_custom_call.1} parent=11 // pred_fallthru
          _
        // Predicated region
        $region29: #{tpu_custom_call.1} parent=11 // pred_check
          %p572 = pneg %p308
        $region30: #{tpu_custom_call.1} parent=11 // pred_check_branch
          %574 = sbr.rel (%p572) target = $region32
        $region31: #{tpu_custom_call.1} parent=11 // pred_region
          _
        $region32: #{tpu_custom_call.1} parent=11 // pred_fallthru
          _
        // Predicated region
        $region33: #{tpu_custom_call.1} parent=11 // pred_check
          %p575 = pneg %p329
        $region34: #{tpu_custom_call.1} parent=11 // pred_check_branch
          %577 = sbr.rel (%p575) target = $region36
        $region35: #{tpu_custom_call.1} parent=11 // pred_region
          _
        $region36: #{tpu_custom_call.1} parent=11 // pred_fallthru
          _
        // Predicated region
        $region37: #{tpu_custom_call.1} parent=11 // pred_check
          %p578 = pneg %p350
        $region38: #{tpu_custom_call.1} parent=11 // pred_check_branch
          %580 = sbr.rel (%p578) target = $region40
        $region39: #{tpu_custom_call.1} parent=11 // pred_region
          %582 = vsyncadd [#allocation18], 0
          %s583 = sshll.u32 %s12, 4
          %s584 = int_to_ptr.hbm [resolvable:$true] %s583
          %s585 = sshll.u32 [#allocation17], 4
          %s586 = int_to_ptr.vmem [resolvable:$true] %s585
          %591 = dma.hbm_to_vmem [thread:$0]  %s584, 2048, %s586, [#allocation18], 128, 128, 8
        $region40: #{tpu_custom_call.1} parent=11 // pred_fallthru
          _
        // Predicated region
        $region41: #{tpu_custom_call.1} parent=11 // pred_check
          %p592 = pneg %p371
        $region42: #{tpu_custom_call.1} parent=11 // pred_check_branch
          %594 = sbr.rel (%p592) target = $region44
        $region43: #{tpu_custom_call.1} parent=11 // pred_region
          _
        $region44: #{tpu_custom_call.1} parent=11 // pred_fallthru
          _
        // Predicated region
        $region45: #{tpu_custom_call.1} parent=11 // pred_check
          %p595 = pneg %p392
        $region46: #{tpu_custom_call.1} parent=11 // pred_check_branch
          %597 = sbr.rel (%p595) target = $region48
        $region47: #{tpu_custom_call.1} parent=11 // pred_region
          %599 = vsyncadd [#allocation18], 0
          %s600 = sshll.u32 %s14, 4
          %s601 = int_to_ptr.hbm [resolvable:$true] %s600
          %s602 = sshll.u32 [#allocation19], 4
          %s603 = int_to_ptr.vmem [resolvable:$true] %s602
          %608 = dma.hbm_to_vmem [thread:$0]  %s601, 4096, %s603, [#allocation18], 256, 256, 16
        $region48: #{tpu_custom_call.1} parent=11 // pred_fallthru
          _
        // Predicated region
        $region49: #{tpu_custom_call.1} parent=11 // pred_check
          %p609 = pneg %p413
        $region50: #{tpu_custom_call.1} parent=11 // pred_check_branch
          %611 = sbr.rel (%p609) target = $region52
        $region51: #{tpu_custom_call.1} parent=11 // pred_region
          %613 = vsyncadd [#allocation21], 0
          %s614 = sshll.u32 %s15, 4
          %s615 = int_to_ptr.hbm [resolvable:$true] %s614
          %s616 = sshll.u32 [#allocation20], 4
          %s617 = int_to_ptr.vmem [resolvable:$true] %s616
          %622 = dma.hbm_to_vmem [thread:$0]  %s615, 4096, %s617, [#allocation21], 256, 256, 16
        $region52: #{tpu_custom_call.1} parent=11 // pred_fallthru
          _
        // Predicated region
        $region53: #{tpu_custom_call.1} parent=11 // pred_check
          %p623 = pneg %p434
        $region54: #{tpu_custom_call.1} parent=11 // pred_check_branch
          %625 = sbr.rel (%p623) target = $region56
        $region55: #{tpu_custom_call.1} parent=11 // pred_region
          _
        $region56: #{tpu_custom_call.1} parent=11 // pred_fallthru
          _
      $region12: #{tpu_custom_call.1} parent=5 // pred_fallthru
        _
      %p626 = scmp.lt.s32.totalorder %s47, 2
      // Predicated region
      $region57: #{tpu_custom_call.1} parent=5 // pred_check
        %p627 = pneg %p626
      $region58: #{tpu_custom_call.1} parent=5 // pred_check_branch
        %629 = sbr.rel (%p627) target = $region60
      $region59: #{tpu_custom_call.1} parent=5 // pred_region
        // Predicated region
        $region61: #{tpu_custom_call.1} parent=59 // pred_check
          %p630 = pneg %p67
        $region62: #{tpu_custom_call.1} parent=59 // pred_check_branch
          %632 = sbr.rel (%p630) target = $region64
        $region63: #{tpu_custom_call.1} parent=59 // pred_region
          %s633 = sand.u32 %s57, 1
          %s634 = scalar_lea.sflag [#allocation3], %s633
          %s635 = sand.u32 %s57, 1
          %s636 = smul.addr %s635, 8
          %s637 = scalar_lea.vmem [#allocation2], %s636
          %639 = vsyncadd %s634, 0
          %s640 = smul.addr %s47, 8
          %s641 = scalar_lea.hbm %s0, %s640
          %s643 = sshll.u32 %s641, 4
          %s644 = int_to_ptr.hbm [resolvable:$true] %s643
          %s645 = sshll.u32 %s637, 4
          %s646 = int_to_ptr.vmem [resolvable:$true] %s645
          %648 = dma.hbm_to_vmem [thread:$0]  %s644, 128, %s646, %s634
        $region64: #{tpu_custom_call.1} parent=59 // pred_fallthru
          _
        // Predicated region
        $region65: #{tpu_custom_call.1} parent=59 // pred_check
          %p649 = pneg %p93
        $region66: #{tpu_custom_call.1} parent=59 // pred_check_branch
          %651 = sbr.rel (%p649) target = $region68
        $region67: #{tpu_custom_call.1} parent=59 // pred_region
          %s652 = sand.u32 %s47, 1
          %s653 = scalar_lea.sflag [#allocation6], %s652
          %s654 = sand.u32 %s83, 1
          %s655 = smul.addr %s654, 8
          %s656 = scalar_lea.vmem [#allocation5], %s655
          %658 = vsyncadd %s653, 0
          %s659 = smul.addr %s47, 8
          %s660 = scalar_lea.hbm %s1, %s659
          %s662 = sshll.u32 %s660, 4
          %s663 = int_to_ptr.hbm [resolvable:$true] %s662
          %s664 = sshll.u32 %s656, 4
          %s665 = int_to_ptr.vmem [resolvable:$true] %s664
          %667 = dma.hbm_to_vmem [thread:$0]  %s663, 128, %s665, %s653
        $region68: #{tpu_custom_call.1} parent=59 // pred_fallthru
          _
        // Predicated region
        $region69: #{tpu_custom_call.1} parent=59 // pred_check
          %p668 = pneg %p119
        $region70: #{tpu_custom_call.1} parent=59 // pred_check_branch
          %670 = sbr.rel (%p668) target = $region72
        $region71: #{tpu_custom_call.1} parent=59 // pred_region
          %s671 = sand.u32 %s47, 1
          %s672 = scalar_lea.sflag [#allocation6], %s671
          %s673 = sand.u32 %s109, 1
          %s674 = smul.addr %s673, 8
          %s675 = scalar_lea.vmem [#allocation7], %s674
          %677 = vsyncadd %s672, 0
          %s678 = smul.addr %s47, 8
          %s679 = scalar_lea.hbm %s2, %s678
          %s681 = sshll.u32 %s679, 4
          %s682 = int_to_ptr.hbm [resolvable:$true] %s681
          %s683 = sshll.u32 %s675, 4
          %s684 = int_to_ptr.vmem [resolvable:$true] %s683
          %686 = dma.hbm_to_vmem [thread:$0]  %s682, 128, %s684, %s672
        $region72: #{tpu_custom_call.1} parent=59 // pred_fallthru
          _
        // Predicated region
        $region73: #{tpu_custom_call.1} parent=59 // pred_check
          %p687 = pneg %p145
        $region74: #{tpu_custom_call.1} parent=59 // pred_check_branch
          %689 = sbr.rel (%p687) target = $region76
        $region75: #{tpu_custom_call.1} parent=59 // pred_region
          %s690 = sand.u32 %s47, 1
          %s691 = scalar_lea.sflag [#allocation9], %s690
          %s692 = sand.u32 %s135, 1
          %s693 = smul.addr %s692, 8
          %s694 = scalar_lea.vmem [#allocation8], %s693
          %696 = vsyncadd %s691, 0
          %s697 = smul.addr %s47, 8
          %s698 = scalar_lea.hbm %s3, %s697
          %s700 = sshll.u32 %s698, 4
          %s701 = int_to_ptr.hbm [resolvable:$true] %s700
          %s702 = sshll.u32 %s694, 4
          %s703 = int_to_ptr.vmem [resolvable:$true] %s702
          %705 = dma.hbm_to_vmem [thread:$0]  %s701, 128, %s703, %s691
        $region76: #{tpu_custom_call.1} parent=59 // pred_fallthru
          _
        // Predicated region
        $region77: #{tpu_custom_call.1} parent=59 // pred_check
          %p706 = pneg %p171
        $region78: #{tpu_custom_call.1} parent=59 // pred_check_branch
          %708 = sbr.rel (%p706) target = $region80
        $region79: #{tpu_custom_call.1} parent=59 // pred_region
          %s709 = sand.u32 %s47, 1
          %s710 = scalar_lea.sflag [#allocation9], %s709
          %s711 = sand.u32 %s161, 1
          %s712 = smul.addr %s711, 8
          %s713 = scalar_lea.vmem [#allocation10], %s712
          %715 = vsyncadd %s710, 0
          %s716 = smul.addr %s47, 8
          %s717 = scalar_lea.hbm %s4, %s716
          %s719 = sshll.u32 %s717, 4
          %s720 = int_to_ptr.hbm [resolvable:$true] %s719
          %s721 = sshll.u32 %s713, 4
          %s722 = int_to_ptr.vmem [resolvable:$true] %s721
          %724 = dma.hbm_to_vmem [thread:$0]  %s720, 128, %s722, %s710
        $region80: #{tpu_custom_call.1} parent=59 // pred_fallthru
          _
        // Predicated region
        $region81: #{tpu_custom_call.1} parent=59 // pred_check
          %p725 = pneg %p197
        $region82: #{tpu_custom_call.1} parent=59 // pred_check_branch
          %727 = sbr.rel (%p725) target = $region84
        $region83: #{tpu_custom_call.1} parent=59 // pred_region
          %s728 = sand.u32 %s47, 1
          %s729 = scalar_lea.sflag [#allocation12], %s728
          %s730 = sand.u32 %s187, 1
          %s731 = smul.addr %s730, 256
          %s732 = scalar_lea.vmem [#allocation11], %s731
          %s733 = smul.u32 8, %s47
          %735 = vsyncadd %s729, 0
          %s736 = smul.addr %s733, 4
          %s737 = smul.addr %s736, 8
          %s738 = scalar_lea.hbm %s5, %s737
          %s739 = sshll.u32 %s738, 4
          %s740 = int_to_ptr.hbm [resolvable:$true] %s739
          %s741 = sshll.u32 %s732, 4
          %s742 = int_to_ptr.vmem [resolvable:$true] %s741
          %747 = dma.hbm_to_vmem [thread:$0]  %s740, 4096, %s742, %s729, 256, 256, 16
        $region84: #{tpu_custom_call.1} parent=59 // pred_fallthru
          _
      $region60: #{tpu_custom_call.1} parent=5 // pred_fallthru
        _
      %p748 = scmp.le.s32.totalorder 1, %s47
      %p749 = scmp.lt.s32.totalorder %s47, 3
      %p750 = pnand %p748, %p749
      %p751 = pneg %p750
      // Predicated region
      $region85: #{tpu_custom_call.1} parent=5 // pred_check
        _
      $region86: #{tpu_custom_call.1} parent=5 // pred_check_branch
        %753 = sbr.rel (%p750) target = $region88
      $region87: #{tpu_custom_call.1} parent=5 // pred_region
        %s754 = ssub.s32 %s47, 1
        %s755 = sand.u32 %s60, 1
        %s756 = scalar_lea.sflag [#allocation3], %s755
        %s757 = sand.u32 %s60, 1
        %s758 = smul.addr %s757, 8
        %s759 = scalar_lea.vmem [#allocation2], %s758
        // Predicated region
        $region89: #{tpu_custom_call.1} parent=87 // pred_check
          %p760 = pneg %p73
        $region90: #{tpu_custom_call.1} parent=87 // pred_check_branch
          %762 = sbr.rel (%p760) target = $region92
        $region91: #{tpu_custom_call.1} parent=87 // pred_region
          %764 = dma.done %s756, 128
        $region92: #{tpu_custom_call.1} parent=87 // pred_fallthru
          _
        %s765 = sand.u32 %s52, 1
        %s766 = scalar_lea.sflag [#allocation6], %s765
        %s767 = sand.u32 %s86, 1
        %s768 = smul.addr %s767, 8
        %s769 = scalar_lea.vmem [#allocation5], %s768
        // Predicated region
        $region93: #{tpu_custom_call.1} parent=87 // pred_check
          %p770 = pneg %p99
        $region94: #{tpu_custom_call.1} parent=87 // pred_check_branch
          %772 = sbr.rel (%p770) target = $region96
        $region95: #{tpu_custom_call.1} parent=87 // pred_region
          %774 = dma.done %s766, 128
        $region96: #{tpu_custom_call.1} parent=87 // pred_fallthru
          _
        %s775 = sand.u32 %s52, 1
        %s776 = scalar_lea.sflag [#allocation6], %s775
        %s777 = sand.u32 %s112, 1
        %s778 = smul.addr %s777, 8
        %s779 = scalar_lea.vmem [#allocation7], %s778
        // Predicated region
        $region97: #{tpu_custom_call.1} parent=87 // pred_check
          %p780 = pneg %p125
        $region98: #{tpu_custom_call.1} parent=87 // pred_check_branch
          %782 = sbr.rel (%p780) target = $region100
        $region99: #{tpu_custom_call.1} parent=87 // pred_region
          %784 = dma.done %s776, 128
        $region100: #{tpu_custom_call.1} parent=87 // pred_fallthru
          _
        %s785 = sand.u32 %s52, 1
        %s786 = scalar_lea.sflag [#allocation9], %s785
        %s787 = sand.u32 %s138, 1
        %s788 = smul.addr %s787, 8
        %s789 = scalar_lea.vmem [#allocation8], %s788
        // Predicated region
        $region101: #{tpu_custom_call.1} parent=87 // pred_check
          %p790 = pneg %p151
        $region102: #{tpu_custom_call.1} parent=87 // pred_check_branch
          %792 = sbr.rel (%p790) target = $region104
        $region103: #{tpu_custom_call.1} parent=87 // pred_region
          %794 = dma.done %s786, 128
        $region104: #{tpu_custom_call.1} parent=87 // pred_fallthru
          _
        %s795 = sand.u32 %s52, 1
        %s796 = scalar_lea.sflag [#allocation9], %s795
        %s797 = sand.u32 %s164, 1
        %s798 = smul.addr %s797, 8
        %s799 = scalar_lea.vmem [#allocation10], %s798
        // Predicated region
        $region105: #{tpu_custom_call.1} parent=87 // pred_check
          %p800 = pneg %p177
        $region106: #{tpu_custom_call.1} parent=87 // pred_check_branch
          %802 = sbr.rel (%p800) target = $region108
        $region107: #{tpu_custom_call.1} parent=87 // pred_region
          %804 = dma.done %s796, 128
        $region108: #{tpu_custom_call.1} parent=87 // pred_fallthru
          _
        %s805 = sand.u32 %s52, 1
        %s806 = scalar_lea.sflag [#allocation12], %s805
        %s807 = sand.u32 %s190, 1
        %s808 = smul.addr %s807, 256
        %s809 = scalar_lea.vmem [#allocation11], %s808
        // Predicated region
        $region109: #{tpu_custom_call.1} parent=87 // pred_check
          %p810 = pneg %p203
        $region110: #{tpu_custom_call.1} parent=87 // pred_check_branch
          %812 = sbr.rel (%p810) target = $region112
        $region111: #{tpu_custom_call.1} parent=87 // pred_region
          %814 = dma.done %s806, 4096
        $region112: #{tpu_custom_call.1} parent=87 // pred_fallthru
          _
        // Predicated region
        $region113: #{tpu_custom_call.1} parent=87 // pred_check
          %p815 = pneg %p224
        $region114: #{tpu_custom_call.1} parent=87 // pred_check_branch
          %817 = sbr.rel (%p815) target = $region116
        $region115: #{tpu_custom_call.1} parent=87 // pred_region
          %819 = dma.done [#allocation12], 4096
        $region116: #{tpu_custom_call.1} parent=87 // pred_fallthru
          _
        // Predicated region
        $region117: #{tpu_custom_call.1} parent=87 // pred_check
          %p820 = pneg %p245
        $region118: #{tpu_custom_call.1} parent=87 // pred_check_branch
          %822 = sbr.rel (%p820) target = $region120
        $region119: #{tpu_custom_call.1} parent=87 // pred_region
          %824 = dma.done [#allocation15], 8192
        $region120: #{tpu_custom_call.1} parent=87 // pred_fallthru
          _
        // Predicated region
        $region121: #{tpu_custom_call.1} parent=87 // pred_check
          %p825 = pneg %p266
        $region122: #{tpu_custom_call.1} parent=87 // pred_check_branch
          %827 = sbr.rel (%p825) target = $region124
        $region123: #{tpu_custom_call.1} parent=87 // pred_region
          %829 = dma.done [#allocation15], 8192
        $region124: #{tpu_custom_call.1} parent=87 // pred_fallthru
          _
        // Predicated region
        $region125: #{tpu_custom_call.1} parent=87 // pred_check
          %p830 = pneg %p350
        $region126: #{tpu_custom_call.1} parent=87 // pred_check_branch
          %832 = sbr.rel (%p830) target = $region128
        $region127: #{tpu_custom_call.1} parent=87 // pred_region
          %834 = dma.done [#allocation18], 2048
        $region128: #{tpu_custom_call.1} parent=87 // pred_fallthru
          _
        // Predicated region
        $region129: #{tpu_custom_call.1} parent=87 // pred_check
          %p835 = pneg %p392
        $region130: #{tpu_custom_call.1} parent=87 // pred_check_branch
          %837 = sbr.rel (%p835) target = $region132
        $region131: #{tpu_custom_call.1} parent=87 // pred_region
          %839 = dma.done [#allocation18], 4096
        $region132: #{tpu_custom_call.1} parent=87 // pred_fallthru
          _
        // Predicated region
        $region133: #{tpu_custom_call.1} parent=87 // pred_check
          %p840 = pneg %p413
        $region134: #{tpu_custom_call.1} parent=87 // pred_check_branch
          %842 = sbr.rel (%p840) target = $region136
        $region135: #{tpu_custom_call.1} parent=87 // pred_region
          %844 = dma.done [#allocation21], 4096
        $region136: #{tpu_custom_call.1} parent=87 // pred_fallthru
          _
        %s845 = sand.u32 %s60, 1
        %s846 = scalar_lea.sflag [#allocation3], %s845
        %s847 = sand.u32 %s60, 1
        %s848 = smul.addr %s847, 8
        %s849 = scalar_lea.vmem [#allocation2], %s848
        %p850 = pneg %p73
        %p851 = pneg %p70
        %s852 = sand.u32 %s52, 1
        %s853 = scalar_lea.sflag [#allocation6], %s852
        %s854 = sand.u32 %s86, 1
        %s855 = smul.addr %s854, 8
        %s856 = scalar_lea.vmem [#allocation5], %s855
        %p857 = pneg %p99
        %p858 = pneg %p96
        %s859 = sand.u32 %s52, 1
        %s860 = scalar_lea.sflag [#allocation6], %s859
        %s861 = sand.u32 %s112, 1
        %s862 = smul.addr %s861, 8
        %s863 = scalar_lea.vmem [#allocation7], %s862
        %p864 = pneg %p125
        %p865 = pneg %p122
        %s866 = sand.u32 %s52, 1
        %s867 = scalar_lea.sflag [#allocation9], %s866
        %s868 = sand.u32 %s138, 1
        %s869 = smul.addr %s868, 8
        %s870 = scalar_lea.vmem [#allocation8], %s869
        %p871 = pneg %p151
        %p872 = pneg %p148
        %s873 = sand.u32 %s52, 1
        %s874 = scalar_lea.sflag [#allocation9], %s873
        %s875 = sand.u32 %s164, 1
        %s876 = smul.addr %s875, 8
        %s877 = scalar_lea.vmem [#allocation10], %s876
        %p878 = pneg %p177
        %p879 = pneg %p174
        %s880 = sand.u32 %s52, 1
        %s881 = scalar_lea.sflag [#allocation12], %s880
        %s882 = sand.u32 %s190, 1
        %s883 = smul.addr %s882, 256
        %s884 = scalar_lea.vmem [#allocation11], %s883
        %p885 = pneg %p203
        %p886 = pneg %p200
        %p887 = pneg %p224
        %p888 = pneg %p221
        %p889 = pneg %p245
        %p890 = pneg %p242
        %p891 = pneg %p266
        %p892 = pneg %p263
        %p893 = pneg %p287
        %p894 = pneg %p284
        %p895 = pneg %p308
        %p896 = pneg %p305
        %p897 = pneg %p329
        %p898 = pneg %p326
        %p899 = pneg %p350
        %p900 = pneg %p347
        %p901 = pneg %p371
        %p902 = pneg %p368
        %p903 = pneg %p392
        %p904 = pneg %p389
        %p905 = pneg %p413
        %p906 = pneg %p410
        %p907 = pneg %p434
        %p908 = pneg %p431
        %p909 = pneg %p460
        %p910 = pneg %p457
        %s911 = sand.u32 %s447, 1
        %s912 = scalar_lea.sflag [#allocation4], %s911
        %s913 = sand.u32 %s447, 1
        %s914 = smul.addr %s913, 8
        %s915 = scalar_lea.vmem [#allocation22], %s914
        %p916 = pneg %p486
        %p917 = pneg %p483
        %s918 = sand.u32 %s52, 1
        %s919 = scalar_lea.sflag [#allocation24], %s918
        %s920 = sand.u32 %s473, 1
        %s921 = smul.addr %s920, 16
        %s922 = scalar_lea.vmem [#allocation23], %s921
        %p923 = pneg %p512
        %p924 = pneg %p509
        %s925 = sand.u32 %s52, 1
        %s926 = scalar_lea.sflag [#allocation24], %s925
        %s927 = sand.u32 %s499, 1
        %s928 = smul.addr %s927, 8
        %s929 = scalar_lea.vmem [#allocation25], %s928
        %s930 = smul.u32 8, %s52
        %v931 = vld [vmem:[%s759] sm:$0xff]
        %v932 = vld [vmem:[%s769] sm:$0xff]
        %v933 = vld [vmem:[%s789] sm:$0xff]
        %v934 = vadd.f32 %v932, %v933
        %v935 = vld [vmem:[#allocation13] sm:$0xff]
        %v936 = vld [vmem:[#allocation13 + $0x8] sm:$0xff]
        %v937 = vld [vmem:[#allocation13 + $0x10] sm:$0xff]
        %v938 = vld [vmem:[#allocation13 + $0x18] sm:$0xff]
        %v939 = vld [vmem:[#allocation13 + $0x20] sm:$0xff]
        %v940 = vld [vmem:[#allocation13 + $0x28] sm:$0xff]
        %v941 = vld [vmem:[#allocation13 + $0x30] sm:$0xff]
        %v942 = vld [vmem:[#allocation13 + $0x38] sm:$0xff]
        %v943 = vld [vmem:[#allocation13 + $0x40] sm:$0xff]
        %v944 = vld [vmem:[#allocation13 + $0x48] sm:$0xff]
        %v945 = vld [vmem:[#allocation13 + $0x50] sm:$0xff]
        %v946 = vld [vmem:[#allocation13 + $0x58] sm:$0xff]
        %v947 = vld [vmem:[#allocation13 + $0x60] sm:$0xff]
        %v948 = vld [vmem:[#allocation13 + $0x68] sm:$0xff]
        %v949 = vld [vmem:[#allocation13 + $0x70] sm:$0xff]
        %v950 = vld [vmem:[#allocation13 + $0x78] sm:$0xff]
        %v951 = vld [vmem:[#allocation13 + $0x80] sm:$0xff]
        %v952 = vld [vmem:[#allocation13 + $0x88] sm:$0xff]
        %v953 = vld [vmem:[#allocation13 + $0x90] sm:$0xff]
        %v954 = vld [vmem:[#allocation13 + $0x98] sm:$0xff]
        %v955 = vld [vmem:[#allocation13 + $0xa0] sm:$0xff]
        %v956 = vld [vmem:[#allocation13 + $0xa8] sm:$0xff]
        %v957 = vld [vmem:[#allocation13 + $0xb0] sm:$0xff]
        %v958 = vld [vmem:[#allocation13 + $0xb8] sm:$0xff]
        %v959 = vld [vmem:[#allocation13 + $0xc0] sm:$0xff]
        %v960 = vld [vmem:[#allocation13 + $0xc8] sm:$0xff]
        %v961 = vld [vmem:[#allocation13 + $0xd0] sm:$0xff]
        %v962 = vld [vmem:[#allocation13 + $0xd8] sm:$0xff]
        %v963 = vld [vmem:[#allocation13 + $0xe0] sm:$0xff]
        %v964 = vld [vmem:[#allocation13 + $0xe8] sm:$0xff]
        %v965 = vld [vmem:[#allocation13 + $0xf0] sm:$0xff]
        %v966 = vld [vmem:[#allocation13 + $0xf8] sm:$0xff]
        %v967 = vld [vmem:[#allocation14] sm:$0xff]
        %v968 = vld [vmem:[#allocation14 + $0x8] sm:$0xff]
        %v969 = vld [vmem:[#allocation14 + $0x10] sm:$0xff]
        %v970 = vld [vmem:[#allocation14 + $0x18] sm:$0xff]
        %v971 = vld [vmem:[#allocation14 + $0x20] sm:$0xff]
        %v972 = vld [vmem:[#allocation14 + $0x28] sm:$0xff]
        %v973 = vld [vmem:[#allocation14 + $0x30] sm:$0xff]
        %v974 = vld [vmem:[#allocation14 + $0x38] sm:$0xff]
        %v975 = vld [vmem:[#allocation14 + $0x40] sm:$0xff]
        %v976 = vld [vmem:[#allocation14 + $0x48] sm:$0xff]
        %v977 = vld [vmem:[#allocation14 + $0x50] sm:$0xff]
        %v978 = vld [vmem:[#allocation14 + $0x58] sm:$0xff]
        %v979 = vld [vmem:[#allocation14 + $0x60] sm:$0xff]
        %v980 = vld [vmem:[#allocation14 + $0x68] sm:$0xff]
        %v981 = vld [vmem:[#allocation14 + $0x70] sm:$0xff]
        %v982 = vld [vmem:[#allocation14 + $0x78] sm:$0xff]
        %v983 = vld [vmem:[#allocation14 + $0x80] sm:$0xff]
        %v984 = vld [vmem:[#allocation14 + $0x88] sm:$0xff]
        %v985 = vld [vmem:[#allocation14 + $0x90] sm:$0xff]
        %v986 = vld [vmem:[#allocation14 + $0x98] sm:$0xff]
        %v987 = vld [vmem:[#allocation14 + $0xa0] sm:$0xff]
        %v988 = vld [vmem:[#allocation14 + $0xa8] sm:$0xff]
        %v989 = vld [vmem:[#allocation14 + $0xb0] sm:$0xff]
        %v990 = vld [vmem:[#allocation14 + $0xb8] sm:$0xff]
        %v991 = vld [vmem:[#allocation14 + $0xc0] sm:$0xff]
        %v992 = vld [vmem:[#allocation14 + $0xc8] sm:$0xff]
        %v993 = vld [vmem:[#allocation14 + $0xd0] sm:$0xff]
        %v994 = vld [vmem:[#allocation14 + $0xd8] sm:$0xff]
        %v995 = vld [vmem:[#allocation14 + $0xe0] sm:$0xff]
        %v996 = vld [vmem:[#allocation14 + $0xe8] sm:$0xff]
        %v997 = vld [vmem:[#allocation14 + $0xf0] sm:$0xff]
        %v998 = vld [vmem:[#allocation14 + $0xf8] sm:$0xff]
        %v999 = vld [vmem:[#allocation14 + $0x100] sm:$0xff]
        %v1000 = vld [vmem:[#allocation14 + $0x108] sm:$0xff]
        %v1001 = vld [vmem:[#allocation14 + $0x110] sm:$0xff]
        %v1002 = vld [vmem:[#allocation14 + $0x118] sm:$0xff]
        %v1003 = vld [vmem:[#allocation14 + $0x120] sm:$0xff]
        %v1004 = vld [vmem:[#allocation14 + $0x128] sm:$0xff]
        %v1005 = vld [vmem:[#allocation14 + $0x130] sm:$0xff]
        %v1006 = vld [vmem:[#allocation14 + $0x138] sm:$0xff]
        %v1007 = vld [vmem:[#allocation14 + $0x140] sm:$0xff]
        %v1008 = vld [vmem:[#allocation14 + $0x148] sm:$0xff]
        %v1009 = vld [vmem:[#allocation14 + $0x150] sm:$0xff]
        %v1010 = vld [vmem:[#allocation14 + $0x158] sm:$0xff]
        %v1011 = vld [vmem:[#allocation14 + $0x160] sm:$0xff]
        %v1012 = vld [vmem:[#allocation14 + $0x168] sm:$0xff]
        %v1013 = vld [vmem:[#allocation14 + $0x170] sm:$0xff]
        %v1014 = vld [vmem:[#allocation14 + $0x178] sm:$0xff]
        %v1015 = vld [vmem:[#allocation14 + $0x180] sm:$0xff]
        %v1016 = vld [vmem:[#allocation14 + $0x188] sm:$0xff]
        %v1017 = vld [vmem:[#allocation14 + $0x190] sm:$0xff]
        %v1018 = vld [vmem:[#allocation14 + $0x198] sm:$0xff]
        %v1019 = vld [vmem:[#allocation14 + $0x1a0] sm:$0xff]
        %v1020 = vld [vmem:[#allocation14 + $0x1a8] sm:$0xff]
        %v1021 = vld [vmem:[#allocation14 + $0x1b0] sm:$0xff]
        %v1022 = vld [vmem:[#allocation14 + $0x1b8] sm:$0xff]
        %v1023 = vld [vmem:[#allocation14 + $0x1c0] sm:$0xff]
        %v1024 = vld [vmem:[#allocation14 + $0x1c8] sm:$0xff]
        %v1025 = vld [vmem:[#allocation14 + $0x1d0] sm:$0xff]
        %v1026 = vld [vmem:[#allocation14 + $0x1d8] sm:$0xff]
        %v1027 = vld [vmem:[#allocation14 + $0x1e0] sm:$0xff]
        %v1028 = vld [vmem:[#allocation14 + $0x1e8] sm:$0xff]
        %v1029 = vld [vmem:[#allocation14 + $0x1f0] sm:$0xff]
        %v1030 = vld [vmem:[#allocation14 + $0x1f8] sm:$0xff]
        %1031 = vmatpush.msra.mxu0 %v1027
        %1032 = vmatpush.msra.mxu0 %v1023
        %1033 = vmatpush.msra.mxu0 %v1019
        %1034 = vmatpush.msra.mxu0 %v1015
        %1035 = vmatpush.msra.mxu0 %v1011
        %1036 = vmatpush.msra.mxu0 %v1007
        %1037 = vmatpush.msra.mxu0 %v1003
        %1038 = vmatpush.msra.mxu0 %v999
        %1039 = vmatpush.msra.mxu0 %v995
        %1040 = vmatpush.msra.mxu0 %v991
        %1041 = vmatpush.msra.mxu0 %v987
        %1042 = vmatpush.msra.mxu0 %v983
        %1043 = vmatpush.msra.mxu0 %v979
        %1044 = vmatpush.msra.mxu0 %v975
        %1045 = vmatpush.msra.mxu0 %v971
        %1046 = vmatpush.msra.mxu0 %v967
        %1047 = vmatmul.f32.gmra.mxu0 %v934
        %v1048 = vpop.f32.mrf.mxu0
        %v1049 = vadd.f32 0.0, %v1048
        %1050 = vdwg.mxu0
        %1051 = vmatpush.msra.mxu0 %v1028
        %1052 = vmatpush.msra.mxu0 %v1024
        %1053 = vmatpush.msra.mxu0 %v1020
        %1054 = vmatpush.msra.mxu0 %v1016
        %1055 = vmatpush.msra.mxu0 %v1012
        %1056 = vmatpush.msra.mxu0 %v1008
        %1057 = vmatpush.msra.mxu0 %v1004
        %1058 = vmatpush.msra.mxu0 %v1000
        %1059 = vmatpush.msra.mxu0 %v996
        %1060 = vmatpush.msra.mxu0 %v992
        %1061 = vmatpush.msra.mxu0 %v988
        %1062 = vmatpush.msra.mxu0 %v984
        %1063 = vmatpush.msra.mxu0 %v980
        %1064 = vmatpush.msra.mxu0 %v976
        %1065 = vmatpush.msra.mxu0 %v972
        %1066 = vmatpush.msra.mxu0 %v968
        %1067 = vmatmul.f32.gmra.mxu0 %v934
        %v1068 = vpop.f32.mrf.mxu0
        %v1069 = vadd.f32 0.0, %v1068
        %1070 = vdwg.mxu0
        %1071 = vmatpush.msra.mxu0 %v1029
        %1072 = vmatpush.msra.mxu0 %v1025
        %1073 = vmatpush.msra.mxu0 %v1021
        %1074 = vmatpush.msra.mxu0 %v1017
        %1075 = vmatpush.msra.mxu0 %v1013
        %1076 = vmatpush.msra.mxu0 %v1009
        %1077 = vmatpush.msra.mxu0 %v1005
        %1078 = vmatpush.msra.mxu0 %v1001
        %1079 = vmatpush.msra.mxu0 %v997
        %1080 = vmatpush.msra.mxu0 %v993
        %1081 = vmatpush.msra.mxu0 %v989
        %1082 = vmatpush.msra.mxu0 %v985
        %1083 = vmatpush.msra.mxu0 %v981
        %1084 = vmatpush.msra.mxu0 %v977
        %1085 = vmatpush.msra.mxu0 %v973
        %1086 = vmatpush.msra.mxu0 %v969
        %1087 = vmatmul.f32.gmra.mxu0 %v934
        %v1088 = vpop.f32.mrf.mxu0
        %v1089 = vadd.f32 0.0, %v1088
        %1090 = vdwg.mxu0
        %1091 = vmatpush.msra.mxu0 %v1030
        %1092 = vmatpush.msra.mxu0 %v1026
        %1093 = vmatpush.msra.mxu0 %v1022
        %1094 = vmatpush.msra.mxu0 %v1018
        %1095 = vmatpush.msra.mxu0 %v1014
        %1096 = vmatpush.msra.mxu0 %v1010
        %1097 = vmatpush.msra.mxu0 %v1006
        %1098 = vmatpush.msra.mxu0 %v1002
        %1099 = vmatpush.msra.mxu0 %v998
        %1100 = vmatpush.msra.mxu0 %v994
        %1101 = vmatpush.msra.mxu0 %v990
        %1102 = vmatpush.msra.mxu0 %v986
        %1103 = vmatpush.msra.mxu0 %v982
        %1104 = vmatpush.msra.mxu0 %v978
        %1105 = vmatpush.msra.mxu0 %v974
        %1106 = vmatpush.msra.mxu0 %v970
        %1107 = vmatmul.f32.gmra.mxu0 %v934
        %v1108 = vpop.f32.mrf.mxu0
        %v1109 = vadd.f32 0.0, %v1108
        %1110 = vdwg.mxu0
        %vm1111 = vcmask 523264
        %v1113 = vsel %vm1111, %v931, 0
        %1115 = vmatpush.msra.mxu0 0.0
        %1116 = vmatpush.msra.mxu0 0.0
        %1117 = vmatpush.msra.mxu0 0.0
        %1118 = vmatpush.msra.mxu0 0.0
        %1119 = vmatpush.msra.mxu0 0.0
        %1120 = vmatpush.msra.mxu0 0.0
        %1121 = vmatpush.msra.mxu0 0.0
        %1122 = vmatpush.msra.mxu0 0.0
        %1123 = vmatpush.msra.mxu0 %v963
        %1124 = vmatpush.msra.mxu0 %v959
        %1125 = vmatpush.msra.mxu0 %v955
        %1126 = vmatpush.msra.mxu0 %v951
        %1127 = vmatpush.msra.mxu0 %v947
        %1128 = vmatpush.msra.mxu0 %v943
        %1129 = vmatpush.msra.mxu0 %v939
        %1130 = vmatpush.msra.mxu0 %v935
        %1131 = vmatmul.f32.gmra.mxu0 %v1113
        %v1132 = vpop.f32.mrf.mxu0
        %v1133 = vadd.f32 %v1049, %v1132
        %1134 = vdwg.mxu0
        %1135 = vmatpush.msra.mxu0 0.0
        %1136 = vmatpush.msra.mxu0 0.0
        %1137 = vmatpush.msra.mxu0 0.0
        %1138 = vmatpush.msra.mxu0 0.0
        %1139 = vmatpush.msra.mxu0 0.0
        %1140 = vmatpush.msra.mxu0 0.0
        %1141 = vmatpush.msra.mxu0 0.0
        %1142 = vmatpush.msra.mxu0 0.0
        %1143 = vmatpush.msra.mxu0 %v964
        %1144 = vmatpush.msra.mxu0 %v960
        %1145 = vmatpush.msra.mxu0 %v956
        %1146 = vmatpush.msra.mxu0 %v952
        %1147 = vmatpush.msra.mxu0 %v948
        %1148 = vmatpush.msra.mxu0 %v944
        %1149 = vmatpush.msra.mxu0 %v940
        %1150 = vmatpush.msra.mxu0 %v936
        %1151 = vmatmul.f32.gmra.mxu0 %v1113
        %v1152 = vpop.f32.mrf.mxu0
        %v1153 = vadd.f32 %v1069, %v1152
        %1154 = vdwg.mxu0
        %1155 = vmatpush.msra.mxu0 0.0
        %1156 = vmatpush.msra.mxu0 0.0
        %1157 = vmatpush.msra.mxu0 0.0
        %1158 = vmatpush.msra.mxu0 0.0
        %1159 = vmatpush.msra.mxu0 0.0
        %1160 = vmatpush.msra.mxu0 0.0
        %1161 = vmatpush.msra.mxu0 0.0
        %1162 = vmatpush.msra.mxu0 0.0
        %1163 = vmatpush.msra.mxu0 %v965
        %1164 = vmatpush.msra.mxu0 %v961
        %1165 = vmatpush.msra.mxu0 %v957
        %1166 = vmatpush.msra.mxu0 %v953
        %1167 = vmatpush.msra.mxu0 %v949
        %1168 = vmatpush.msra.mxu0 %v945
        %1169 = vmatpush.msra.mxu0 %v941
        %1170 = vmatpush.msra.mxu0 %v937
        %1171 = vmatmul.f32.gmra.mxu0 %v1113
        %v1172 = vpop.f32.mrf.mxu0
        %v1173 = vadd.f32 %v1089, %v1172
        %1174 = vdwg.mxu0
        %1175 = vmatpush.msra.mxu0 0.0
        %1176 = vmatpush.msra.mxu0 0.0
        %1177 = vmatpush.msra.mxu0 0.0
        %1178 = vmatpush.msra.mxu0 0.0
        %1179 = vmatpush.msra.mxu0 0.0
        %1180 = vmatpush.msra.mxu0 0.0
        %1181 = vmatpush.msra.mxu0 0.0
        %1182 = vmatpush.msra.mxu0 0.0
        %1183 = vmatpush.msra.mxu0 %v966
        %1184 = vmatpush.msra.mxu0 %v962
        %1185 = vmatpush.msra.mxu0 %v958
        %1186 = vmatpush.msra.mxu0 %v954
        %1187 = vmatpush.msra.mxu0 %v950
        %1188 = vmatpush.msra.mxu0 %v946
        %1189 = vmatpush.msra.mxu0 %v942
        %1190 = vmatpush.msra.mxu0 %v938
        %1191 = vmatmul.f32.gmra.mxu0 %v1113
        %v1192 = vpop.f32.mrf.mxu0
        %v1193 = vadd.f32 %v1109, %v1192
        %1194 = vdwg.mxu0
        %v1195 = vld [vmem:[%s779] sm:$0xff]
        %v1196 = vld [vmem:[#allocation16] sm:$0xff]
        %v1197 = vld [vmem:[#allocation16 + $0x8] sm:$0xff]
        %v1198 = vld [vmem:[#allocation16 + $0x10] sm:$0xff]
        %v1199 = vld [vmem:[#allocation16 + $0x18] sm:$0xff]
        %v1200 = vld [vmem:[#allocation16 + $0x20] sm:$0xff]
        %v1201 = vld [vmem:[#allocation16 + $0x28] sm:$0xff]
        %v1202 = vld [vmem:[#allocation16 + $0x30] sm:$0xff]
        %v1203 = vld [vmem:[#allocation16 + $0x38] sm:$0xff]
        %v1204 = vld [vmem:[#allocation16 + $0x40] sm:$0xff]
        %v1205 = vld [vmem:[#allocation16 + $0x48] sm:$0xff]
        %v1206 = vld [vmem:[#allocation16 + $0x50] sm:$0xff]
        %v1207 = vld [vmem:[#allocation16 + $0x58] sm:$0xff]
        %v1208 = vld [vmem:[#allocation16 + $0x60] sm:$0xff]
        %v1209 = vld [vmem:[#allocation16 + $0x68] sm:$0xff]
        %v1210 = vld [vmem:[#allocation16 + $0x70] sm:$0xff]
        %v1211 = vld [vmem:[#allocation16 + $0x78] sm:$0xff]
        %v1212 = vld [vmem:[#allocation16 + $0x80] sm:$0xff]
        %v1213 = vld [vmem:[#allocation16 + $0x88] sm:$0xff]
        %v1214 = vld [vmem:[#allocation16 + $0x90] sm:$0xff]
        %v1215 = vld [vmem:[#allocation16 + $0x98] sm:$0xff]
        %v1216 = vld [vmem:[#allocation16 + $0xa0] sm:$0xff]
        %v1217 = vld [vmem:[#allocation16 + $0xa8] sm:$0xff]
        %v1218 = vld [vmem:[#allocation16 + $0xb0] sm:$0xff]
        %v1219 = vld [vmem:[#allocation16 + $0xb8] sm:$0xff]
        %v1220 = vld [vmem:[#allocation16 + $0xc0] sm:$0xff]
        %v1221 = vld [vmem:[#allocation16 + $0xc8] sm:$0xff]
        %v1222 = vld [vmem:[#allocation16 + $0xd0] sm:$0xff]
        %v1223 = vld [vmem:[#allocation16 + $0xd8] sm:$0xff]
        %v1224 = vld [vmem:[#allocation16 + $0xe0] sm:$0xff]
        %v1225 = vld [vmem:[#allocation16 + $0xe8] sm:$0xff]
        %v1226 = vld [vmem:[#allocation16 + $0xf0] sm:$0xff]
        %v1227 = vld [vmem:[#allocation16 + $0xf8] sm:$0xff]
        %v1228 = vld [vmem:[#allocation16 + $0x100] sm:$0xff]
        %v1229 = vld [vmem:[#allocation16 + $0x108] sm:$0xff]
        %v1230 = vld [vmem:[#allocation16 + $0x110] sm:$0xff]
        %v1231 = vld [vmem:[#allocation16 + $0x118] sm:$0xff]
        %v1232 = vld [vmem:[#allocation16 + $0x120] sm:$0xff]
        %v1233 = vld [vmem:[#allocation16 + $0x128] sm:$0xff]
        %v1234 = vld [vmem:[#allocation16 + $0x130] sm:$0xff]
        %v1235 = vld [vmem:[#allocation16 + $0x138] sm:$0xff]
        %v1236 = vld [vmem:[#allocation16 + $0x140] sm:$0xff]
        %v1237 = vld [vmem:[#allocation16 + $0x148] sm:$0xff]
        %v1238 = vld [vmem:[#allocation16 + $0x150] sm:$0xff]
        %v1239 = vld [vmem:[#allocation16 + $0x158] sm:$0xff]
        %v1240 = vld [vmem:[#allocation16 + $0x160] sm:$0xff]
        %v1241 = vld [vmem:[#allocation16 + $0x168] sm:$0xff]
        %v1242 = vld [vmem:[#allocation16 + $0x170] sm:$0xff]
        %v1243 = vld [vmem:[#allocation16 + $0x178] sm:$0xff]
        %v1244 = vld [vmem:[#allocation16 + $0x180] sm:$0xff]
        %v1245 = vld [vmem:[#allocation16 + $0x188] sm:$0xff]
        %v1246 = vld [vmem:[#allocation16 + $0x190] sm:$0xff]
        %v1247 = vld [vmem:[#allocation16 + $0x198] sm:$0xff]
        %v1248 = vld [vmem:[#allocation16 + $0x1a0] sm:$0xff]
        %v1249 = vld [vmem:[#allocation16 + $0x1a8] sm:$0xff]
        %v1250 = vld [vmem:[#allocation16 + $0x1b0] sm:$0xff]
        %v1251 = vld [vmem:[#allocation16 + $0x1b8] sm:$0xff]
        %v1252 = vld [vmem:[#allocation16 + $0x1c0] sm:$0xff]
        %v1253 = vld [vmem:[#allocation16 + $0x1c8] sm:$0xff]
        %v1254 = vld [vmem:[#allocation16 + $0x1d0] sm:$0xff]
        %v1255 = vld [vmem:[#allocation16 + $0x1d8] sm:$0xff]
        %v1256 = vld [vmem:[#allocation16 + $0x1e0] sm:$0xff]
        %v1257 = vld [vmem:[#allocation16 + $0x1e8] sm:$0xff]
        %v1258 = vld [vmem:[#allocation16 + $0x1f0] sm:$0xff]
        %v1259 = vld [vmem:[#allocation16 + $0x1f8] sm:$0xff]
        %1260 = vmatpush.msra.mxu0 %v1256
        %1261 = vmatpush.msra.mxu0 %v1252
        %1262 = vmatpush.msra.mxu0 %v1248
        %1263 = vmatpush.msra.mxu0 %v1244
        %1264 = vmatpush.msra.mxu0 %v1240
        %1265 = vmatpush.msra.mxu0 %v1236
        %1266 = vmatpush.msra.mxu0 %v1232
        %1267 = vmatpush.msra.mxu0 %v1228
        %1268 = vmatpush.msra.mxu0 %v1224
        %1269 = vmatpush.msra.mxu0 %v1220
        %1270 = vmatpush.msra.mxu0 %v1216
        %1271 = vmatpush.msra.mxu0 %v1212
        %1272 = vmatpush.msra.mxu0 %v1208
        %1273 = vmatpush.msra.mxu0 %v1204
        %1274 = vmatpush.msra.mxu0 %v1200
        %1275 = vmatpush.msra.mxu0 %v1196
        %1276 = vmatmul.f32.gmra.mxu0 %v1195
        %v1277 = vpop.f32.mrf.mxu0
        %v1278 = vadd.f32 0.0, %v1277
        %1279 = vdwg.mxu0
        %1280 = vmatpush.msra.mxu0 %v1257
        %1281 = vmatpush.msra.mxu0 %v1253
        %1282 = vmatpush.msra.mxu0 %v1249
        %1283 = vmatpush.msra.mxu0 %v1245
        %1284 = vmatpush.msra.mxu0 %v1241
        %1285 = vmatpush.msra.mxu0 %v1237
        %1286 = vmatpush.msra.mxu0 %v1233
        %1287 = vmatpush.msra.mxu0 %v1229
        %1288 = vmatpush.msra.mxu0 %v1225
        %1289 = vmatpush.msra.mxu0 %v1221
        %1290 = vmatpush.msra.mxu0 %v1217
        %1291 = vmatpush.msra.mxu0 %v1213
        %1292 = vmatpush.msra.mxu0 %v1209
        %1293 = vmatpush.msra.mxu0 %v1205
        %1294 = vmatpush.msra.mxu0 %v1201
        %1295 = vmatpush.msra.mxu0 %v1197
        %1296 = vmatmul.f32.gmra.mxu0 %v1195
        %v1297 = vpop.f32.mrf.mxu0
        %v1298 = vadd.f32 0.0, %v1297
        %1299 = vdwg.mxu0
        %1300 = vmatpush.msra.mxu0 %v1258
        %1301 = vmatpush.msra.mxu0 %v1254
        %1302 = vmatpush.msra.mxu0 %v1250
        %1303 = vmatpush.msra.mxu0 %v1246
        %1304 = vmatpush.msra.mxu0 %v1242
        %1305 = vmatpush.msra.mxu0 %v1238
        %1306 = vmatpush.msra.mxu0 %v1234
        %1307 = vmatpush.msra.mxu0 %v1230
        %1308 = vmatpush.msra.mxu0 %v1226
        %1309 = vmatpush.msra.mxu0 %v1222
        %1310 = vmatpush.msra.mxu0 %v1218
        %1311 = vmatpush.msra.mxu0 %v1214
        %1312 = vmatpush.msra.mxu0 %v1210
        %1313 = vmatpush.msra.mxu0 %v1206
        %1314 = vmatpush.msra.mxu0 %v1202
        %1315 = vmatpush.msra.mxu0 %v1198
        %1316 = vmatmul.f32.gmra.mxu0 %v1195
        %v1317 = vpop.f32.mrf.mxu0
        %v1318 = vadd.f32 0.0, %v1317
        %1319 = vdwg.mxu0
        %1320 = vmatpush.msra.mxu0 %v1259
        %1321 = vmatpush.msra.mxu0 %v1255
        %1322 = vmatpush.msra.mxu0 %v1251
        %1323 = vmatpush.msra.mxu0 %v1247
        %1324 = vmatpush.msra.mxu0 %v1243
        %1325 = vmatpush.msra.mxu0 %v1239
        %1326 = vmatpush.msra.mxu0 %v1235
        %1327 = vmatpush.msra.mxu0 %v1231
        %1328 = vmatpush.msra.mxu0 %v1227
        %1329 = vmatpush.msra.mxu0 %v1223
        %1330 = vmatpush.msra.mxu0 %v1219
        %1331 = vmatpush.msra.mxu0 %v1215
        %1332 = vmatpush.msra.mxu0 %v1211
        %1333 = vmatpush.msra.mxu0 %v1207
        %1334 = vmatpush.msra.mxu0 %v1203
        %1335 = vmatpush.msra.mxu0 %v1199
        %1336 = vmatmul.f32.gmra.mxu0 %v1195
        %v1337 = vpop.f32.mrf.mxu0
        %v1338 = vadd.f32 0.0, %v1337
        %1339 = vdwg.mxu0
        %v1340 = vadd.f32 %v1133, %v1278
        %v1341 = vadd.f32 %v1153, %v1298
        %v1342 = vadd.f32 %v1173, %v1318
        %v1343 = vadd.f32 %v1193, %v1338
        %v1344 = vld [vmem:[%s9] sm:$0xf]
        %v1346 = vperm.slane %v1344, 0
        %v1347 = vperm.slane %v1344, 1
        %v1348 = vperm.slane %v1344, 2
        %v1349 = vperm.slane %v1344, 3
        %v1354 = vadd.f32 %v1340, %v1346
        %v1355 = vadd.f32 %v1341, %v1347
        %v1356 = vadd.f32 %v1342, %v1348
        %v1357 = vadd.f32 %v1343, %v1349
        %v1358 = vxor.u32 %v1354, 2147483648
        %v1359 = vmul.f32 %v1358, 1.442695
        %v1360 = vpow.pop %v1359
        %v1361 = vadd.f32 %v1360, 1.0
        %v1362 = vrcp.pop %v1361
        %v1363 = vmul.f32 %v1361, %v1362
        %v1364 = vsub.f32 1.0, %v1363
        %v1365 = vmul.f32 %v1362, %v1364
        %v1366 = vadd.f32 %v1362, %v1365
        %vm1367 = vweird.f32 %v1361
        %vm1368 = vweird.f32 %v1362
        %vm1369 = vmor %vm1367, %vm1368
        %v1370 = vsel %vm1369, %v1362, %v1366
        %v1371 = vand.u32 2147483647, %v1361
        %vm1372 = vcmp.eq.f32.partialorder %v1371, 8.507059e+37
        %v1373 = vand.u32 %v1361, 2147483648
        %v1374 = vor.u32 1.1754944e-38, %v1373
        %v1375 = vsel %vm1372, %v1374, %v1370
        %v1376 = vmul.f32 1.0, %v1375
        %v1377 = vxor.u32 %v1355, 2147483648
        %v1378 = vmul.f32 %v1377, 1.442695
        %v1379 = vpow.pop %v1378
        %v1380 = vadd.f32 %v1379, 1.0
        %v1381 = vrcp.pop %v1380
        %v1382 = vmul.f32 %v1380, %v1381
        %v1383 = vsub.f32 1.0, %v1382
        %v1384 = vmul.f32 %v1381, %v1383
        %v1385 = vadd.f32 %v1381, %v1384
        %vm1386 = vweird.f32 %v1380
        %vm1387 = vweird.f32 %v1381
        %vm1388 = vmor %vm1386, %vm1387
        %v1389 = vsel %vm1388, %v1381, %v1385
        %v1390 = vand.u32 2147483647, %v1380
        %vm1391 = vcmp.eq.f32.partialorder %v1390, 8.507059e+37
        %v1392 = vand.u32 %v1380, 2147483648
        %v1393 = vor.u32 1.1754944e-38, %v1392
        %v1394 = vsel %vm1391, %v1393, %v1389
        %v1395 = vmul.f32 1.0, %v1394
        %v1396 = vtanh.pop %v1356
        %v1397 = vxor.u32 %v1357, 2147483648
        %v1398 = vmul.f32 %v1397, 1.442695
        %v1399 = vpow.pop %v1398
        %v1400 = vadd.f32 %v1399, 1.0
        %v1401 = vrcp.pop %v1400
        %v1402 = vmul.f32 %v1400, %v1401
        %v1403 = vsub.f32 1.0, %v1402
        %v1404 = vmul.f32 %v1401, %v1403
        %v1405 = vadd.f32 %v1401, %v1404
        %vm1406 = vweird.f32 %v1400
        %vm1407 = vweird.f32 %v1401
        %vm1408 = vmor %vm1406, %vm1407
        %v1409 = vsel %vm1408, %v1401, %v1405
        %v1410 = vand.u32 2147483647, %v1400
        %vm1411 = vcmp.eq.f32.partialorder %v1410, 8.507059e+37
        %v1412 = vand.u32 %v1400, 2147483648
        %v1413 = vor.u32 1.1754944e-38, %v1412
        %v1414 = vsel %vm1411, %v1413, %v1409
        %v1415 = vmul.f32 1.0, %v1414
        %v1416 = vld [vmem:[%s799] sm:$0xff]
        %v1417 = vmul.f32 %v1395, %v1416
        %v1418 = vmul.f32 %v1376, %v1396
        %v1419 = vadd.f32 %v1417, %v1418
        %v1420 = vtanh.pop %v1419
        %v1421 = vmul.f32 %v1415, %v1420
        %1422 = vadd.xlane.f32.xlu0 %v1421
        %v1423 = vpop.xlane.xlu0 %1422
        %v1424 = vrcp.pop 128.0
        %v1425 = vmul.f32 128.0, %v1424
        %v1426 = vsub.f32 1.0, %v1425
        %v1427 = vmul.f32 %v1424, %v1426
        %v1428 = vadd.f32 %v1424, %v1427
        %vm1429 = vweird.f32 %v1424
        %v1430 = vsel %vm1429, %v1424, %v1428
        %v1431 = vmul.f32 %v1423, %v1430
        %v1432 = vsub.f32 %v1421, %v1431
        %v1433 = vmul.f32 %v1432, %v1432
        %1434 = vadd.xlane.f32.xlu0 %v1433
        %v1435 = vpop.xlane.xlu0 %1434
        %v1436 = vmul.f32 %v1435, 0.007874016
        %v1437 = vrsqrt.pop %v1436
        %v1438 = vmul.f32 %v1437, %v1436
        %v1439 = vmul.f32 %v1438, %v1437
        %v1440 = vmul.f32 0.5, %v1439
        %v1441 = vsub.f32 1.5, %v1440
        %v1442 = vmul.f32 %v1437, %v1441
        %v1443 = vmul.f32 %v1436, %v1442
        %vm1444 = vcmp.eq.f32.partialorder %v1436, inf
        %v1445 = vsel %vm1444, %v1436, %v1443
        %vm1446 = vcmp.eq.f32.partialorder %v1436, 0.0
        %v1447 = vand.u32 %v1436, 2147483648
        %v1448 = vsel %vm1446, %v1447, %v1445
        %v1449 = vadd.f32 %v1448, 1e-06
        %v1450 = vrcp.pop %v1449
        %v1451 = vmul.f32 %v1449, %v1450
        %v1452 = vsub.f32 1.0, %v1451
        %v1453 = vmul.f32 %v1450, %v1452
        %v1454 = vadd.f32 %v1450, %v1453
        %vm1455 = vweird.f32 %v1449
        %vm1456 = vweird.f32 %v1450
        %vm1457 = vmor %vm1455, %vm1456
        %v1458 = vsel %vm1457, %v1450, %v1454
        %v1459 = vand.u32 2147483647, %v1449
        %vm1460 = vcmp.eq.f32.partialorder %v1459, 8.507059e+37
        %v1461 = vand.u32 %v1449, 2147483648
        %v1462 = vor.u32 1.1754944e-38, %v1461
        %v1463 = vsel %vm1460, %v1462, %v1458
        %v1464 = vmul.f32 1.0, %v1463
        %v1465 = vld [vmem:[%s10] sm:$0x1]
        %v1466 = vmul.f32 %v1432, %v1464
        %v1468 = vperm.slane %v1465, 0
        %v1470 = vmul.f32 %v1468, %v1466
        %v1471 = vld [vmem:[%s11] sm:$0x1]
        %v1473 = vperm.slane %v1471, 0
        %v1475 = vadd.f32 %v1470, %v1473
        %v1476 = vld [vmem:[#allocation17] sm:$0xff]
        %v1477 = vld [vmem:[#allocation17 + $0x8] sm:$0xff]
        %v1478 = vld [vmem:[#allocation17 + $0x10] sm:$0xff]
        %v1479 = vld [vmem:[#allocation17 + $0x18] sm:$0xff]
        %v1480 = vld [vmem:[#allocation17 + $0x20] sm:$0xff]
        %v1481 = vld [vmem:[#allocation17 + $0x28] sm:$0xff]
        %v1482 = vld [vmem:[#allocation17 + $0x30] sm:$0xff]
        %v1483 = vld [vmem:[#allocation17 + $0x38] sm:$0xff]
        %v1484 = vld [vmem:[#allocation17 + $0x40] sm:$0xff]
        %v1485 = vld [vmem:[#allocation17 + $0x48] sm:$0xff]
        %v1486 = vld [vmem:[#allocation17 + $0x50] sm:$0xff]
        %v1487 = vld [vmem:[#allocation17 + $0x58] sm:$0xff]
        %v1488 = vld [vmem:[#allocation17 + $0x60] sm:$0xff]
        %v1489 = vld [vmem:[#allocation17 + $0x68] sm:$0xff]
        %v1490 = vld [vmem:[#allocation17 + $0x70] sm:$0xff]
        %v1491 = vld [vmem:[#allocation17 + $0x78] sm:$0xff]
        %v1492 = vld [vmem:[%s13] sm:$0x1]
        %v1494 = vperm.slane %v1492, 0
        %1496 = vmatpush.msra.mxu0 %v1491
        %1497 = vmatpush.msra.mxu0 %v1490
        %1498 = vmatpush.msra.mxu0 %v1489
        %1499 = vmatpush.msra.mxu0 %v1488
        %1500 = vmatpush.msra.mxu0 %v1487
        %1501 = vmatpush.msra.mxu0 %v1486
        %1502 = vmatpush.msra.mxu0 %v1485
        %1503 = vmatpush.msra.mxu0 %v1484
        %1504 = vmatpush.msra.mxu0 %v1483
        %1505 = vmatpush.msra.mxu0 %v1482
        %1506 = vmatpush.msra.mxu0 %v1481
        %1507 = vmatpush.msra.mxu0 %v1480
        %1508 = vmatpush.msra.mxu0 %v1479
        %1509 = vmatpush.msra.mxu0 %v1478
        %1510 = vmatpush.msra.mxu0 %v1477
        %1511 = vmatpush.msra.mxu0 %v1476
        %1512 = vmatmul.f32.gmra.mxu0 %v1475
        %v1513 = vpop.f32.mrf.mxu0
        %v1514 = vadd.f32 %v1494, %v1513
        %1515 = vdwg.mxu0
        %v1516 = vmul.f32 %v1514, 0.17677669
        %v1517 = vld [vmem:[%s809] sm:$0xff]
        %v1518 = vld [vmem:[%s809 + $0x8] sm:$0xff]
        %v1519 = vld [vmem:[%s809 + $0x10] sm:$0xff]
        %v1520 = vld [vmem:[%s809 + $0x18] sm:$0xff]
        %v1521 = vld [vmem:[%s809 + $0x20] sm:$0xff]
        %v1522 = vld [vmem:[%s809 + $0x28] sm:$0xff]
        %v1523 = vld [vmem:[%s809 + $0x30] sm:$0xff]
        %v1524 = vld [vmem:[%s809 + $0x38] sm:$0xff]
        %v1525 = vld [vmem:[%s809 + $0x40] sm:$0xff]
        %v1526 = vld [vmem:[%s809 + $0x48] sm:$0xff]
        %v1527 = vld [vmem:[%s809 + $0x50] sm:$0xff]
        %v1528 = vld [vmem:[%s809 + $0x58] sm:$0xff]
        %v1529 = vld [vmem:[%s809 + $0x60] sm:$0xff]
        %v1530 = vld [vmem:[%s809 + $0x68] sm:$0xff]
        %v1531 = vld [vmem:[%s809 + $0x70] sm:$0xff]
        %v1532 = vld [vmem:[%s809 + $0x78] sm:$0xff]
        %v1533 = vld [vmem:[%s809 + $0x80] sm:$0xff]
        %v1534 = vld [vmem:[%s809 + $0x88] sm:$0xff]
        %v1535 = vld [vmem:[%s809 + $0x90] sm:$0xff]
        %v1536 = vld [vmem:[%s809 + $0x98] sm:$0xff]
        %v1537 = vld [vmem:[%s809 + $0xa0] sm:$0xff]
        %v1538 = vld [vmem:[%s809 + $0xa8] sm:$0xff]
        %v1539 = vld [vmem:[%s809 + $0xb0] sm:$0xff]
        %v1540 = vld [vmem:[%s809 + $0xb8] sm:$0xff]
        %v1541 = vld [vmem:[%s809 + $0xc0] sm:$0xff]
        %v1542 = vld [vmem:[%s809 + $0xc8] sm:$0xff]
        %v1543 = vld [vmem:[%s809 + $0xd0] sm:$0xff]
        %v1544 = vld [vmem:[%s809 + $0xd8] sm:$0xff]
        %v1545 = vld [vmem:[%s809 + $0xe0] sm:$0xff]
        %v1546 = vld [vmem:[%s809 + $0xe8] sm:$0xff]
        %v1547 = vld [vmem:[%s809 + $0xf0] sm:$0xff]
        %v1548 = vld [vmem:[%s809 + $0xf8] sm:$0xff]
        %v1550 = vrot.slane %v1516, 1
        %v1551 = vrot.slane %v1516, 2
        %v1552 = vrot.slane %v1516, 3
        %v1553 = vrot.slane %v1516, 4
        %v1554 = vrot.slane %v1516, 5
        %v1555 = vrot.slane %v1516, 6
        %v1556 = vrot.slane %v1516, 7
        %v1557 = vperm.slane %v1516, 0
        %v1558 = vperm.slane %v1550, 0
        %v1559 = vperm.slane %v1551, 0
        %v1560 = vperm.slane %v1552, 0
        %v1561 = vperm.slane %v1553, 0
        %v1562 = vperm.slane %v1554, 0
        %v1563 = vperm.slane %v1555, 0
        %v1564 = vperm.slane %v1556, 0
        %v1573 = vmul.f32 %v1557, %v1518
        %v1574 = vmul.f32 %v1557, %v1520
        %v1575 = vmul.f32 %v1558, %v1522
        %v1576 = vmul.f32 %v1558, %v1524
        %v1577 = vmul.f32 %v1559, %v1526
        %v1578 = vmul.f32 %v1559, %v1528
        %v1579 = vmul.f32 %v1560, %v1530
        %v1580 = vmul.f32 %v1560, %v1532
        %v1581 = vmul.f32 %v1561, %v1534
        %v1582 = vmul.f32 %v1561, %v1536
        %v1583 = vmul.f32 %v1562, %v1538
        %v1584 = vmul.f32 %v1562, %v1540
        %v1585 = vmul.f32 %v1563, %v1542
        %v1586 = vmul.f32 %v1563, %v1544
        %v1587 = vmul.f32 %v1564, %v1546
        %v1588 = vmul.f32 %v1564, %v1548
        %vm1589 = vcmask 261120
        %v1590 = vsel %vm1589, %v1573, 0.0
        %1591 = vadd.xlane.f32.xlu0 %v1590
        %v1592 = vpop.xlane.xlu0 %1591
        %v1593 = vsel %vm1589, %v1574, 0.0
        %1594 = vadd.xlane.f32.xlu0 %v1593
        %v1595 = vpop.xlane.xlu0 %1594
        %v1596 = vsel %vm1589, %v1575, 0.0
        %1597 = vadd.xlane.f32.xlu0 %v1596
        %v1598 = vpop.xlane.xlu0 %1597
        %v1599 = vsel %vm1589, %v1576, 0.0
        %1600 = vadd.xlane.f32.xlu0 %v1599
        %v1601 = vpop.xlane.xlu0 %1600
        %v1602 = vsel %vm1589, %v1577, 0.0
        %1603 = vadd.xlane.f32.xlu0 %v1602
        %v1604 = vpop.xlane.xlu0 %1603
        %v1605 = vsel %vm1589, %v1578, 0.0
        %1606 = vadd.xlane.f32.xlu0 %v1605
        %v1607 = vpop.xlane.xlu0 %1606
        %v1608 = vsel %vm1589, %v1579, 0.0
        %1609 = vadd.xlane.f32.xlu0 %v1608
        %v1610 = vpop.xlane.xlu0 %1609
        %v1611 = vsel %vm1589, %v1580, 0.0
        %1612 = vadd.xlane.f32.xlu0 %v1611
        %v1613 = vpop.xlane.xlu0 %1612
        %v1614 = vsel %vm1589, %v1581, 0.0
        %1615 = vadd.xlane.f32.xlu0 %v1614
        %v1616 = vpop.xlane.xlu0 %1615
        %v1617 = vsel %vm1589, %v1582, 0.0
        %1618 = vadd.xlane.f32.xlu0 %v1617
        %v1619 = vpop.xlane.xlu0 %1618
        %v1620 = vsel %vm1589, %v1583, 0.0
        %1621 = vadd.xlane.f32.xlu0 %v1620
        %v1622 = vpop.xlane.xlu0 %1621
        %v1623 = vsel %vm1589, %v1584, 0.0
        %1624 = vadd.xlane.f32.xlu0 %v1623
        %v1625 = vpop.xlane.xlu0 %1624
        %v1626 = vsel %vm1589, %v1585, 0.0
        %1627 = vadd.xlane.f32.xlu0 %v1626
        %v1628 = vpop.xlane.xlu0 %1627
        %v1629 = vsel %vm1589, %v1586, 0.0
        %1630 = vadd.xlane.f32.xlu0 %v1629
        %v1631 = vpop.xlane.xlu0 %1630
        %v1632 = vsel %vm1589, %v1587, 0.0
        %1633 = vadd.xlane.f32.xlu0 %v1632
        %v1634 = vpop.xlane.xlu0 %1633
        %v1635 = vsel %vm1589, %v1588, 0.0
        %1636 = vadd.xlane.f32.xlu0 %v1635
        %v1637 = vpop.xlane.xlu0 %1636
        %v1654 = vlaneseq
        %v1655 = vand.u32 %v1654, 127
        %v1656 = vperm.slane %v1592, %v1655
        %v1657 = vadd.s32 %v1655, 4294967288
        %v1658 = vperm.slane %v1595, %v1657
        %vm1659 = vcmask 130112
        %v1660 = vsel %vm1659, %v1658, %v1656
        %v1661 = vperm.slane %v1598, %v1655
        %v1662 = vperm.slane %v1601, %v1657
        %v1663 = vsel %vm1659, %v1662, %v1661
        %v1664 = vperm.slane %v1604, %v1655
        %v1665 = vperm.slane %v1607, %v1657
        %v1666 = vsel %vm1659, %v1665, %v1664
        %v1667 = vperm.slane %v1610, %v1655
        %v1668 = vperm.slane %v1613, %v1657
        %v1669 = vsel %vm1659, %v1668, %v1667
        %v1670 = vperm.slane %v1616, %v1655
        %v1671 = vperm.slane %v1619, %v1657
        %v1672 = vsel %vm1659, %v1671, %v1670
        %v1673 = vperm.slane %v1622, %v1655
        %v1674 = vperm.slane %v1625, %v1657
        %v1675 = vsel %vm1659, %v1674, %v1673
        %v1676 = vperm.slane %v1628, %v1655
        %v1677 = vperm.slane %v1631, %v1657
        %v1678 = vsel %vm1659, %v1677, %v1676
        %v1679 = vperm.slane %v1634, %v1655
        %v1680 = vperm.slane %v1637, %v1657
        %v1681 = vsel %vm1659, %v1680, %v1679
        %vm1682 = vcmask 1041409
        %v1683 = vsel %vm1682, %v1663, %v1660
        %vm1684 = vcmask 1042434
        %v1685 = vsel %vm1684, %v1666, %v1683
        %vm1686 = vcmask 1043459
        %v1687 = vsel %vm1686, %v1669, %v1685
        %vm1688 = vcmask 1044484
        %v1689 = vsel %vm1688, %v1672, %v1687
        %vm1690 = vcmask 1045509
        %v1691 = vsel %vm1690, %v1675, %v1689
        %vm1692 = vcmask 1046534
        %v1693 = vsel %vm1692, %v1678, %v1691
        %vm1694 = vcmask 1047559
        %v1695 = vsel %vm1694, %v1681, %v1693
        %vm1697 = vcmask 130048
        %v1698 = vsel %vm1697, %v1695, -inf
        %1699 = vmax.xlane.f32.xlu0 %v1698
        %v1700 = vpop.xlane.xlu0 %1699
        %v1702 = vperm.slane %v1700, 0
        %v1703 = vperm.slane %v1700, 1
        %v1704 = vperm.slane %v1700, 2
        %v1705 = vperm.slane %v1700, 3
        %v1706 = vperm.slane %v1700, 4
        %v1707 = vperm.slane %v1700, 5
        %v1708 = vperm.slane %v1700, 6
        %v1709 = vperm.slane %v1700, 7
        %v1718 = vsub.f32 %v1592, %v1702
        %v1719 = vsub.f32 %v1595, %v1702
        %v1720 = vsub.f32 %v1598, %v1703
        %v1721 = vsub.f32 %v1601, %v1703
        %v1722 = vsub.f32 %v1604, %v1704
        %v1723 = vsub.f32 %v1607, %v1704
        %v1724 = vsub.f32 %v1610, %v1705
        %v1725 = vsub.f32 %v1613, %v1705
        %v1726 = vsub.f32 %v1616, %v1706
        %v1727 = vsub.f32 %v1619, %v1706
        %v1728 = vsub.f32 %v1622, %v1707
        %v1729 = vsub.f32 %v1625, %v1707
        %v1730 = vsub.f32 %v1628, %v1708
        %v1731 = vsub.f32 %v1631, %v1708
        %v1732 = vsub.f32 %v1634, %v1709
        %v1733 = vsub.f32 %v1637, %v1709
        %v1734 = vmul.f32 %v1718, 1.442695
        %v1735 = vpow.pop %v1734
        %v1736 = vmul.f32 %v1719, 1.442695
        %v1737 = vpow.pop %v1736
        %v1738 = vmul.f32 %v1720, 1.442695
        %v1739 = vpow.pop %v1738
        %v1740 = vmul.f32 %v1721, 1.442695
        %v1741 = vpow.pop %v1740
        %v1742 = vmul.f32 %v1722, 1.442695
        %v1743 = vpow.pop %v1742
        %v1744 = vmul.f32 %v1723, 1.442695
        %v1745 = vpow.pop %v1744
        %v1746 = vmul.f32 %v1724, 1.442695
        %v1747 = vpow.pop %v1746
        %v1748 = vmul.f32 %v1725, 1.442695
        %v1749 = vpow.pop %v1748
        %v1750 = vmul.f32 %v1726, 1.442695
        %v1751 = vpow.pop %v1750
        %v1752 = vmul.f32 %v1727, 1.442695
        %v1753 = vpow.pop %v1752
        %v1754 = vmul.f32 %v1728, 1.442695
        %v1755 = vpow.pop %v1754
        %v1756 = vmul.f32 %v1729, 1.442695
        %v1757 = vpow.pop %v1756
        %v1758 = vmul.f32 %v1730, 1.442695
        %v1759 = vpow.pop %v1758
        %v1760 = vmul.f32 %v1731, 1.442695
        %v1761 = vpow.pop %v1760
        %v1762 = vmul.f32 %v1732, 1.442695
        %v1763 = vpow.pop %v1762
        %v1764 = vmul.f32 %v1733, 1.442695
        %v1765 = vpow.pop %v1764
        %1782 = vset.pattern.permute.xlu0 0
        %1783 = vperm.xlu0 %1782, %v1735
        %v1784 = vpop.permute.xlu0 %1783
        %1785 = vset.pattern.permute.xlu0 0
        %1786 = vperm.xlu0 %1785, %v1737
        %v1787 = vpop.permute.xlu0 %1786
        %1788 = vset.pattern.permute.xlu0 0
        %1789 = vperm.xlu0 %1788, %v1739
        %v1790 = vpop.permute.xlu0 %1789
        %1791 = vset.pattern.permute.xlu0 0
        %1792 = vperm.xlu0 %1791, %v1741
        %v1793 = vpop.permute.xlu0 %1792
        %1794 = vset.pattern.permute.xlu0 0
        %1795 = vperm.xlu0 %1794, %v1743
        %v1796 = vpop.permute.xlu0 %1795
        %1797 = vset.pattern.permute.xlu0 0
        %1798 = vperm.xlu0 %1797, %v1745
        %v1799 = vpop.permute.xlu0 %1798
        %1800 = vset.pattern.permute.xlu0 0
        %1801 = vperm.xlu0 %1800, %v1747
        %v1802 = vpop.permute.xlu0 %1801
        %1803 = vset.pattern.permute.xlu0 0
        %1804 = vperm.xlu0 %1803, %v1749
        %v1805 = vpop.permute.xlu0 %1804
        %1806 = vset.pattern.permute.xlu0 0
        %1807 = vperm.xlu0 %1806, %v1751
        %v1808 = vpop.permute.xlu0 %1807
        %1809 = vset.pattern.permute.xlu0 0
        %1810 = vperm.xlu0 %1809, %v1753
        %v1811 = vpop.permute.xlu0 %1810
        %1812 = vset.pattern.permute.xlu0 0
        %1813 = vperm.xlu0 %1812, %v1755
        %v1814 = vpop.permute.xlu0 %1813
        %1815 = vset.pattern.permute.xlu0 0
        %1816 = vperm.xlu0 %1815, %v1757
        %v1817 = vpop.permute.xlu0 %1816
        %1818 = vset.pattern.permute.xlu0 0
        %1819 = vperm.xlu0 %1818, %v1759
        %v1820 = vpop.permute.xlu0 %1819
        %1821 = vset.pattern.permute.xlu0 0
        %1822 = vperm.xlu0 %1821, %v1761
        %v1823 = vpop.permute.xlu0 %1822
        %1824 = vset.pattern.permute.xlu0 0
        %1825 = vperm.xlu0 %1824, %v1763
        %v1826 = vpop.permute.xlu0 %1825
        %1827 = vset.pattern.permute.xlu0 0
        %1828 = vperm.xlu0 %1827, %v1765
        %v1829 = vpop.permute.xlu0 %1828
        %v1830 = vperm.slane %v1784, %v1655
        %v1831 = vperm.slane %v1787, %v1657
        %v1832 = vsel %vm1659, %v1831, %v1830
        %v1833 = vperm.slane %v1790, %v1655
        %v1834 = vperm.slane %v1793, %v1657
        %v1835 = vsel %vm1659, %v1834, %v1833
        %v1836 = vperm.slane %v1796, %v1655
        %v1837 = vperm.slane %v1799, %v1657
        %v1838 = vsel %vm1659, %v1837, %v1836
        %v1839 = vperm.slane %v1802, %v1655
        %v1840 = vperm.slane %v1805, %v1657
        %v1841 = vsel %vm1659, %v1840, %v1839
        %v1842 = vperm.slane %v1808, %v1655
        %v1843 = vperm.slane %v1811, %v1657
        %v1844 = vsel %vm1659, %v1843, %v1842
        %v1845 = vperm.slane %v1814, %v1655
        %v1846 = vperm.slane %v1817, %v1657
        %v1847 = vsel %vm1659, %v1846, %v1845
        %v1848 = vperm.slane %v1820, %v1655
        %v1849 = vperm.slane %v1823, %v1657
        %v1850 = vsel %vm1659, %v1849, %v1848
        %v1851 = vperm.slane %v1826, %v1655
        %v1852 = vperm.slane %v1829, %v1657
        %v1853 = vsel %vm1659, %v1852, %v1851
        %v1854 = vsel %vm1682, %v1835, %v1832
        %v1855 = vsel %vm1684, %v1838, %v1854
        %v1856 = vsel %vm1686, %v1841, %v1855
        %v1857 = vsel %vm1688, %v1844, %v1856
        %v1858 = vsel %vm1690, %v1847, %v1857
        %v1859 = vsel %vm1692, %v1850, %v1858
        %v1860 = vsel %vm1694, %v1853, %v1859
        %v1862 = vsel %vm1697, %v1860, 0.0
        %1863 = vadd.xlane.f32.xlu0 %v1862
        %v1864 = vpop.xlane.xlu0 %1863
        %v1865 = vrcp.pop %v1864
        %v1867 = vperm.slane %v1865, 0
        %v1868 = vperm.slane %v1865, 1
        %v1869 = vperm.slane %v1865, 2
        %v1870 = vperm.slane %v1865, 3
        %v1871 = vperm.slane %v1865, 4
        %v1872 = vperm.slane %v1865, 5
        %v1873 = vperm.slane %v1865, 6
        %v1874 = vperm.slane %v1865, 7
        %v1883 = vmul.f32 %v1735, %v1867
        %v1884 = vmul.f32 %v1737, %v1867
        %v1885 = vmul.f32 %v1739, %v1868
        %v1886 = vmul.f32 %v1741, %v1868
        %v1887 = vmul.f32 %v1743, %v1869
        %v1888 = vmul.f32 %v1745, %v1869
        %v1889 = vmul.f32 %v1747, %v1870
        %v1890 = vmul.f32 %v1749, %v1870
        %v1891 = vmul.f32 %v1751, %v1871
        %v1892 = vmul.f32 %v1753, %v1871
        %v1893 = vmul.f32 %v1755, %v1872
        %v1894 = vmul.f32 %v1757, %v1872
        %v1895 = vmul.f32 %v1759, %v1873
        %v1896 = vmul.f32 %v1761, %v1873
        %v1897 = vmul.f32 %v1763, %v1874
        %v1898 = vmul.f32 %v1765, %v1874
        %1900 = vset.pattern.permute.xlu0 0
        %1901 = vperm.xlu0 %1900, %v1883
        %v1902 = vpop.permute.xlu0 %1901
        %1905 = vset.pattern.permute.xlu0 0
        %1906 = vperm.xlu0 %1905, %v1884
        %v1907 = vpop.permute.xlu0 %1906
        %1910 = vset.pattern.permute.xlu0 0
        %1911 = vperm.xlu0 %1910, %v1885
        %v1912 = vpop.permute.xlu0 %1911
        %1915 = vset.pattern.permute.xlu0 0
        %1916 = vperm.xlu0 %1915, %v1886
        %v1917 = vpop.permute.xlu0 %1916
        %1920 = vset.pattern.permute.xlu0 0
        %1921 = vperm.xlu0 %1920, %v1887
        %v1922 = vpop.permute.xlu0 %1921
        %1925 = vset.pattern.permute.xlu0 0
        %1926 = vperm.xlu0 %1925, %v1888
        %v1927 = vpop.permute.xlu0 %1926
        %1930 = vset.pattern.permute.xlu0 0
        %1931 = vperm.xlu0 %1930, %v1889
        %v1932 = vpop.permute.xlu0 %1931
        %1935 = vset.pattern.permute.xlu0 0
        %1936 = vperm.xlu0 %1935, %v1890
        %v1937 = vpop.permute.xlu0 %1936
        %1940 = vset.pattern.permute.xlu0 0
        %1941 = vperm.xlu0 %1940, %v1891
        %v1942 = vpop.permute.xlu0 %1941
        %1945 = vset.pattern.permute.xlu0 0
        %1946 = vperm.xlu0 %1945, %v1892
        %v1947 = vpop.permute.xlu0 %1946
        %1950 = vset.pattern.permute.xlu0 0
        %1951 = vperm.xlu0 %1950, %v1893
        %v1952 = vpop.permute.xlu0 %1951
        %1955 = vset.pattern.permute.xlu0 0
        %1956 = vperm.xlu0 %1955, %v1894
        %v1957 = vpop.permute.xlu0 %1956
        %1960 = vset.pattern.permute.xlu0 0
        %1961 = vperm.xlu0 %1960, %v1895
        %v1962 = vpop.permute.xlu0 %1961
        %1965 = vset.pattern.permute.xlu0 0
        %1966 = vperm.xlu0 %1965, %v1896
        %v1967 = vpop.permute.xlu0 %1966
        %1970 = vset.pattern.permute.xlu0 0
        %1971 = vperm.xlu0 %1970, %v1897
        %v1972 = vpop.permute.xlu0 %1971
        %1975 = vset.pattern.permute.xlu0 0
        %1976 = vperm.xlu0 %1975, %v1898
        %v1977 = vpop.permute.xlu0 %1976
        %v1979 = vmul.f32 %v1902, %v1517
        %v1980 = vmul.f32 %v1907, %v1519
        %v1981 = vmul.f32 %v1912, %v1521
        %v1982 = vmul.f32 %v1917, %v1523
        %v1983 = vmul.f32 %v1922, %v1525
        %v1984 = vmul.f32 %v1927, %v1527
        %v1985 = vmul.f32 %v1932, %v1529
        %v1986 = vmul.f32 %v1937, %v1531
        %v1987 = vmul.f32 %v1942, %v1533
        %v1988 = vmul.f32 %v1947, %v1535
        %v1989 = vmul.f32 %v1952, %v1537
        %v1990 = vmul.f32 %v1957, %v1539
        %v1991 = vmul.f32 %v1962, %v1541
        %v1992 = vmul.f32 %v1967, %v1543
        %v1993 = vmul.f32 %v1972, %v1545
        %v1994 = vmul.f32 %v1977, %v1547
        %v1995 = vsel %vm1589, %v1979, 0.0
        %v1996 = vsel %vm1589, %v1980, 0.0
        %v1997 = vadd.f32 %v1995, %v1996
        %v1998 = vrot.slane %v1997, 4
        %v1999 = vadd.f32 %v1997, %v1998
        %v2000 = vrot.slane %v1999, 2
        %v2001 = vadd.f32 %v1999, %v2000
        %v2002 = vrot.slane %v2001, 1
        %v2003 = vadd.f32 %v2001, %v2002
        %v2004 = vsel %vm1589, %v1981, 0.0
        %v2005 = vsel %vm1589, %v1982, 0.0
        %v2006 = vadd.f32 %v2004, %v2005
        %v2007 = vrot.slane %v2006, 4
        %v2008 = vadd.f32 %v2006, %v2007
        %v2009 = vrot.slane %v2008, 2
        %v2010 = vadd.f32 %v2008, %v2009
        %v2011 = vrot.slane %v2010, 1
        %v2012 = vadd.f32 %v2010, %v2011
        %v2013 = vsel %vm1589, %v1983, 0.0
        %v2014 = vsel %vm1589, %v1984, 0.0
        %v2015 = vadd.f32 %v2013, %v2014
        %v2016 = vrot.slane %v2015, 4
        %v2017 = vadd.f32 %v2015, %v2016
        %v2018 = vrot.slane %v2017, 2
        %v2019 = vadd.f32 %v2017, %v2018
        %v2020 = vrot.slane %v2019, 1
        %v2021 = vadd.f32 %v2019, %v2020
        %v2022 = vsel %vm1589, %v1985, 0.0
        %v2023 = vsel %vm1589, %v1986, 0.0
        %v2024 = vadd.f32 %v2022, %v2023
        %v2025 = vrot.slane %v2024, 4
        %v2026 = vadd.f32 %v2024, %v2025
        %v2027 = vrot.slane %v2026, 2
        %v2028 = vadd.f32 %v2026, %v2027
        %v2029 = vrot.slane %v2028, 1
        %v2030 = vadd.f32 %v2028, %v2029
        %v2031 = vsel %vm1589, %v1987, 0.0
        %v2032 = vsel %vm1589, %v1988, 0.0
        %v2033 = vadd.f32 %v2031, %v2032
        %v2034 = vrot.slane %v2033, 4
        %v2035 = vadd.f32 %v2033, %v2034
        %v2036 = vrot.slane %v2035, 2
        %v2037 = vadd.f32 %v2035, %v2036
        %v2038 = vrot.slane %v2037, 1
        %v2039 = vadd.f32 %v2037, %v2038
        %v2040 = vsel %vm1589, %v1989, 0.0
        %v2041 = vsel %vm1589, %v1990, 0.0
        %v2042 = vadd.f32 %v2040, %v2041
        %v2043 = vrot.slane %v2042, 4
        %v2044 = vadd.f32 %v2042, %v2043
        %v2045 = vrot.slane %v2044, 2
        %v2046 = vadd.f32 %v2044, %v2045
        %v2047 = vrot.slane %v2046, 1
        %v2048 = vadd.f32 %v2046, %v2047
        %v2049 = vsel %vm1589, %v1991, 0.0
        %v2050 = vsel %vm1589, %v1992, 0.0
        %v2051 = vadd.f32 %v2049, %v2050
        %v2052 = vrot.slane %v2051, 4
        %v2053 = vadd.f32 %v2051, %v2052
        %v2054 = vrot.slane %v2053, 2
        %v2055 = vadd.f32 %v2053, %v2054
        %v2056 = vrot.slane %v2055, 1
        %v2057 = vadd.f32 %v2055, %v2056
        %v2058 = vsel %vm1589, %v1993, 0.0
        %v2059 = vsel %vm1589, %v1994, 0.0
        %v2060 = vadd.f32 %v2058, %v2059
        %v2061 = vrot.slane %v2060, 4
        %v2062 = vadd.f32 %v2060, %v2061
        %v2063 = vrot.slane %v2062, 2
        %v2064 = vadd.f32 %v2062, %v2063
        %v2065 = vrot.slane %v2064, 1
        %v2066 = vadd.f32 %v2064, %v2065
        %2083 = vrot.lane.b32.xlu0 %v1573, 96
        %v2084 = vpop.permute.xlu0 %2083
        %2085 = vrot.lane.b32.xlu0 %v1574, 96
        %v2086 = vpop.permute.xlu0 %2085
        %2087 = vrot.lane.b32.xlu0 %v1575, 96
        %v2088 = vpop.permute.xlu0 %2087
        %2089 = vrot.lane.b32.xlu0 %v1576, 96
        %v2090 = vpop.permute.xlu0 %2089
        %2091 = vrot.lane.b32.xlu0 %v1577, 96
        %v2092 = vpop.permute.xlu0 %2091
        %2093 = vrot.lane.b32.xlu0 %v1578, 96
        %v2094 = vpop.permute.xlu0 %2093
        %2095 = vrot.lane.b32.xlu0 %v1579, 96
        %v2096 = vpop.permute.xlu0 %2095
        %2097 = vrot.lane.b32.xlu0 %v1580, 96
        %v2098 = vpop.permute.xlu0 %2097
        %2099 = vrot.lane.b32.xlu0 %v1581, 96
        %v2100 = vpop.permute.xlu0 %2099
        %2101 = vrot.lane.b32.xlu0 %v1582, 96
        %v2102 = vpop.permute.xlu0 %2101
        %2103 = vrot.lane.b32.xlu0 %v1583, 96
        %v2104 = vpop.permute.xlu0 %2103
        %2105 = vrot.lane.b32.xlu0 %v1584, 96
        %v2106 = vpop.permute.xlu0 %2105
        %2107 = vrot.lane.b32.xlu0 %v1585, 96
        %v2108 = vpop.permute.xlu0 %2107
        %2109 = vrot.lane.b32.xlu0 %v1586, 96
        %v2110 = vpop.permute.xlu0 %2109
        %2111 = vrot.lane.b32.xlu0 %v1587, 96
        %v2112 = vpop.permute.xlu0 %2111
        %2113 = vrot.lane.b32.xlu0 %v1588, 96
        %v2114 = vpop.permute.xlu0 %2113
        %v2131 = vsel %vm1589, %v2084, 0.0
        %2132 = vadd.xlane.f32.xlu0 %v2131
        %v2133 = vpop.xlane.xlu0 %2132
        %v2134 = vsel %vm1589, %v2086, 0.0
        %2135 = vadd.xlane.f32.xlu0 %v2134
        %v2136 = vpop.xlane.xlu0 %2135
        %v2137 = vsel %vm1589, %v2088, 0.0
        %2138 = vadd.xlane.f32.xlu0 %v2137
        %v2139 = vpop.xlane.xlu0 %2138
        %v2140 = vsel %vm1589, %v2090, 0.0
        %2141 = vadd.xlane.f32.xlu0 %v2140
        %v2142 = vpop.xlane.xlu0 %2141
        %v2143 = vsel %vm1589, %v2092, 0.0
        %2144 = vadd.xlane.f32.xlu0 %v2143
        %v2145 = vpop.xlane.xlu0 %2144
        %v2146 = vsel %vm1589, %v2094, 0.0
        %2147 = vadd.xlane.f32.xlu0 %v2146
        %v2148 = vpop.xlane.xlu0 %2147
        %v2149 = vsel %vm1589, %v2096, 0.0
        %2150 = vadd.xlane.f32.xlu0 %v2149
        %v2151 = vpop.xlane.xlu0 %2150
        %v2152 = vsel %vm1589, %v2098, 0.0
        %2153 = vadd.xlane.f32.xlu0 %v2152
        %v2154 = vpop.xlane.xlu0 %2153
        %v2155 = vsel %vm1589, %v2100, 0.0
        %2156 = vadd.xlane.f32.xlu0 %v2155
        %v2157 = vpop.xlane.xlu0 %2156
        %v2158 = vsel %vm1589, %v2102, 0.0
        %2159 = vadd.xlane.f32.xlu0 %v2158
        %v2160 = vpop.xlane.xlu0 %2159
        %v2161 = vsel %vm1589, %v2104, 0.0
        %2162 = vadd.xlane.f32.xlu0 %v2161
        %v2163 = vpop.xlane.xlu0 %2162
        %v2164 = vsel %vm1589, %v2106, 0.0
        %2165 = vadd.xlane.f32.xlu0 %v2164
        %v2166 = vpop.xlane.xlu0 %2165
        %v2167 = vsel %vm1589, %v2108, 0.0
        %2168 = vadd.xlane.f32.xlu0 %v2167
        %v2169 = vpop.xlane.xlu0 %2168
        %v2170 = vsel %vm1589, %v2110, 0.0
        %2171 = vadd.xlane.f32.xlu0 %v2170
        %v2172 = vpop.xlane.xlu0 %2171
        %v2173 = vsel %vm1589, %v2112, 0.0
        %2174 = vadd.xlane.f32.xlu0 %v2173
        %v2175 = vpop.xlane.xlu0 %2174
        %v2176 = vsel %vm1589, %v2114, 0.0
        %2177 = vadd.xlane.f32.xlu0 %v2176
        %v2178 = vpop.xlane.xlu0 %2177
        %v2195 = vperm.slane %v2133, %v1655
        %v2196 = vperm.slane %v2136, %v1657
        %v2197 = vsel %vm1659, %v2196, %v2195
        %v2198 = vperm.slane %v2139, %v1655
        %v2199 = vperm.slane %v2142, %v1657
        %v2200 = vsel %vm1659, %v2199, %v2198
        %v2201 = vperm.slane %v2145, %v1655
        %v2202 = vperm.slane %v2148, %v1657
        %v2203 = vsel %vm1659, %v2202, %v2201
        %v2204 = vperm.slane %v2151, %v1655
        %v2205 = vperm.slane %v2154, %v1657
        %v2206 = vsel %vm1659, %v2205, %v2204
        %v2207 = vperm.slane %v2157, %v1655
        %v2208 = vperm.slane %v2160, %v1657
        %v2209 = vsel %vm1659, %v2208, %v2207
        %v2210 = vperm.slane %v2163, %v1655
        %v2211 = vperm.slane %v2166, %v1657
        %v2212 = vsel %vm1659, %v2211, %v2210
        %v2213 = vperm.slane %v2169, %v1655
        %v2214 = vperm.slane %v2172, %v1657
        %v2215 = vsel %vm1659, %v2214, %v2213
        %v2216 = vperm.slane %v2175, %v1655
        %v2217 = vperm.slane %v2178, %v1657
        %v2218 = vsel %vm1659, %v2217, %v2216
        %v2219 = vsel %vm1682, %v2200, %v2197
        %v2220 = vsel %vm1684, %v2203, %v2219
        %v2221 = vsel %vm1686, %v2206, %v2220
        %v2222 = vsel %vm1688, %v2209, %v2221
        %v2223 = vsel %vm1690, %v2212, %v2222
        %v2224 = vsel %vm1692, %v2215, %v2223
        %v2225 = vsel %vm1694, %v2218, %v2224
        %v2227 = vsel %vm1697, %v2225, -inf
        %2228 = vmax.xlane.f32.xlu0 %v2227
        %v2229 = vpop.xlane.xlu0 %2228
        %v2231 = vperm.slane %v2229, 0
        %v2232 = vperm.slane %v2229, 1
        %v2233 = vperm.slane %v2229, 2
        %v2234 = vperm.slane %v2229, 3
        %v2235 = vperm.slane %v2229, 4
        %v2236 = vperm.slane %v2229, 5
        %v2237 = vperm.slane %v2229, 6
        %v2238 = vperm.slane %v2229, 7
        %v2247 = vsub.f32 %v2133, %v2231
        %v2248 = vsub.f32 %v2136, %v2231
        %v2249 = vsub.f32 %v2139, %v2232
        %v2250 = vsub.f32 %v2142, %v2232
        %v2251 = vsub.f32 %v2145, %v2233
        %v2252 = vsub.f32 %v2148, %v2233
        %v2253 = vsub.f32 %v2151, %v2234
        %v2254 = vsub.f32 %v2154, %v2234
        %v2255 = vsub.f32 %v2157, %v2235
        %v2256 = vsub.f32 %v2160, %v2235
        %v2257 = vsub.f32 %v2163, %v2236
        %v2258 = vsub.f32 %v2166, %v2236
        %v2259 = vsub.f32 %v2169, %v2237
        %v2260 = vsub.f32 %v2172, %v2237
        %v2261 = vsub.f32 %v2175, %v2238
        %v2262 = vsub.f32 %v2178, %v2238
        %v2263 = vmul.f32 %v2247, 1.442695
        %v2264 = vpow.pop %v2263
        %v2265 = vmul.f32 %v2248, 1.442695
        %v2266 = vpow.pop %v2265
        %v2267 = vmul.f32 %v2249, 1.442695
        %v2268 = vpow.pop %v2267
        %v2269 = vmul.f32 %v2250, 1.442695
        %v2270 = vpow.pop %v2269
        %v2271 = vmul.f32 %v2251, 1.442695
        %v2272 = vpow.pop %v2271
        %v2273 = vmul.f32 %v2252, 1.442695
        %v2274 = vpow.pop %v2273
        %v2275 = vmul.f32 %v2253, 1.442695
        %v2276 = vpow.pop %v2275
        %v2277 = vmul.f32 %v2254, 1.442695
        %v2278 = vpow.pop %v2277
        %v2279 = vmul.f32 %v2255, 1.442695
        %v2280 = vpow.pop %v2279
        %v2281 = vmul.f32 %v2256, 1.442695
        %v2282 = vpow.pop %v2281
        %v2283 = vmul.f32 %v2257, 1.442695
        %v2284 = vpow.pop %v2283
        %v2285 = vmul.f32 %v2258, 1.442695
        %v2286 = vpow.pop %v2285
        %v2287 = vmul.f32 %v2259, 1.442695
        %v2288 = vpow.pop %v2287
        %v2289 = vmul.f32 %v2260, 1.442695
        %v2290 = vpow.pop %v2289
        %v2291 = vmul.f32 %v2261, 1.442695
        %v2292 = vpow.pop %v2291
        %v2293 = vmul.f32 %v2262, 1.442695
        %v2294 = vpow.pop %v2293
        %2311 = vset.pattern.permute.xlu0 0
        %2312 = vperm.xlu0 %2311, %v2264
        %v2313 = vpop.permute.xlu0 %2312
        %2314 = vset.pattern.permute.xlu0 0
        %2315 = vperm.xlu0 %2314, %v2266
        %v2316 = vpop.permute.xlu0 %2315
        %2317 = vset.pattern.permute.xlu0 0
        %2318 = vperm.xlu0 %2317, %v2268
        %v2319 = vpop.permute.xlu0 %2318
        %2320 = vset.pattern.permute.xlu0 0
        %2321 = vperm.xlu0 %2320, %v2270
        %v2322 = vpop.permute.xlu0 %2321
        %2323 = vset.pattern.permute.xlu0 0
        %2324 = vperm.xlu0 %2323, %v2272
        %v2325 = vpop.permute.xlu0 %2324
        %2326 = vset.pattern.permute.xlu0 0
        %2327 = vperm.xlu0 %2326, %v2274
        %v2328 = vpop.permute.xlu0 %2327
        %2329 = vset.pattern.permute.xlu0 0
        %2330 = vperm.xlu0 %2329, %v2276
        %v2331 = vpop.permute.xlu0 %2330
        %2332 = vset.pattern.permute.xlu0 0
        %2333 = vperm.xlu0 %2332, %v2278
        %v2334 = vpop.permute.xlu0 %2333
        %2335 = vset.pattern.permute.xlu0 0
        %2336 = vperm.xlu0 %2335, %v2280
        %v2337 = vpop.permute.xlu0 %2336
        %2338 = vset.pattern.permute.xlu0 0
        %2339 = vperm.xlu0 %2338, %v2282
        %v2340 = vpop.permute.xlu0 %2339
        %2341 = vset.pattern.permute.xlu0 0
        %2342 = vperm.xlu0 %2341, %v2284
        %v2343 = vpop.permute.xlu0 %2342
        %2344 = vset.pattern.permute.xlu0 0
        %2345 = vperm.xlu0 %2344, %v2286
        %v2346 = vpop.permute.xlu0 %2345
        %2347 = vset.pattern.permute.xlu0 0
        %2348 = vperm.xlu0 %2347, %v2288
        %v2349 = vpop.permute.xlu0 %2348
        %2350 = vset.pattern.permute.xlu0 0
        %2351 = vperm.xlu0 %2350, %v2290
        %v2352 = vpop.permute.xlu0 %2351
        %2353 = vset.pattern.permute.xlu0 0
        %2354 = vperm.xlu0 %2353, %v2292
        %v2355 = vpop.permute.xlu0 %2354
        %2356 = vset.pattern.permute.xlu0 0
        %2357 = vperm.xlu0 %2356, %v2294
        %v2358 = vpop.permute.xlu0 %2357
        %v2359 = vperm.slane %v2313, %v1655
        %v2360 = vperm.slane %v2316, %v1657
        %v2361 = vsel %vm1659, %v2360, %v2359
        %v2362 = vperm.slane %v2319, %v1655
        %v2363 = vperm.slane %v2322, %v1657
        %v2364 = vsel %vm1659, %v2363, %v2362
        %v2365 = vperm.slane %v2325, %v1655
        %v2366 = vperm.slane %v2328, %v1657
        %v2367 = vsel %vm1659, %v2366, %v2365
        %v2368 = vperm.slane %v2331, %v1655
        %v2369 = vperm.slane %v2334, %v1657
        %v2370 = vsel %vm1659, %v2369, %v2368
        %v2371 = vperm.slane %v2337, %v1655
        %v2372 = vperm.slane %v2340, %v1657
        %v2373 = vsel %vm1659, %v2372, %v2371
        %v2374 = vperm.slane %v2343, %v1655
        %v2375 = vperm.slane %v2346, %v1657
        %v2376 = vsel %vm1659, %v2375, %v2374
        %v2377 = vperm.slane %v2349, %v1655
        %v2378 = vperm.slane %v2352, %v1657
        %v2379 = vsel %vm1659, %v2378, %v2377
        %v2380 = vperm.slane %v2355, %v1655
        %v2381 = vperm.slane %v2358, %v1657
        %v2382 = vsel %vm1659, %v2381, %v2380
        %v2383 = vsel %vm1682, %v2364, %v2361
        %v2384 = vsel %vm1684, %v2367, %v2383
        %v2385 = vsel %vm1686, %v2370, %v2384
        %v2386 = vsel %vm1688, %v2373, %v2385
        %v2387 = vsel %vm1690, %v2376, %v2386
        %v2388 = vsel %vm1692, %v2379, %v2387
        %v2389 = vsel %vm1694, %v2382, %v2388
        %v2391 = vsel %vm1697, %v2389, 0.0
        %2392 = vadd.xlane.f32.xlu0 %v2391
        %v2393 = vpop.xlane.xlu0 %2392
        %v2394 = vrcp.pop %v2393
        %v2396 = vperm.slane %v2394, 0
        %v2397 = vperm.slane %v2394, 1
        %v2398 = vperm.slane %v2394, 2
        %v2399 = vperm.slane %v2394, 3
        %v2400 = vperm.slane %v2394, 4
        %v2401 = vperm.slane %v2394, 5
        %v2402 = vperm.slane %v2394, 6
        %v2403 = vperm.slane %v2394, 7
        %v2412 = vmul.f32 %v2264, %v2396
        %v2413 = vmul.f32 %v2266, %v2396
        %v2414 = vmul.f32 %v2268, %v2397
        %v2415 = vmul.f32 %v2270, %v2397
        %v2416 = vmul.f32 %v2272, %v2398
        %v2417 = vmul.f32 %v2274, %v2398
        %v2418 = vmul.f32 %v2276, %v2399
        %v2419 = vmul.f32 %v2278, %v2399
        %v2420 = vmul.f32 %v2280, %v2400
        %v2421 = vmul.f32 %v2282, %v2400
        %v2422 = vmul.f32 %v2284, %v2401
        %v2423 = vmul.f32 %v2286, %v2401
        %v2424 = vmul.f32 %v2288, %v2402
        %v2425 = vmul.f32 %v2290, %v2402
        %v2426 = vmul.f32 %v2292, %v2403
        %v2427 = vmul.f32 %v2294, %v2403
        %2429 = vset.pattern.permute.xlu0 0
        %2430 = vperm.xlu0 %2429, %v2412
        %v2431 = vpop.permute.xlu0 %2430
        %2434 = vset.pattern.permute.xlu0 0
        %2435 = vperm.xlu0 %2434, %v2413
        %v2436 = vpop.permute.xlu0 %2435
        %2439 = vset.pattern.permute.xlu0 0
        %2440 = vperm.xlu0 %2439, %v2414
        %v2441 = vpop.permute.xlu0 %2440
        %2444 = vset.pattern.permute.xlu0 0
        %2445 = vperm.xlu0 %2444, %v2415
        %v2446 = vpop.permute.xlu0 %2445
        %2449 = vset.pattern.permute.xlu0 0
        %2450 = vperm.xlu0 %2449, %v2416
        %v2451 = vpop.permute.xlu0 %2450
        %2454 = vset.pattern.permute.xlu0 0
        %2455 = vperm.xlu0 %2454, %v2417
        %v2456 = vpop.permute.xlu0 %2455
        %2459 = vset.pattern.permute.xlu0 0
        %2460 = vperm.xlu0 %2459, %v2418
        %v2461 = vpop.permute.xlu0 %2460
        %2464 = vset.pattern.permute.xlu0 0
        %2465 = vperm.xlu0 %2464, %v2419
        %v2466 = vpop.permute.xlu0 %2465
        %2469 = vset.pattern.permute.xlu0 0
        %2470 = vperm.xlu0 %2469, %v2420
        %v2471 = vpop.permute.xlu0 %2470
        %2474 = vset.pattern.permute.xlu0 0
        %2475 = vperm.xlu0 %2474, %v2421
        %v2476 = vpop.permute.xlu0 %2475
        %2479 = vset.pattern.permute.xlu0 0
        %2480 = vperm.xlu0 %2479, %v2422
        %v2481 = vpop.permute.xlu0 %2480
        %2484 = vset.pattern.permute.xlu0 0
        %2485 = vperm.xlu0 %2484, %v2423
        %v2486 = vpop.permute.xlu0 %2485
        %2489 = vset.pattern.permute.xlu0 0
        %2490 = vperm.xlu0 %2489, %v2424
        %v2491 = vpop.permute.xlu0 %2490
        %2494 = vset.pattern.permute.xlu0 0
        %2495 = vperm.xlu0 %2494, %v2425
        %v2496 = vpop.permute.xlu0 %2495
        %2499 = vset.pattern.permute.xlu0 0
        %2500 = vperm.xlu0 %2499, %v2426
        %v2501 = vpop.permute.xlu0 %2500
        %2504 = vset.pattern.permute.xlu0 0
        %2505 = vperm.xlu0 %2504, %v2427
        %v2506 = vpop.permute.xlu0 %2505
        %v2508 = vmul.f32 %v2431, %v1517
        %v2509 = vmul.f32 %v2436, %v1519
        %v2510 = vmul.f32 %v2441, %v1521
        %v2511 = vmul.f32 %v2446, %v1523
        %v2512 = vmul.f32 %v2451, %v1525
        %v2513 = vmul.f32 %v2456, %v1527
        %v2514 = vmul.f32 %v2461, %v1529
        %v2515 = vmul.f32 %v2466, %v1531
        %v2516 = vmul.f32 %v2471, %v1533
        %v2517 = vmul.f32 %v2476, %v1535
        %v2518 = vmul.f32 %v2481, %v1537
        %v2519 = vmul.f32 %v2486, %v1539
        %v2520 = vmul.f32 %v2491, %v1541
        %v2521 = vmul.f32 %v2496, %v1543
        %v2522 = vmul.f32 %v2501, %v1545
        %v2523 = vmul.f32 %v2506, %v1547
        %vm2524 = vcmask 523520
        %v2525 = vsel %vm2524, %v2508, 0.0
        %v2526 = vsel %vm2524, %v2509, 0.0
        %v2527 = vadd.f32 %v2525, %v2526
        %v2528 = vrot.slane %v2527, 4
        %v2529 = vadd.f32 %v2527, %v2528
        %v2530 = vrot.slane %v2529, 2
        %v2531 = vadd.f32 %v2529, %v2530
        %v2532 = vrot.slane %v2531, 1
        %v2533 = vadd.f32 %v2531, %v2532
        %v2534 = vsel %vm2524, %v2510, 0.0
        %v2535 = vsel %vm2524, %v2511, 0.0
        %v2536 = vadd.f32 %v2534, %v2535
        %v2537 = vrot.slane %v2536, 4
        %v2538 = vadd.f32 %v2536, %v2537
        %v2539 = vrot.slane %v2538, 2
        %v2540 = vadd.f32 %v2538, %v2539
        %v2541 = vrot.slane %v2540, 1
        %v2542 = vadd.f32 %v2540, %v2541
        %v2543 = vsel %vm2524, %v2512, 0.0
        %v2544 = vsel %vm2524, %v2513, 0.0
        %v2545 = vadd.f32 %v2543, %v2544
        %v2546 = vrot.slane %v2545, 4
        %v2547 = vadd.f32 %v2545, %v2546
        %v2548 = vrot.slane %v2547, 2
        %v2549 = vadd.f32 %v2547, %v2548
        %v2550 = vrot.slane %v2549, 1
        %v2551 = vadd.f32 %v2549, %v2550
        %v2552 = vsel %vm2524, %v2514, 0.0
        %v2553 = vsel %vm2524, %v2515, 0.0
        %v2554 = vadd.f32 %v2552, %v2553
        %v2555 = vrot.slane %v2554, 4
        %v2556 = vadd.f32 %v2554, %v2555
        %v2557 = vrot.slane %v2556, 2
        %v2558 = vadd.f32 %v2556, %v2557
        %v2559 = vrot.slane %v2558, 1
        %v2560 = vadd.f32 %v2558, %v2559
        %v2561 = vsel %vm2524, %v2516, 0.0
        %v2562 = vsel %vm2524, %v2517, 0.0
        %v2563 = vadd.f32 %v2561, %v2562
        %v2564 = vrot.slane %v2563, 4
        %v2565 = vadd.f32 %v2563, %v2564
        %v2566 = vrot.slane %v2565, 2
        %v2567 = vadd.f32 %v2565, %v2566
        %v2568 = vrot.slane %v2567, 1
        %v2569 = vadd.f32 %v2567, %v2568
        %v2570 = vsel %vm2524, %v2518, 0.0
        %v2571 = vsel %vm2524, %v2519, 0.0
        %v2572 = vadd.f32 %v2570, %v2571
        %v2573 = vrot.slane %v2572, 4
        %v2574 = vadd.f32 %v2572, %v2573
        %v2575 = vrot.slane %v2574, 2
        %v2576 = vadd.f32 %v2574, %v2575
        %v2577 = vrot.slane %v2576, 1
        %v2578 = vadd.f32 %v2576, %v2577
        %v2579 = vsel %vm2524, %v2520, 0.0
        %v2580 = vsel %vm2524, %v2521, 0.0
        %v2581 = vadd.f32 %v2579, %v2580
        %v2582 = vrot.slane %v2581, 4
        %v2583 = vadd.f32 %v2581, %v2582
        %v2584 = vrot.slane %v2583, 2
        %v2585 = vadd.f32 %v2583, %v2584
        %v2586 = vrot.slane %v2585, 1
        %v2587 = vadd.f32 %v2585, %v2586
        %v2588 = vsel %vm2524, %v2522, 0.0
        %v2589 = vsel %vm2524, %v2523, 0.0
        %v2590 = vadd.f32 %v2588, %v2589
        %v2591 = vrot.slane %v2590, 4
        %v2592 = vadd.f32 %v2590, %v2591
        %v2593 = vrot.slane %v2592, 2
        %v2594 = vadd.f32 %v2592, %v2593
        %v2595 = vrot.slane %v2594, 1
        %v2596 = vadd.f32 %v2594, %v2595
        %2597 = vrot.lane.b32.xlu0 %v1573, 64
        %v2598 = vpop.permute.xlu0 %2597
        %2599 = vrot.lane.b32.xlu0 %v1574, 64
        %v2600 = vpop.permute.xlu0 %2599
        %2601 = vrot.lane.b32.xlu0 %v1575, 64
        %v2602 = vpop.permute.xlu0 %2601
        %2603 = vrot.lane.b32.xlu0 %v1576, 64
        %v2604 = vpop.permute.xlu0 %2603
        %2605 = vrot.lane.b32.xlu0 %v1577, 64
        %v2606 = vpop.permute.xlu0 %2605
        %2607 = vrot.lane.b32.xlu0 %v1578, 64
        %v2608 = vpop.permute.xlu0 %2607
        %2609 = vrot.lane.b32.xlu0 %v1579, 64
        %v2610 = vpop.permute.xlu0 %2609
        %2611 = vrot.lane.b32.xlu0 %v1580, 64
        %v2612 = vpop.permute.xlu0 %2611
        %2613 = vrot.lane.b32.xlu0 %v1581, 64
        %v2614 = vpop.permute.xlu0 %2613
        %2615 = vrot.lane.b32.xlu0 %v1582, 64
        %v2616 = vpop.permute.xlu0 %2615
        %2617 = vrot.lane.b32.xlu0 %v1583, 64
        %v2618 = vpop.permute.xlu0 %2617
        %2619 = vrot.lane.b32.xlu0 %v1584, 64
        %v2620 = vpop.permute.xlu0 %2619
        %2621 = vrot.lane.b32.xlu0 %v1585, 64
        %v2622 = vpop.permute.xlu0 %2621
        %2623 = vrot.lane.b32.xlu0 %v1586, 64
        %v2624 = vpop.permute.xlu0 %2623
        %2625 = vrot.lane.b32.xlu0 %v1587, 64
        %v2626 = vpop.permute.xlu0 %2625
        %2627 = vrot.lane.b32.xlu0 %v1588, 64
        %v2628 = vpop.permute.xlu0 %2627
        %v2645 = vsel %vm1589, %v2598, 0.0
        %2646 = vadd.xlane.f32.xlu0 %v2645
        %v2647 = vpop.xlane.xlu0 %2646
        %v2648 = vsel %vm1589, %v2600, 0.0
        %2649 = vadd.xlane.f32.xlu0 %v2648
        %v2650 = vpop.xlane.xlu0 %2649
        %v2651 = vsel %vm1589, %v2602, 0.0
        %2652 = vadd.xlane.f32.xlu0 %v2651
        %v2653 = vpop.xlane.xlu0 %2652
        %v2654 = vsel %vm1589, %v2604, 0.0
        %2655 = vadd.xlane.f32.xlu0 %v2654
        %v2656 = vpop.xlane.xlu0 %2655
        %v2657 = vsel %vm1589, %v2606, 0.0
        %2658 = vadd.xlane.f32.xlu0 %v2657
        %v2659 = vpop.xlane.xlu0 %2658
        %v2660 = vsel %vm1589, %v2608, 0.0
        %2661 = vadd.xlane.f32.xlu0 %v2660
        %v2662 = vpop.xlane.xlu0 %2661
        %v2663 = vsel %vm1589, %v2610, 0.0
        %2664 = vadd.xlane.f32.xlu0 %v2663
        %v2665 = vpop.xlane.xlu0 %2664
        %v2666 = vsel %vm1589, %v2612, 0.0
        %2667 = vadd.xlane.f32.xlu0 %v2666
        %v2668 = vpop.xlane.xlu0 %2667
        %v2669 = vsel %vm1589, %v2614, 0.0
        %2670 = vadd.xlane.f32.xlu0 %v2669
        %v2671 = vpop.xlane.xlu0 %2670
        %v2672 = vsel %vm1589, %v2616, 0.0
        %2673 = vadd.xlane.f32.xlu0 %v2672
        %v2674 = vpop.xlane.xlu0 %2673
        %v2675 = vsel %vm1589, %v2618, 0.0
        %2676 = vadd.xlane.f32.xlu0 %v2675
        %v2677 = vpop.xlane.xlu0 %2676
        %v2678 = vsel %vm1589, %v2620, 0.0
        %2679 = vadd.xlane.f32.xlu0 %v2678
        %v2680 = vpop.xlane.xlu0 %2679
        %v2681 = vsel %vm1589, %v2622, 0.0
        %2682 = vadd.xlane.f32.xlu0 %v2681
        %v2683 = vpop.xlane.xlu0 %2682
        %v2684 = vsel %vm1589, %v2624, 0.0
        %2685 = vadd.xlane.f32.xlu0 %v2684
        %v2686 = vpop.xlane.xlu0 %2685
        %v2687 = vsel %vm1589, %v2626, 0.0
        %2688 = vadd.xlane.f32.xlu0 %v2687
        %v2689 = vpop.xlane.xlu0 %2688
        %v2690 = vsel %vm1589, %v2628, 0.0
        %2691 = vadd.xlane.f32.xlu0 %v2690
        %v2692 = vpop.xlane.xlu0 %2691
        %v2709 = vperm.slane %v2647, %v1655
        %v2710 = vperm.slane %v2650, %v1657
        %v2711 = vsel %vm1659, %v2710, %v2709
        %v2712 = vperm.slane %v2653, %v1655
        %v2713 = vperm.slane %v2656, %v1657
        %v2714 = vsel %vm1659, %v2713, %v2712
        %v2715 = vperm.slane %v2659, %v1655
        %v2716 = vperm.slane %v2662, %v1657
        %v2717 = vsel %vm1659, %v2716, %v2715
        %v2718 = vperm.slane %v2665, %v1655
        %v2719 = vperm.slane %v2668, %v1657
        %v2720 = vsel %vm1659, %v2719, %v2718
        %v2721 = vperm.slane %v2671, %v1655
        %v2722 = vperm.slane %v2674, %v1657
        %v2723 = vsel %vm1659, %v2722, %v2721
        %v2724 = vperm.slane %v2677, %v1655
        %v2725 = vperm.slane %v2680, %v1657
        %v2726 = vsel %vm1659, %v2725, %v2724
        %v2727 = vperm.slane %v2683, %v1655
        %v2728 = vperm.slane %v2686, %v1657
        %v2729 = vsel %vm1659, %v2728, %v2727
        %v2730 = vperm.slane %v2689, %v1655
        %v2731 = vperm.slane %v2692, %v1657
        %v2732 = vsel %vm1659, %v2731, %v2730
        %v2733 = vsel %vm1682, %v2714, %v2711
        %v2734 = vsel %vm1684, %v2717, %v2733
        %v2735 = vsel %vm1686, %v2720, %v2734
        %v2736 = vsel %vm1688, %v2723, %v2735
        %v2737 = vsel %vm1690, %v2726, %v2736
        %v2738 = vsel %vm1692, %v2729, %v2737
        %v2739 = vsel %vm1694, %v2732, %v2738
        %v2741 = vsel %vm1697, %v2739, -inf
        %2742 = vmax.xlane.f32.xlu0 %v2741
        %v2743 = vpop.xlane.xlu0 %2742
        %v2745 = vperm.slane %v2743, 0
        %v2746 = vperm.slane %v2743, 1
        %v2747 = vperm.slane %v2743, 2
        %v2748 = vperm.slane %v2743, 3
        %v2749 = vperm.slane %v2743, 4
        %v2750 = vperm.slane %v2743, 5
        %v2751 = vperm.slane %v2743, 6
        %v2752 = vperm.slane %v2743, 7
        %v2761 = vsub.f32 %v2647, %v2745
        %v2762 = vsub.f32 %v2650, %v2745
        %v2763 = vsub.f32 %v2653, %v2746
        %v2764 = vsub.f32 %v2656, %v2746
        %v2765 = vsub.f32 %v2659, %v2747
        %v2766 = vsub.f32 %v2662, %v2747
        %v2767 = vsub.f32 %v2665, %v2748
        %v2768 = vsub.f32 %v2668, %v2748
        %v2769 = vsub.f32 %v2671, %v2749
        %v2770 = vsub.f32 %v2674, %v2749
        %v2771 = vsub.f32 %v2677, %v2750
        %v2772 = vsub.f32 %v2680, %v2750
        %v2773 = vsub.f32 %v2683, %v2751
        %v2774 = vsub.f32 %v2686, %v2751
        %v2775 = vsub.f32 %v2689, %v2752
        %v2776 = vsub.f32 %v2692, %v2752
        %v2777 = vmul.f32 %v2761, 1.442695
        %v2778 = vpow.pop %v2777
        %v2779 = vmul.f32 %v2762, 1.442695
        %v2780 = vpow.pop %v2779
        %v2781 = vmul.f32 %v2763, 1.442695
        %v2782 = vpow.pop %v2781
        %v2783 = vmul.f32 %v2764, 1.442695
        %v2784 = vpow.pop %v2783
        %v2785 = vmul.f32 %v2765, 1.442695
        %v2786 = vpow.pop %v2785
        %v2787 = vmul.f32 %v2766, 1.442695
        %v2788 = vpow.pop %v2787
        %v2789 = vmul.f32 %v2767, 1.442695
        %v2790 = vpow.pop %v2789
        %v2791 = vmul.f32 %v2768, 1.442695
        %v2792 = vpow.pop %v2791
        %v2793 = vmul.f32 %v2769, 1.442695
        %v2794 = vpow.pop %v2793
        %v2795 = vmul.f32 %v2770, 1.442695
        %v2796 = vpow.pop %v2795
        %v2797 = vmul.f32 %v2771, 1.442695
        %v2798 = vpow.pop %v2797
        %v2799 = vmul.f32 %v2772, 1.442695
        %v2800 = vpow.pop %v2799
        %v2801 = vmul.f32 %v2773, 1.442695
        %v2802 = vpow.pop %v2801
        %v2803 = vmul.f32 %v2774, 1.442695
        %v2804 = vpow.pop %v2803
        %v2805 = vmul.f32 %v2775, 1.442695
        %v2806 = vpow.pop %v2805
        %v2807 = vmul.f32 %v2776, 1.442695
        %v2808 = vpow.pop %v2807
        %2825 = vset.pattern.permute.xlu0 0
        %2826 = vperm.xlu0 %2825, %v2778
        %v2827 = vpop.permute.xlu0 %2826
        %2828 = vset.pattern.permute.xlu0 0
        %2829 = vperm.xlu0 %2828, %v2780
        %v2830 = vpop.permute.xlu0 %2829
        %2831 = vset.pattern.permute.xlu0 0
        %2832 = vperm.xlu0 %2831, %v2782
        %v2833 = vpop.permute.xlu0 %2832
        %2834 = vset.pattern.permute.xlu0 0
        %2835 = vperm.xlu0 %2834, %v2784
        %v2836 = vpop.permute.xlu0 %2835
        %2837 = vset.pattern.permute.xlu0 0
        %2838 = vperm.xlu0 %2837, %v2786
        %v2839 = vpop.permute.xlu0 %2838
        %2840 = vset.pattern.permute.xlu0 0
        %2841 = vperm.xlu0 %2840, %v2788
        %v2842 = vpop.permute.xlu0 %2841
        %2843 = vset.pattern.permute.xlu0 0
        %2844 = vperm.xlu0 %2843, %v2790
        %v2845 = vpop.permute.xlu0 %2844
        %2846 = vset.pattern.permute.xlu0 0
        %2847 = vperm.xlu0 %2846, %v2792
        %v2848 = vpop.permute.xlu0 %2847
        %2849 = vset.pattern.permute.xlu0 0
        %2850 = vperm.xlu0 %2849, %v2794
        %v2851 = vpop.permute.xlu0 %2850
        %2852 = vset.pattern.permute.xlu0 0
        %2853 = vperm.xlu0 %2852, %v2796
        %v2854 = vpop.permute.xlu0 %2853
        %2855 = vset.pattern.permute.xlu0 0
        %2856 = vperm.xlu0 %2855, %v2798
        %v2857 = vpop.permute.xlu0 %2856
        %2858 = vset.pattern.permute.xlu0 0
        %2859 = vperm.xlu0 %2858, %v2800
        %v2860 = vpop.permute.xlu0 %2859
        %2861 = vset.pattern.permute.xlu0 0
        %2862 = vperm.xlu0 %2861, %v2802
        %v2863 = vpop.permute.xlu0 %2862
        %2864 = vset.pattern.permute.xlu0 0
        %2865 = vperm.xlu0 %2864, %v2804
        %v2866 = vpop.permute.xlu0 %2865
        %2867 = vset.pattern.permute.xlu0 0
        %2868 = vperm.xlu0 %2867, %v2806
        %v2869 = vpop.permute.xlu0 %2868
        %2870 = vset.pattern.permute.xlu0 0
        %2871 = vperm.xlu0 %2870, %v2808
        %v2872 = vpop.permute.xlu0 %2871
        %v2873 = vperm.slane %v2827, %v1655
        %v2874 = vperm.slane %v2830, %v1657
        %v2875 = vsel %vm1659, %v2874, %v2873
        %v2876 = vperm.slane %v2833, %v1655
        %v2877 = vperm.slane %v2836, %v1657
        %v2878 = vsel %vm1659, %v2877, %v2876
        %v2879 = vperm.slane %v2839, %v1655
        %v2880 = vperm.slane %v2842, %v1657
        %v2881 = vsel %vm1659, %v2880, %v2879
        %v2882 = vperm.slane %v2845, %v1655
        %v2883 = vperm.slane %v2848, %v1657
        %v2884 = vsel %vm1659, %v2883, %v2882
        %v2885 = vperm.slane %v2851, %v1655
        %v2886 = vperm.slane %v2854, %v1657
        %v2887 = vsel %vm1659, %v2886, %v2885
        %v2888 = vperm.slane %v2857, %v1655
        %v2889 = vperm.slane %v2860, %v1657
        %v2890 = vsel %vm1659, %v2889, %v2888
        %v2891 = vperm.slane %v2863, %v1655
        %v2892 = vperm.slane %v2866, %v1657
        %v2893 = vsel %vm1659, %v2892, %v2891
        %v2894 = vperm.slane %v2869, %v1655
        %v2895 = vperm.slane %v2872, %v1657
        %v2896 = vsel %vm1659, %v2895, %v2894
        %v2897 = vsel %vm1682, %v2878, %v2875
        %v2898 = vsel %vm1684, %v2881, %v2897
        %v2899 = vsel %vm1686, %v2884, %v2898
        %v2900 = vsel %vm1688, %v2887, %v2899
        %v2901 = vsel %vm1690, %v2890, %v2900
        %v2902 = vsel %vm1692, %v2893, %v2901
        %v2903 = vsel %vm1694, %v2896, %v2902
        %v2905 = vsel %vm1697, %v2903, 0.0
        %2906 = vadd.xlane.f32.xlu0 %v2905
        %v2907 = vpop.xlane.xlu0 %2906
        %v2908 = vrcp.pop %v2907
        %v2910 = vperm.slane %v2908, 0
        %v2911 = vperm.slane %v2908, 1
        %v2912 = vperm.slane %v2908, 2
        %v2913 = vperm.slane %v2908, 3
        %v2914 = vperm.slane %v2908, 4
        %v2915 = vperm.slane %v2908, 5
        %v2916 = vperm.slane %v2908, 6
        %v2917 = vperm.slane %v2908, 7
        %v2926 = vmul.f32 %v2778, %v2910
        %v2927 = vmul.f32 %v2780, %v2910
        %v2928 = vmul.f32 %v2782, %v2911
        %v2929 = vmul.f32 %v2784, %v2911
        %v2930 = vmul.f32 %v2786, %v2912
        %v2931 = vmul.f32 %v2788, %v2912
        %v2932 = vmul.f32 %v2790, %v2913
        %v2933 = vmul.f32 %v2792, %v2913
        %v2934 = vmul.f32 %v2794, %v2914
        %v2935 = vmul.f32 %v2796, %v2914
        %v2936 = vmul.f32 %v2798, %v2915
        %v2937 = vmul.f32 %v2800, %v2915
        %v2938 = vmul.f32 %v2802, %v2916
        %v2939 = vmul.f32 %v2804, %v2916
        %v2940 = vmul.f32 %v2806, %v2917
        %v2941 = vmul.f32 %v2808, %v2917
        %2943 = vset.pattern.permute.xlu0 0
        %2944 = vperm.xlu0 %2943, %v2926
        %v2945 = vpop.permute.xlu0 %2944
        %2948 = vset.pattern.permute.xlu0 0
        %2949 = vperm.xlu0 %2948, %v2927
        %v2950 = vpop.permute.xlu0 %2949
        %2953 = vset.pattern.permute.xlu0 0
        %2954 = vperm.xlu0 %2953, %v2928
        %v2955 = vpop.permute.xlu0 %2954
        %2958 = vset.pattern.permute.xlu0 0
        %2959 = vperm.xlu0 %2958, %v2929
        %v2960 = vpop.permute.xlu0 %2959
        %2963 = vset.pattern.permute.xlu0 0
        %2964 = vperm.xlu0 %2963, %v2930
        %v2965 = vpop.permute.xlu0 %2964
        %2968 = vset.pattern.permute.xlu0 0
        %2969 = vperm.xlu0 %2968, %v2931
        %v2970 = vpop.permute.xlu0 %2969
        %2973 = vset.pattern.permute.xlu0 0
        %2974 = vperm.xlu0 %2973, %v2932
        %v2975 = vpop.permute.xlu0 %2974
        %2978 = vset.pattern.permute.xlu0 0
        %2979 = vperm.xlu0 %2978, %v2933
        %v2980 = vpop.permute.xlu0 %2979
        %2983 = vset.pattern.permute.xlu0 0
        %2984 = vperm.xlu0 %2983, %v2934
        %v2985 = vpop.permute.xlu0 %2984
        %2988 = vset.pattern.permute.xlu0 0
        %2989 = vperm.xlu0 %2988, %v2935
        %v2990 = vpop.permute.xlu0 %2989
        %2993 = vset.pattern.permute.xlu0 0
        %2994 = vperm.xlu0 %2993, %v2936
        %v2995 = vpop.permute.xlu0 %2994
        %2998 = vset.pattern.permute.xlu0 0
        %2999 = vperm.xlu0 %2998, %v2937
        %v3000 = vpop.permute.xlu0 %2999
        %3003 = vset.pattern.permute.xlu0 0
        %3004 = vperm.xlu0 %3003, %v2938
        %v3005 = vpop.permute.xlu0 %3004
        %3008 = vset.pattern.permute.xlu0 0
        %3009 = vperm.xlu0 %3008, %v2939
        %v3010 = vpop.permute.xlu0 %3009
        %3013 = vset.pattern.permute.xlu0 0
        %3014 = vperm.xlu0 %3013, %v2940
        %v3015 = vpop.permute.xlu0 %3014
        %3018 = vset.pattern.permute.xlu0 0
        %3019 = vperm.xlu0 %3018, %v2941
        %v3020 = vpop.permute.xlu0 %3019
        %v3022 = vmul.f32 %v2945, %v1517
        %v3023 = vmul.f32 %v2950, %v1519
        %v3024 = vmul.f32 %v2955, %v1521
        %v3025 = vmul.f32 %v2960, %v1523
        %v3026 = vmul.f32 %v2965, %v1525
        %v3027 = vmul.f32 %v2970, %v1527
        %v3028 = vmul.f32 %v2975, %v1529
        %v3029 = vmul.f32 %v2980, %v1531
        %v3030 = vmul.f32 %v2985, %v1533
        %v3031 = vmul.f32 %v2990, %v1535
        %v3032 = vmul.f32 %v2995, %v1537
        %v3033 = vmul.f32 %v3000, %v1539
        %v3034 = vmul.f32 %v3005, %v1541
        %v3035 = vmul.f32 %v3010, %v1543
        %v3036 = vmul.f32 %v3015, %v1545
        %v3037 = vmul.f32 %v3020, %v1547
        %vm3038 = vcmask 785920
        %v3039 = vsel %vm3038, %v3022, 0.0
        %v3040 = vsel %vm3038, %v3023, 0.0
        %v3041 = vadd.f32 %v3039, %v3040
        %v3042 = vrot.slane %v3041, 4
        %v3043 = vadd.f32 %v3041, %v3042
        %v3044 = vrot.slane %v3043, 2
        %v3045 = vadd.f32 %v3043, %v3044
        %v3046 = vrot.slane %v3045, 1
        %v3047 = vadd.f32 %v3045, %v3046
        %v3048 = vsel %vm3038, %v3024, 0.0
        %v3049 = vsel %vm3038, %v3025, 0.0
        %v3050 = vadd.f32 %v3048, %v3049
        %v3051 = vrot.slane %v3050, 4
        %v3052 = vadd.f32 %v3050, %v3051
        %v3053 = vrot.slane %v3052, 2
        %v3054 = vadd.f32 %v3052, %v3053
        %v3055 = vrot.slane %v3054, 1
        %v3056 = vadd.f32 %v3054, %v3055
        %v3057 = vsel %vm3038, %v3026, 0.0
        %v3058 = vsel %vm3038, %v3027, 0.0
        %v3059 = vadd.f32 %v3057, %v3058
        %v3060 = vrot.slane %v3059, 4
        %v3061 = vadd.f32 %v3059, %v3060
        %v3062 = vrot.slane %v3061, 2
        %v3063 = vadd.f32 %v3061, %v3062
        %v3064 = vrot.slane %v3063, 1
        %v3065 = vadd.f32 %v3063, %v3064
        %v3066 = vsel %vm3038, %v3028, 0.0
        %v3067 = vsel %vm3038, %v3029, 0.0
        %v3068 = vadd.f32 %v3066, %v3067
        %v3069 = vrot.slane %v3068, 4
        %v3070 = vadd.f32 %v3068, %v3069
        %v3071 = vrot.slane %v3070, 2
        %v3072 = vadd.f32 %v3070, %v3071
        %v3073 = vrot.slane %v3072, 1
        %v3074 = vadd.f32 %v3072, %v3073
        %v3075 = vsel %vm3038, %v3030, 0.0
        %v3076 = vsel %vm3038, %v3031, 0.0
        %v3077 = vadd.f32 %v3075, %v3076
        %v3078 = vrot.slane %v3077, 4
        %v3079 = vadd.f32 %v3077, %v3078
        %v3080 = vrot.slane %v3079, 2
        %v3081 = vadd.f32 %v3079, %v3080
        %v3082 = vrot.slane %v3081, 1
        %v3083 = vadd.f32 %v3081, %v3082
        %v3084 = vsel %vm3038, %v3032, 0.0
        %v3085 = vsel %vm3038, %v3033, 0.0
        %v3086 = vadd.f32 %v3084, %v3085
        %v3087 = vrot.slane %v3086, 4
        %v3088 = vadd.f32 %v3086, %v3087
        %v3089 = vrot.slane %v3088, 2
        %v3090 = vadd.f32 %v3088, %v3089
        %v3091 = vrot.slane %v3090, 1
        %v3092 = vadd.f32 %v3090, %v3091
        %v3093 = vsel %vm3038, %v3034, 0.0
        %v3094 = vsel %vm3038, %v3035, 0.0
        %v3095 = vadd.f32 %v3093, %v3094
        %v3096 = vrot.slane %v3095, 4
        %v3097 = vadd.f32 %v3095, %v3096
        %v3098 = vrot.slane %v3097, 2
        %v3099 = vadd.f32 %v3097, %v3098
        %v3100 = vrot.slane %v3099, 1
        %v3101 = vadd.f32 %v3099, %v3100
        %v3102 = vsel %vm3038, %v3036, 0.0
        %v3103 = vsel %vm3038, %v3037, 0.0
        %v3104 = vadd.f32 %v3102, %v3103
        %v3105 = vrot.slane %v3104, 4
        %v3106 = vadd.f32 %v3104, %v3105
        %v3107 = vrot.slane %v3106, 2
        %v3108 = vadd.f32 %v3106, %v3107
        %v3109 = vrot.slane %v3108, 1
        %v3110 = vadd.f32 %v3108, %v3109
        %3111 = vrot.lane.b32.xlu0 %v1573, 32
        %v3112 = vpop.permute.xlu0 %3111
        %3113 = vrot.lane.b32.xlu0 %v1574, 32
        %v3114 = vpop.permute.xlu0 %3113
        %3115 = vrot.lane.b32.xlu0 %v1575, 32
        %v3116 = vpop.permute.xlu0 %3115
        %3117 = vrot.lane.b32.xlu0 %v1576, 32
        %v3118 = vpop.permute.xlu0 %3117
        %3119 = vrot.lane.b32.xlu0 %v1577, 32
        %v3120 = vpop.permute.xlu0 %3119
        %3121 = vrot.lane.b32.xlu0 %v1578, 32
        %v3122 = vpop.permute.xlu0 %3121
        %3123 = vrot.lane.b32.xlu0 %v1579, 32
        %v3124 = vpop.permute.xlu0 %3123
        %3125 = vrot.lane.b32.xlu0 %v1580, 32
        %v3126 = vpop.permute.xlu0 %3125
        %3127 = vrot.lane.b32.xlu0 %v1581, 32
        %v3128 = vpop.permute.xlu0 %3127
        %3129 = vrot.lane.b32.xlu0 %v1582, 32
        %v3130 = vpop.permute.xlu0 %3129
        %3131 = vrot.lane.b32.xlu0 %v1583, 32
        %v3132 = vpop.permute.xlu0 %3131
        %3133 = vrot.lane.b32.xlu0 %v1584, 32
        %v3134 = vpop.permute.xlu0 %3133
        %3135 = vrot.lane.b32.xlu0 %v1585, 32
        %v3136 = vpop.permute.xlu0 %3135
        %3137 = vrot.lane.b32.xlu0 %v1586, 32
        %v3138 = vpop.permute.xlu0 %3137
        %3139 = vrot.lane.b32.xlu0 %v1587, 32
        %v3140 = vpop.permute.xlu0 %3139
        %3141 = vrot.lane.b32.xlu0 %v1588, 32
        %v3142 = vpop.permute.xlu0 %3141
        %v3159 = vsel %vm1589, %v3112, 0.0
        %3160 = vadd.xlane.f32.xlu0 %v3159
        %v3161 = vpop.xlane.xlu0 %3160
        %v3162 = vsel %vm1589, %v3114, 0.0
        %3163 = vadd.xlane.f32.xlu0 %v3162
        %v3164 = vpop.xlane.xlu0 %3163
        %v3165 = vsel %vm1589, %v3116, 0.0
        %3166 = vadd.xlane.f32.xlu0 %v3165
        %v3167 = vpop.xlane.xlu0 %3166
        %v3168 = vsel %vm1589, %v3118, 0.0
        %3169 = vadd.xlane.f32.xlu0 %v3168
        %v3170 = vpop.xlane.xlu0 %3169
        %v3171 = vsel %vm1589, %v3120, 0.0
        %3172 = vadd.xlane.f32.xlu0 %v3171
        %v3173 = vpop.xlane.xlu0 %3172
        %v3174 = vsel %vm1589, %v3122, 0.0
        %3175 = vadd.xlane.f32.xlu0 %v3174
        %v3176 = vpop.xlane.xlu0 %3175
        %v3177 = vsel %vm1589, %v3124, 0.0
        %3178 = vadd.xlane.f32.xlu0 %v3177
        %v3179 = vpop.xlane.xlu0 %3178
        %v3180 = vsel %vm1589, %v3126, 0.0
        %3181 = vadd.xlane.f32.xlu0 %v3180
        %v3182 = vpop.xlane.xlu0 %3181
        %v3183 = vsel %vm1589, %v3128, 0.0
        %3184 = vadd.xlane.f32.xlu0 %v3183
        %v3185 = vpop.xlane.xlu0 %3184
        %v3186 = vsel %vm1589, %v3130, 0.0
        %3187 = vadd.xlane.f32.xlu0 %v3186
        %v3188 = vpop.xlane.xlu0 %3187
        %v3189 = vsel %vm1589, %v3132, 0.0
        %3190 = vadd.xlane.f32.xlu0 %v3189
        %v3191 = vpop.xlane.xlu0 %3190
        %v3192 = vsel %vm1589, %v3134, 0.0
        %3193 = vadd.xlane.f32.xlu0 %v3192
        %v3194 = vpop.xlane.xlu0 %3193
        %v3195 = vsel %vm1589, %v3136, 0.0
        %3196 = vadd.xlane.f32.xlu0 %v3195
        %v3197 = vpop.xlane.xlu0 %3196
        %v3198 = vsel %vm1589, %v3138, 0.0
        %3199 = vadd.xlane.f32.xlu0 %v3198
        %v3200 = vpop.xlane.xlu0 %3199
        %v3201 = vsel %vm1589, %v3140, 0.0
        %3202 = vadd.xlane.f32.xlu0 %v3201
        %v3203 = vpop.xlane.xlu0 %3202
        %v3204 = vsel %vm1589, %v3142, 0.0
        %3205 = vadd.xlane.f32.xlu0 %v3204
        %v3206 = vpop.xlane.xlu0 %3205
        %v3223 = vperm.slane %v3161, %v1655
        %v3224 = vperm.slane %v3164, %v1657
        %v3225 = vsel %vm1659, %v3224, %v3223
        %v3226 = vperm.slane %v3167, %v1655
        %v3227 = vperm.slane %v3170, %v1657
        %v3228 = vsel %vm1659, %v3227, %v3226
        %v3229 = vperm.slane %v3173, %v1655
        %v3230 = vperm.slane %v3176, %v1657
        %v3231 = vsel %vm1659, %v3230, %v3229
        %v3232 = vperm.slane %v3179, %v1655
        %v3233 = vperm.slane %v3182, %v1657
        %v3234 = vsel %vm1659, %v3233, %v3232
        %v3235 = vperm.slane %v3185, %v1655
        %v3236 = vperm.slane %v3188, %v1657
        %v3237 = vsel %vm1659, %v3236, %v3235
        %v3238 = vperm.slane %v3191, %v1655
        %v3239 = vperm.slane %v3194, %v1657
        %v3240 = vsel %vm1659, %v3239, %v3238
        %v3241 = vperm.slane %v3197, %v1655
        %v3242 = vperm.slane %v3200, %v1657
        %v3243 = vsel %vm1659, %v3242, %v3241
        %v3244 = vperm.slane %v3203, %v1655
        %v3245 = vperm.slane %v3206, %v1657
        %v3246 = vsel %vm1659, %v3245, %v3244
        %v3247 = vsel %vm1682, %v3228, %v3225
        %v3248 = vsel %vm1684, %v3231, %v3247
        %v3249 = vsel %vm1686, %v3234, %v3248
        %v3250 = vsel %vm1688, %v3237, %v3249
        %v3251 = vsel %vm1690, %v3240, %v3250
        %v3252 = vsel %vm1692, %v3243, %v3251
        %v3253 = vsel %vm1694, %v3246, %v3252
        %v3255 = vsel %vm1697, %v3253, -inf
        %3256 = vmax.xlane.f32.xlu0 %v3255
        %v3257 = vpop.xlane.xlu0 %3256
        %v3259 = vperm.slane %v3257, 0
        %v3260 = vperm.slane %v3257, 1
        %v3261 = vperm.slane %v3257, 2
        %v3262 = vperm.slane %v3257, 3
        %v3263 = vperm.slane %v3257, 4
        %v3264 = vperm.slane %v3257, 5
        %v3265 = vperm.slane %v3257, 6
        %v3266 = vperm.slane %v3257, 7
        %v3275 = vsub.f32 %v3161, %v3259
        %v3276 = vsub.f32 %v3164, %v3259
        %v3277 = vsub.f32 %v3167, %v3260
        %v3278 = vsub.f32 %v3170, %v3260
        %v3279 = vsub.f32 %v3173, %v3261
        %v3280 = vsub.f32 %v3176, %v3261
        %v3281 = vsub.f32 %v3179, %v3262
        %v3282 = vsub.f32 %v3182, %v3262
        %v3283 = vsub.f32 %v3185, %v3263
        %v3284 = vsub.f32 %v3188, %v3263
        %v3285 = vsub.f32 %v3191, %v3264
        %v3286 = vsub.f32 %v3194, %v3264
        %v3287 = vsub.f32 %v3197, %v3265
        %v3288 = vsub.f32 %v3200, %v3265
        %v3289 = vsub.f32 %v3203, %v3266
        %v3290 = vsub.f32 %v3206, %v3266
        %v3291 = vmul.f32 %v3275, 1.442695
        %v3292 = vpow.pop %v3291
        %v3293 = vmul.f32 %v3276, 1.442695
        %v3294 = vpow.pop %v3293
        %v3295 = vmul.f32 %v3277, 1.442695
        %v3296 = vpow.pop %v3295
        %v3297 = vmul.f32 %v3278, 1.442695
        %v3298 = vpow.pop %v3297
        %v3299 = vmul.f32 %v3279, 1.442695
        %v3300 = vpow.pop %v3299
        %v3301 = vmul.f32 %v3280, 1.442695
        %v3302 = vpow.pop %v3301
        %v3303 = vmul.f32 %v3281, 1.442695
        %v3304 = vpow.pop %v3303
        %v3305 = vmul.f32 %v3282, 1.442695
        %v3306 = vpow.pop %v3305
        %v3307 = vmul.f32 %v3283, 1.442695
        %v3308 = vpow.pop %v3307
        %v3309 = vmul.f32 %v3284, 1.442695
        %v3310 = vpow.pop %v3309
        %v3311 = vmul.f32 %v3285, 1.442695
        %v3312 = vpow.pop %v3311
        %v3313 = vmul.f32 %v3286, 1.442695
        %v3314 = vpow.pop %v3313
        %v3315 = vmul.f32 %v3287, 1.442695
        %v3316 = vpow.pop %v3315
        %v3317 = vmul.f32 %v3288, 1.442695
        %v3318 = vpow.pop %v3317
        %v3319 = vmul.f32 %v3289, 1.442695
        %v3320 = vpow.pop %v3319
        %v3321 = vmul.f32 %v3290, 1.442695
        %v3322 = vpow.pop %v3321
        %3339 = vset.pattern.permute.xlu0 0
        %3340 = vperm.xlu0 %3339, %v3292
        %v3341 = vpop.permute.xlu0 %3340
        %3342 = vset.pattern.permute.xlu0 0
        %3343 = vperm.xlu0 %3342, %v3294
        %v3344 = vpop.permute.xlu0 %3343
        %3345 = vset.pattern.permute.xlu0 0
        %3346 = vperm.xlu0 %3345, %v3296
        %v3347 = vpop.permute.xlu0 %3346
        %3348 = vset.pattern.permute.xlu0 0
        %3349 = vperm.xlu0 %3348, %v3298
        %v3350 = vpop.permute.xlu0 %3349
        %3351 = vset.pattern.permute.xlu0 0
        %3352 = vperm.xlu0 %3351, %v3300
        %v3353 = vpop.permute.xlu0 %3352
        %3354 = vset.pattern.permute.xlu0 0
        %3355 = vperm.xlu0 %3354, %v3302
        %v3356 = vpop.permute.xlu0 %3355
        %3357 = vset.pattern.permute.xlu0 0
        %3358 = vperm.xlu0 %3357, %v3304
        %v3359 = vpop.permute.xlu0 %3358
        %3360 = vset.pattern.permute.xlu0 0
        %3361 = vperm.xlu0 %3360, %v3306
        %v3362 = vpop.permute.xlu0 %3361
        %3363 = vset.pattern.permute.xlu0 0
        %3364 = vperm.xlu0 %3363, %v3308
        %v3365 = vpop.permute.xlu0 %3364
        %3366 = vset.pattern.permute.xlu0 0
        %3367 = vperm.xlu0 %3366, %v3310
        %v3368 = vpop.permute.xlu0 %3367
        %3369 = vset.pattern.permute.xlu0 0
        %3370 = vperm.xlu0 %3369, %v3312
        %v3371 = vpop.permute.xlu0 %3370
        %3372 = vset.pattern.permute.xlu0 0
        %3373 = vperm.xlu0 %3372, %v3314
        %v3374 = vpop.permute.xlu0 %3373
        %3375 = vset.pattern.permute.xlu0 0
        %3376 = vperm.xlu0 %3375, %v3316
        %v3377 = vpop.permute.xlu0 %3376
        %3378 = vset.pattern.permute.xlu0 0
        %3379 = vperm.xlu0 %3378, %v3318
        %v3380 = vpop.permute.xlu0 %3379
        %3381 = vset.pattern.permute.xlu0 0
        %3382 = vperm.xlu0 %3381, %v3320
        %v3383 = vpop.permute.xlu0 %3382
        %3384 = vset.pattern.permute.xlu0 0
        %3385 = vperm.xlu0 %3384, %v3322
        %v3386 = vpop.permute.xlu0 %3385
        %v3387 = vperm.slane %v3341, %v1655
        %v3388 = vperm.slane %v3344, %v1657
        %v3389 = vsel %vm1659, %v3388, %v3387
        %v3390 = vperm.slane %v3347, %v1655
        %v3391 = vperm.slane %v3350, %v1657
        %v3392 = vsel %vm1659, %v3391, %v3390
        %v3393 = vperm.slane %v3353, %v1655
        %v3394 = vperm.slane %v3356, %v1657
        %v3395 = vsel %vm1659, %v3394, %v3393
        %v3396 = vperm.slane %v3359, %v1655
        %v3397 = vperm.slane %v3362, %v1657
        %v3398 = vsel %vm1659, %v3397, %v3396
        %v3399 = vperm.slane %v3365, %v1655
        %v3400 = vperm.slane %v3368, %v1657
        %v3401 = vsel %vm1659, %v3400, %v3399
        %v3402 = vperm.slane %v3371, %v1655
        %v3403 = vperm.slane %v3374, %v1657
        %v3404 = vsel %vm1659, %v3403, %v3402
        %v3405 = vperm.slane %v3377, %v1655
        %v3406 = vperm.slane %v3380, %v1657
        %v3407 = vsel %vm1659, %v3406, %v3405
        %v3408 = vperm.slane %v3383, %v1655
        %v3409 = vperm.slane %v3386, %v1657
        %v3410 = vsel %vm1659, %v3409, %v3408
        %v3411 = vsel %vm1682, %v3392, %v3389
        %v3412 = vsel %vm1684, %v3395, %v3411
        %v3413 = vsel %vm1686, %v3398, %v3412
        %v3414 = vsel %vm1688, %v3401, %v3413
        %v3415 = vsel %vm1690, %v3404, %v3414
        %v3416 = vsel %vm1692, %v3407, %v3415
        %v3417 = vsel %vm1694, %v3410, %v3416
        %v3419 = vsel %vm1697, %v3417, 0.0
        %3420 = vadd.xlane.f32.xlu0 %v3419
        %v3421 = vpop.xlane.xlu0 %3420
        %v3422 = vrcp.pop %v3421
        %v3424 = vperm.slane %v3422, 0
        %v3425 = vperm.slane %v3422, 1
        %v3426 = vperm.slane %v3422, 2
        %v3427 = vperm.slane %v3422, 3
        %v3428 = vperm.slane %v3422, 4
        %v3429 = vperm.slane %v3422, 5
        %v3430 = vperm.slane %v3422, 6
        %v3431 = vperm.slane %v3422, 7
        %v3440 = vmul.f32 %v3292, %v3424
        %v3441 = vmul.f32 %v3294, %v3424
        %v3442 = vmul.f32 %v3296, %v3425
        %v3443 = vmul.f32 %v3298, %v3425
        %v3444 = vmul.f32 %v3300, %v3426
        %v3445 = vmul.f32 %v3302, %v3426
        %v3446 = vmul.f32 %v3304, %v3427
        %v3447 = vmul.f32 %v3306, %v3427
        %v3448 = vmul.f32 %v3308, %v3428
        %v3449 = vmul.f32 %v3310, %v3428
        %v3450 = vmul.f32 %v3312, %v3429
        %v3451 = vmul.f32 %v3314, %v3429
        %v3452 = vmul.f32 %v3316, %v3430
        %v3453 = vmul.f32 %v3318, %v3430
        %v3454 = vmul.f32 %v3320, %v3431
        %v3455 = vmul.f32 %v3322, %v3431
        %3457 = vset.pattern.permute.xlu0 0
        %3458 = vperm.xlu0 %3457, %v3440
        %v3459 = vpop.permute.xlu0 %3458
        %3462 = vset.pattern.permute.xlu0 0
        %3463 = vperm.xlu0 %3462, %v3441
        %v3464 = vpop.permute.xlu0 %3463
        %3467 = vset.pattern.permute.xlu0 0
        %3468 = vperm.xlu0 %3467, %v3442
        %v3469 = vpop.permute.xlu0 %3468
        %3472 = vset.pattern.permute.xlu0 0
        %3473 = vperm.xlu0 %3472, %v3443
        %v3474 = vpop.permute.xlu0 %3473
        %3477 = vset.pattern.permute.xlu0 0
        %3478 = vperm.xlu0 %3477, %v3444
        %v3479 = vpop.permute.xlu0 %3478
        %3482 = vset.pattern.permute.xlu0 0
        %3483 = vperm.xlu0 %3482, %v3445
        %v3484 = vpop.permute.xlu0 %3483
        %3487 = vset.pattern.permute.xlu0 0
        %3488 = vperm.xlu0 %3487, %v3446
        %v3489 = vpop.permute.xlu0 %3488
        %3492 = vset.pattern.permute.xlu0 0
        %3493 = vperm.xlu0 %3492, %v3447
        %v3494 = vpop.permute.xlu0 %3493
        %3497 = vset.pattern.permute.xlu0 0
        %3498 = vperm.xlu0 %3497, %v3448
        %v3499 = vpop.permute.xlu0 %3498
        %3502 = vset.pattern.permute.xlu0 0
        %3503 = vperm.xlu0 %3502, %v3449
        %v3504 = vpop.permute.xlu0 %3503
        %3507 = vset.pattern.permute.xlu0 0
        %3508 = vperm.xlu0 %3507, %v3450
        %v3509 = vpop.permute.xlu0 %3508
        %3512 = vset.pattern.permute.xlu0 0
        %3513 = vperm.xlu0 %3512, %v3451
        %v3514 = vpop.permute.xlu0 %3513
        %3517 = vset.pattern.permute.xlu0 0
        %3518 = vperm.xlu0 %3517, %v3452
        %v3519 = vpop.permute.xlu0 %3518
        %3522 = vset.pattern.permute.xlu0 0
        %3523 = vperm.xlu0 %3522, %v3453
        %v3524 = vpop.permute.xlu0 %3523
        %3527 = vset.pattern.permute.xlu0 0
        %3528 = vperm.xlu0 %3527, %v3454
        %v3529 = vpop.permute.xlu0 %3528
        %3532 = vset.pattern.permute.xlu0 0
        %3533 = vperm.xlu0 %3532, %v3455
        %v3534 = vpop.permute.xlu0 %3533
        %v3536 = vmul.f32 %v3459, %v1517
        %v3537 = vmul.f32 %v3464, %v1519
        %v3538 = vmul.f32 %v3469, %v1521
        %v3539 = vmul.f32 %v3474, %v1523
        %v3540 = vmul.f32 %v3479, %v1525
        %v3541 = vmul.f32 %v3484, %v1527
        %v3542 = vmul.f32 %v3489, %v1529
        %v3543 = vmul.f32 %v3494, %v1531
        %v3544 = vmul.f32 %v3499, %v1533
        %v3545 = vmul.f32 %v3504, %v1535
        %v3546 = vmul.f32 %v3509, %v1537
        %v3547 = vmul.f32 %v3514, %v1539
        %v3548 = vmul.f32 %v3519, %v1541
        %v3549 = vmul.f32 %v3524, %v1543
        %v3550 = vmul.f32 %v3529, %v1545
        %v3551 = vmul.f32 %v3534, %v1547
        %vm3552 = vcmask 1048320
        %v3553 = vsel %vm3552, %v3536, 0.0
        %v3554 = vsel %vm3552, %v3537, 0.0
        %v3555 = vadd.f32 %v3553, %v3554
        %v3556 = vrot.slane %v3555, 4
        %v3557 = vadd.f32 %v3555, %v3556
        %v3558 = vrot.slane %v3557, 2
        %v3559 = vadd.f32 %v3557, %v3558
        %v3560 = vrot.slane %v3559, 1
        %v3561 = vadd.f32 %v3559, %v3560
        %v3562 = vsel %vm3552, %v3538, 0.0
        %v3563 = vsel %vm3552, %v3539, 0.0
        %v3564 = vadd.f32 %v3562, %v3563
        %v3565 = vrot.slane %v3564, 4
        %v3566 = vadd.f32 %v3564, %v3565
        %v3567 = vrot.slane %v3566, 2
        %v3568 = vadd.f32 %v3566, %v3567
        %v3569 = vrot.slane %v3568, 1
        %v3570 = vadd.f32 %v3568, %v3569
        %v3571 = vsel %vm3552, %v3540, 0.0
        %v3572 = vsel %vm3552, %v3541, 0.0
        %v3573 = vadd.f32 %v3571, %v3572
        %v3574 = vrot.slane %v3573, 4
        %v3575 = vadd.f32 %v3573, %v3574
        %v3576 = vrot.slane %v3575, 2
        %v3577 = vadd.f32 %v3575, %v3576
        %v3578 = vrot.slane %v3577, 1
        %v3579 = vadd.f32 %v3577, %v3578
        %v3580 = vsel %vm3552, %v3542, 0.0
        %v3581 = vsel %vm3552, %v3543, 0.0
        %v3582 = vadd.f32 %v3580, %v3581
        %v3583 = vrot.slane %v3582, 4
        %v3584 = vadd.f32 %v3582, %v3583
        %v3585 = vrot.slane %v3584, 2
        %v3586 = vadd.f32 %v3584, %v3585
        %v3587 = vrot.slane %v3586, 1
        %v3588 = vadd.f32 %v3586, %v3587
        %v3589 = vsel %vm3552, %v3544, 0.0
        %v3590 = vsel %vm3552, %v3545, 0.0
        %v3591 = vadd.f32 %v3589, %v3590
        %v3592 = vrot.slane %v3591, 4
        %v3593 = vadd.f32 %v3591, %v3592
        %v3594 = vrot.slane %v3593, 2
        %v3595 = vadd.f32 %v3593, %v3594
        %v3596 = vrot.slane %v3595, 1
        %v3597 = vadd.f32 %v3595, %v3596
        %v3598 = vsel %vm3552, %v3546, 0.0
        %v3599 = vsel %vm3552, %v3547, 0.0
        %v3600 = vadd.f32 %v3598, %v3599
        %v3601 = vrot.slane %v3600, 4
        %v3602 = vadd.f32 %v3600, %v3601
        %v3603 = vrot.slane %v3602, 2
        %v3604 = vadd.f32 %v3602, %v3603
        %v3605 = vrot.slane %v3604, 1
        %v3606 = vadd.f32 %v3604, %v3605
        %v3607 = vsel %vm3552, %v3548, 0.0
        %v3608 = vsel %vm3552, %v3549, 0.0
        %v3609 = vadd.f32 %v3607, %v3608
        %v3610 = vrot.slane %v3609, 4
        %v3611 = vadd.f32 %v3609, %v3610
        %v3612 = vrot.slane %v3611, 2
        %v3613 = vadd.f32 %v3611, %v3612
        %v3614 = vrot.slane %v3613, 1
        %v3615 = vadd.f32 %v3613, %v3614
        %v3616 = vsel %vm3552, %v3550, 0.0
        %v3617 = vsel %vm3552, %v3551, 0.0
        %v3618 = vadd.f32 %v3616, %v3617
        %v3619 = vrot.slane %v3618, 4
        %v3620 = vadd.f32 %v3618, %v3619
        %v3621 = vrot.slane %v3620, 2
        %v3622 = vadd.f32 %v3620, %v3621
        %v3623 = vrot.slane %v3622, 1
        %v3624 = vadd.f32 %v3622, %v3623
        %v3633 = vsel %vm1682, %v2012, %v2003
        %v3634 = vsel %vm1684, %v2021, %v3633
        %v3635 = vsel %vm1686, %v2030, %v3634
        %v3636 = vsel %vm1688, %v2039, %v3635
        %v3637 = vsel %vm1690, %v2048, %v3636
        %v3638 = vsel %vm1692, %v2057, %v3637
        %v3639 = vsel %vm1694, %v2066, %v3638
        %v3649 = vsel %vm1682, %v2542, %v2533
        %v3650 = vsel %vm1684, %v2551, %v3649
        %v3651 = vsel %vm1686, %v2560, %v3650
        %v3652 = vsel %vm1688, %v2569, %v3651
        %v3653 = vsel %vm1690, %v2578, %v3652
        %v3654 = vsel %vm1692, %v2587, %v3653
        %v3655 = vsel %vm1694, %v2596, %v3654
        %v3665 = vsel %vm1682, %v3056, %v3047
        %v3666 = vsel %vm1684, %v3065, %v3665
        %v3667 = vsel %vm1686, %v3074, %v3666
        %v3668 = vsel %vm1688, %v3083, %v3667
        %v3669 = vsel %vm1690, %v3092, %v3668
        %v3670 = vsel %vm1692, %v3101, %v3669
        %v3671 = vsel %vm1694, %v3110, %v3670
        %v3681 = vsel %vm1682, %v3570, %v3561
        %v3682 = vsel %vm1684, %v3579, %v3681
        %v3683 = vsel %vm1686, %v3588, %v3682
        %v3684 = vsel %vm1688, %v3597, %v3683
        %v3685 = vsel %vm1690, %v3606, %v3684
        %v3686 = vsel %vm1692, %v3615, %v3685
        %v3687 = vsel %vm1694, %v3624, %v3686
        %v3689 = vsel %vm1589, %v3639, %v3655
        %v3690 = vsel %vm1111, %v3689, %v3671
        %vm3691 = vcmask 785408
        %v3692 = vsel %vm3691, %v3690, %v3687
        %v3693 = vld [vmem:[#allocation19] sm:$0xff]
        %v3694 = vld [vmem:[#allocation19 + $0x8] sm:$0xff]
        %v3695 = vld [vmem:[#allocation19 + $0x10] sm:$0xff]
        %v3696 = vld [vmem:[#allocation19 + $0x18] sm:$0xff]
        %v3697 = vld [vmem:[#allocation19 + $0x20] sm:$0xff]
        %v3698 = vld [vmem:[#allocation19 + $0x28] sm:$0xff]
        %v3699 = vld [vmem:[#allocation19 + $0x30] sm:$0xff]
        %v3700 = vld [vmem:[#allocation19 + $0x38] sm:$0xff]
        %v3701 = vld [vmem:[#allocation19 + $0x40] sm:$0xff]
        %v3702 = vld [vmem:[#allocation19 + $0x48] sm:$0xff]
        %v3703 = vld [vmem:[#allocation19 + $0x50] sm:$0xff]
        %v3704 = vld [vmem:[#allocation19 + $0x58] sm:$0xff]
        %v3705 = vld [vmem:[#allocation19 + $0x60] sm:$0xff]
        %v3706 = vld [vmem:[#allocation19 + $0x68] sm:$0xff]
        %v3707 = vld [vmem:[#allocation19 + $0x70] sm:$0xff]
        %v3708 = vld [vmem:[#allocation19 + $0x78] sm:$0xff]
        %v3709 = vld [vmem:[#allocation19 + $0x80] sm:$0xff]
        %v3710 = vld [vmem:[#allocation19 + $0x88] sm:$0xff]
        %v3711 = vld [vmem:[#allocation19 + $0x90] sm:$0xff]
        %v3712 = vld [vmem:[#allocation19 + $0x98] sm:$0xff]
        %v3713 = vld [vmem:[#allocation19 + $0xa0] sm:$0xff]
        %v3714 = vld [vmem:[#allocation19 + $0xa8] sm:$0xff]
        %v3715 = vld [vmem:[#allocation19 + $0xb0] sm:$0xff]
        %v3716 = vld [vmem:[#allocation19 + $0xb8] sm:$0xff]
        %v3717 = vld [vmem:[#allocation19 + $0xc0] sm:$0xff]
        %v3718 = vld [vmem:[#allocation19 + $0xc8] sm:$0xff]
        %v3719 = vld [vmem:[#allocation19 + $0xd0] sm:$0xff]
        %v3720 = vld [vmem:[#allocation19 + $0xd8] sm:$0xff]
        %v3721 = vld [vmem:[#allocation19 + $0xe0] sm:$0xff]
        %v3722 = vld [vmem:[#allocation19 + $0xe8] sm:$0xff]
        %v3723 = vld [vmem:[#allocation19 + $0xf0] sm:$0xff]
        %v3724 = vld [vmem:[#allocation19 + $0xf8] sm:$0xff]
        %v3725 = vld [vmem:[#allocation20] sm:$0xff]
        %v3726 = vld [vmem:[#allocation20 + $0x8] sm:$0xff]
        %v3727 = vld [vmem:[#allocation20 + $0x10] sm:$0xff]
        %v3728 = vld [vmem:[#allocation20 + $0x18] sm:$0xff]
        %v3729 = vld [vmem:[#allocation20 + $0x20] sm:$0xff]
        %v3730 = vld [vmem:[#allocation20 + $0x28] sm:$0xff]
        %v3731 = vld [vmem:[#allocation20 + $0x30] sm:$0xff]
        %v3732 = vld [vmem:[#allocation20 + $0x38] sm:$0xff]
        %v3733 = vld [vmem:[#allocation20 + $0x40] sm:$0xff]
        %v3734 = vld [vmem:[#allocation20 + $0x48] sm:$0xff]
        %v3735 = vld [vmem:[#allocation20 + $0x50] sm:$0xff]
        %v3736 = vld [vmem:[#allocation20 + $0x58] sm:$0xff]
        %v3737 = vld [vmem:[#allocation20 + $0x60] sm:$0xff]
        %v3738 = vld [vmem:[#allocation20 + $0x68] sm:$0xff]
        %v3739 = vld [vmem:[#allocation20 + $0x70] sm:$0xff]
        %v3740 = vld [vmem:[#allocation20 + $0x78] sm:$0xff]
        %v3741 = vld [vmem:[#allocation20 + $0x80] sm:$0xff]
        %v3742 = vld [vmem:[#allocation20 + $0x88] sm:$0xff]
        %v3743 = vld [vmem:[#allocation20 + $0x90] sm:$0xff]
        %v3744 = vld [vmem:[#allocation20 + $0x98] sm:$0xff]
        %v3745 = vld [vmem:[#allocation20 + $0xa0] sm:$0xff]
        %v3746 = vld [vmem:[#allocation20 + $0xa8] sm:$0xff]
        %v3747 = vld [vmem:[#allocation20 + $0xb0] sm:$0xff]
        %v3748 = vld [vmem:[#allocation20 + $0xb8] sm:$0xff]
        %v3749 = vld [vmem:[#allocation20 + $0xc0] sm:$0xff]
        %v3750 = vld [vmem:[#allocation20 + $0xc8] sm:$0xff]
        %v3751 = vld [vmem:[#allocation20 + $0xd0] sm:$0xff]
        %v3752 = vld [vmem:[#allocation20 + $0xd8] sm:$0xff]
        %v3753 = vld [vmem:[#allocation20 + $0xe0] sm:$0xff]
        %v3754 = vld [vmem:[#allocation20 + $0xe8] sm:$0xff]
        %v3755 = vld [vmem:[#allocation20 + $0xf0] sm:$0xff]
        %v3756 = vld [vmem:[#allocation20 + $0xf8] sm:$0xff]
        %3757 = vmatpush.msra.mxu0 %v3755
        %3758 = vmatpush.msra.mxu0 %v3753
        %3759 = vmatpush.msra.mxu0 %v3751
        %3760 = vmatpush.msra.mxu0 %v3749
        %3761 = vmatpush.msra.mxu0 %v3747
        %3762 = vmatpush.msra.mxu0 %v3745
        %3763 = vmatpush.msra.mxu0 %v3743
        %3764 = vmatpush.msra.mxu0 %v3741
        %3765 = vmatpush.msra.mxu0 %v3739
        %3766 = vmatpush.msra.mxu0 %v3737
        %3767 = vmatpush.msra.mxu0 %v3735
        %3768 = vmatpush.msra.mxu0 %v3733
        %3769 = vmatpush.msra.mxu0 %v3731
        %3770 = vmatpush.msra.mxu0 %v3729
        %3771 = vmatpush.msra.mxu0 %v3727
        %3772 = vmatpush.msra.mxu0 %v3725
        %3773 = vmatmul.f32.gmra.mxu0 %v1421
        %v3774 = vpop.f32.mrf.mxu0
        %v3775 = vadd.f32 0.0, %v3774
        %3776 = vdwg.mxu0
        %3777 = vmatpush.msra.mxu0 %v3756
        %3778 = vmatpush.msra.mxu0 %v3754
        %3779 = vmatpush.msra.mxu0 %v3752
        %3780 = vmatpush.msra.mxu0 %v3750
        %3781 = vmatpush.msra.mxu0 %v3748
        %3782 = vmatpush.msra.mxu0 %v3746
        %3783 = vmatpush.msra.mxu0 %v3744
        %3784 = vmatpush.msra.mxu0 %v3742
        %3785 = vmatpush.msra.mxu0 %v3740
        %3786 = vmatpush.msra.mxu0 %v3738
        %3787 = vmatpush.msra.mxu0 %v3736
        %3788 = vmatpush.msra.mxu0 %v3734
        %3789 = vmatpush.msra.mxu0 %v3732
        %3790 = vmatpush.msra.mxu0 %v3730
        %3791 = vmatpush.msra.mxu0 %v3728
        %3792 = vmatpush.msra.mxu0 %v3726
        %3793 = vmatmul.f32.gmra.mxu0 %v1421
        %v3794 = vpop.f32.mrf.mxu0
        %v3795 = vadd.f32 0.0, %v3794
        %3796 = vdwg.mxu0
        %3797 = vmatpush.msra.mxu0 %v3723
        %3798 = vmatpush.msra.mxu0 %v3721
        %3799 = vmatpush.msra.mxu0 %v3719
        %3800 = vmatpush.msra.mxu0 %v3717
        %3801 = vmatpush.msra.mxu0 %v3715
        %3802 = vmatpush.msra.mxu0 %v3713
        %3803 = vmatpush.msra.mxu0 %v3711
        %3804 = vmatpush.msra.mxu0 %v3709
        %3805 = vmatpush.msra.mxu0 %v3707
        %3806 = vmatpush.msra.mxu0 %v3705
        %3807 = vmatpush.msra.mxu0 %v3703
        %3808 = vmatpush.msra.mxu0 %v3701
        %3809 = vmatpush.msra.mxu0 %v3699
        %3810 = vmatpush.msra.mxu0 %v3697
        %3811 = vmatpush.msra.mxu0 %v3695
        %3812 = vmatpush.msra.mxu0 %v3693
        %3813 = vmatmul.f32.gmra.mxu0 %v3692
        %v3814 = vpop.f32.mrf.mxu0
        %v3815 = vadd.f32 %v3775, %v3814
        %3816 = vdwg.mxu0
        %3817 = vmatpush.msra.mxu0 %v3724
        %3818 = vmatpush.msra.mxu0 %v3722
        %3819 = vmatpush.msra.mxu0 %v3720
        %3820 = vmatpush.msra.mxu0 %v3718
        %3821 = vmatpush.msra.mxu0 %v3716
        %3822 = vmatpush.msra.mxu0 %v3714
        %3823 = vmatpush.msra.mxu0 %v3712
        %3824 = vmatpush.msra.mxu0 %v3710
        %3825 = vmatpush.msra.mxu0 %v3708
        %3826 = vmatpush.msra.mxu0 %v3706
        %3827 = vmatpush.msra.mxu0 %v3704
        %3828 = vmatpush.msra.mxu0 %v3702
        %3829 = vmatpush.msra.mxu0 %v3700
        %3830 = vmatpush.msra.mxu0 %v3698
        %3831 = vmatpush.msra.mxu0 %v3696
        %3832 = vmatpush.msra.mxu0 %v3694
        %3833 = vmatmul.f32.gmra.mxu0 %v3692
        %v3834 = vpop.f32.mrf.mxu0
        %v3835 = vadd.f32 %v3795, %v3834
        %3836 = vdwg.mxu0
        %v3837 = vld [vmem:[%s16] sm:$0x3]
        %v3839 = vperm.slane %v3837, 0
        %v3840 = vperm.slane %v3837, 1
        %v3843 = vadd.f32 %v3815, %v3839
        %v3844 = vadd.f32 %v3835, %v3840
        %v3845 = vxor.u32 %v3844, 2147483648
        %v3846 = vmul.f32 %v3845, 1.442695
        %v3847 = vpow.pop %v3846
        %v3848 = vadd.f32 %v3847, 1.0
        %v3849 = vrcp.pop %v3848
        %v3850 = vmul.f32 %v3848, %v3849
        %v3851 = vsub.f32 1.0, %v3850
        %v3852 = vmul.f32 %v3849, %v3851
        %v3853 = vadd.f32 %v3849, %v3852
        %vm3854 = vweird.f32 %v3848
        %vm3855 = vweird.f32 %v3849
        %vm3856 = vmor %vm3854, %vm3855
        %v3857 = vsel %vm3856, %v3849, %v3853
        %v3858 = vand.u32 2147483647, %v3848
        %vm3859 = vcmp.eq.f32.partialorder %v3858, 8.507059e+37
        %v3860 = vand.u32 %v3848, 2147483648
        %v3861 = vor.u32 1.1754944e-38, %v3860
        %v3862 = vsel %vm3859, %v3861, %v3857
        %v3863 = vmul.f32 1.0, %v3862
        %v3864 = vmul.f32 %v3843, %v3863
        %3865 = vst [vmem:[%s915] sm:$0xff] %v3864
        %3866 = vst [vmem:[%s922] sm:$0xff] %v1421
        %s3867 = scalar_lea.vmem %s922, 8 [#allocation23]
        %3868 = vst [vmem:[%s3867] sm:$0xff] %v3864
        %3869 = vst [vmem:[%s929] sm:$0xff] %v1419
        %s3870 = sand.u32 %s447, 1
        %s3871 = scalar_lea.sflag [#allocation4], %s3870
        %s3872 = sand.u32 %s447, 1
        %s3873 = smul.addr %s3872, 8
        %s3874 = scalar_lea.vmem [#allocation22], %s3873
        %s3875 = sand.u32 %s52, 1
        %s3876 = scalar_lea.sflag [#allocation24], %s3875
        %s3877 = sand.u32 %s473, 1
        %s3878 = smul.addr %s3877, 16
        %s3879 = scalar_lea.vmem [#allocation23], %s3878
        %s3880 = sand.u32 %s52, 1
        %s3881 = scalar_lea.sflag [#allocation24], %s3880
        %s3882 = sand.u32 %s499, 1
        %s3883 = smul.addr %s3882, 8
        %s3884 = scalar_lea.vmem [#allocation25], %s3883
        // Predicated region
        $region137: #{tpu_custom_call.1} parent=87 // pred_check
          %p3885 = pneg %p457
        $region138: #{tpu_custom_call.1} parent=87 // pred_check_branch
          %3887 = sbr.rel (%p3885) target = $region140
        $region139: #{tpu_custom_call.1} parent=87 // pred_region
          %3889 = vsyncadd %s3871, 0
          %s3890 = smul.addr %s52, 8
          %s3891 = scalar_lea.hbm %s17, %s3890
          %s3893 = sshll.u32 %s3874, 4
          %s3894 = int_to_ptr.vmem [resolvable:$true] %s3893
          %s3895 = sshll.u32 %s3891, 4
          %s3896 = int_to_ptr.hbm [resolvable:$true] %s3895
          %3898 = dma.vmem_to_hbm [thread:$0]  %s3894, 128, %s3896, %s3871
        $region140: #{tpu_custom_call.1} parent=87 // pred_fallthru
          _
        // Predicated region
        $region141: #{tpu_custom_call.1} parent=87 // pred_check
          %p3899 = pneg %p483
        $region142: #{tpu_custom_call.1} parent=87 // pred_check_branch
          %3901 = sbr.rel (%p3899) target = $region144
        $region143: #{tpu_custom_call.1} parent=87 // pred_region
          %3903 = vsyncadd %s3876, 0
          %s3904 = smul.addr %s52, 8
          %s3905 = scalar_lea.hbm %s18, %s3904
          %s3906 = sshll.u32 %s3879, 4
          %s3907 = int_to_ptr.vmem [resolvable:$true] %s3906
          %s3908 = sshll.u32 %s3905, 4
          %s3909 = int_to_ptr.hbm [resolvable:$true] %s3908
          %3914 = dma.vmem_to_hbm [thread:$0]  %s3907, 256, %s3909, %s3876, 128, 256, 8
        $region144: #{tpu_custom_call.1} parent=87 // pred_fallthru
          _
        // Predicated region
        $region145: #{tpu_custom_call.1} parent=87 // pred_check
          %p3915 = pneg %p509
        $region146: #{tpu_custom_call.1} parent=87 // pred_check_branch
          %3917 = sbr.rel (%p3915) target = $region148
        $region147: #{tpu_custom_call.1} parent=87 // pred_region
          %3919 = vsyncadd %s3881, 0
          %s3920 = smul.addr %s52, 8
          %s3921 = scalar_lea.hbm %s19, %s3920
          %s3923 = sshll.u32 %s3884, 4
          %s3924 = int_to_ptr.vmem [resolvable:$true] %s3923
          %s3925 = sshll.u32 %s3921, 4
          %s3926 = int_to_ptr.hbm [resolvable:$true] %s3925
          %3928 = dma.vmem_to_hbm [thread:$0]  %s3924, 128, %s3926, %s3881
        $region148: #{tpu_custom_call.1} parent=87 // pred_fallthru
          _
      $region88: #{tpu_custom_call.1} parent=5 // pred_fallthru
        _
      %p3929 = scmp.le.s32.totalorder 2, %s47
      // Predicated region
      $region149: #{tpu_custom_call.1} parent=5 // pred_check
        %p3930 = pneg %p3929
      $region150: #{tpu_custom_call.1} parent=5 // pred_check_branch
        %3932 = sbr.rel (%p3930) target = $region152
      $region151: #{tpu_custom_call.1} parent=5 // pred_region
        %s3933 = ssub.s32 %s47, 2
        // Predicated region
        $region153: #{tpu_custom_call.1} parent=151 // pred_check
          %p3934 = pneg %p463
        $region154: #{tpu_custom_call.1} parent=151 // pred_check_branch
          %3936 = sbr.rel (%p3934) target = $region156
        $region155: #{tpu_custom_call.1} parent=151 // pred_region
          %s3937 = sand.u32 %s448, 1
          %s3938 = scalar_lea.sflag [#allocation4], %s3937
          %s3939 = sand.u32 %s448, 1
          %s3940 = smul.addr %s3939, 8
          %s3941 = scalar_lea.vmem [#allocation22], %s3940
          %3943 = dma.done %s3938, 128
        $region156: #{tpu_custom_call.1} parent=151 // pred_fallthru
          _
        // Predicated region
        $region157: #{tpu_custom_call.1} parent=151 // pred_check
          %p3944 = pneg %p489
        $region158: #{tpu_custom_call.1} parent=151 // pred_check_branch
          %3946 = sbr.rel (%p3944) target = $region160
        $region159: #{tpu_custom_call.1} parent=151 // pred_region
          %s3947 = sand.u32 %s53, 1
          %s3948 = scalar_lea.sflag [#allocation24], %s3947
          %s3949 = sand.u32 %s474, 1
          %s3950 = smul.addr %s3949, 16
          %s3951 = scalar_lea.vmem [#allocation23], %s3950
          %3953 = dma.done %s3948, 256
        $region160: #{tpu_custom_call.1} parent=151 // pred_fallthru
          _
        // Predicated region
        $region161: #{tpu_custom_call.1} parent=151 // pred_check
          %p3954 = pneg %p515
        $region162: #{tpu_custom_call.1} parent=151 // pred_check_branch
          %3956 = sbr.rel (%p3954) target = $region164
        $region163: #{tpu_custom_call.1} parent=151 // pred_region
          %s3957 = sand.u32 %s53, 1
          %s3958 = scalar_lea.sflag [#allocation24], %s3957
          %s3959 = sand.u32 %s500, 1
          %s3960 = smul.addr %s3959, 8
          %s3961 = scalar_lea.vmem [#allocation25], %s3960
          %3963 = dma.done %s3958, 128
        $region164: #{tpu_custom_call.1} parent=151 // pred_fallthru
          _
      $region152: #{tpu_custom_call.1} parent=5 // pred_fallthru
        _
    $region6: #{tpu_custom_call.1} parent=1 // loop_footer
      %s51 = sadd.s32 1, %s47
    $region7: #{tpu_custom_call.1} parent=1 // loop_footer_branch
      %46 = sbr.rel target = $region3
    $region8: #{tpu_custom_call.1} parent=1 // loop_exit
      _
    %3964 = vsyncpa [#allocation3], 1
    %s3965 = scalar_lea.sflag [#allocation3], 1
    %3966 = vsyncpa %s3965, 1
    %3967 = vsyncpa [#allocation6], 1
    %s3968 = scalar_lea.sflag [#allocation6], 1
    %3969 = vsyncpa %s3968, 1
    %3970 = vsyncpa [#allocation9], 1
    %s3971 = scalar_lea.sflag [#allocation9], 1
    %3972 = vsyncpa %s3971, 1
    %3973 = vsyncpa [#allocation12], 1
    %s3974 = scalar_lea.sflag [#allocation12], 1
    %3975 = vsyncpa %s3974, 1
    %3976 = vsyncpa [#allocation15], 1
    %3977 = vsyncpa [#allocation18], 1
    %3978 = vsyncpa [#allocation21], 1
    %3979 = vsyncpa [#allocation4], 1
    %s3980 = scalar_lea.sflag [#allocation4], 1
    %3981 = vsyncpa %s3980, 1
    %3982 = vsyncpa [#allocation24], 1
    %s3983 = scalar_lea.sflag [#allocation24], 1
    %3984 = vsyncpa %s3983, 1

</llo_original>
